<compile_context>
chip_gen: v7x
topology: tpu7x:2x2x1
jax: 0.10.0
libtpu: 0.0.40
codegen_flags: <defaults>
</compile_context>

<pallas_src>
import numpy as np
import jax
import jax.numpy as jnp
from jax import lax
from jax.experimental import pallas as pl
from jax.experimental.pallas import tpu as pltpu


# ----------------------------------------------------------------------------- kernel

def make_kernel(Nt, Nx, H, L, dt, dx):
    vis, hvis = 1.0, 0.1
    inv_dx = 1.0 / dx
    inv_dx2 = 1.0 / (dx * dx)
    inv_dx4 = 1.0 / (dx ** 4)
    N = Nt * Nx                       # flattened time*space lane width (= 128 in the test)
    G = 4 * H                         # gate width (= 128 in the test)
    NF = 17                           # 5 + 5 + 7 flux coefficients
    n_in = 3 + 2 * L + 1

    def kernel(*refs):
        u_ref, h0_ref, c0_ref = refs[0], refs[1], refs[2]
        lstm_refs = [(refs[3 + 2 * l], refs[4 + 2 * l]) for l in range(L)]   # (wih_aug, whhT)
        whead_ref = refs[3 + 2 * L]
        out_ref, hout_ref, cout_ref, pen_ref, pen2_ref = refs[n_in:n_in + 5]
        hT_ref = refs[n_in + 5]                                              # VMEM (N, H+1)

        f32 = jnp.float32

        def mm(a, b):
            return jnp.dot(a, b, preferred_element_type=f32)

        def mm_tb(a, b):  # a @ b.T without materializing a transpose (contract both minors)
            return lax.dot_general(a, b, (((1,), (1,)), ((), ())),
                                   preferred_element_type=f32)

        # ---- hoisted constants ---------------------------------------------------
        ones_row = jnp.ones((1, N), f32)
        pos = lax.broadcasted_iota(jnp.int32, (1, N), 1) % Nx      # lane index within Nx-block
        lane_g = lax.broadcasted_iota(jnp.int32, (1, G), 1)
        is_tanh = jnp.logical_and(lane_g >= 2 * H, lane_g < 3 * H)  # g-gate lanes
        act_s = jnp.where(is_tanh, 1.0, 0.5).astype(f32)            # sigmoid(x)=0.5*tanh(0.5x)+0.5
        act_b = jnp.where(is_tanh, 0.0, 0.5).astype(f32)

        wih = [w[...] for (w, _) in lstm_refs]        # layer0: (4H, in+1); l>0: (4H, H+1)
        whhT = [w[...] for (_, w) in lstm_refs]       # (H, 4H)
        w_head = whead_ref[...]                       # (34, H+1): [folded trf∘fc ; raw fc]

        # ones column of the collected-h scratch (bias fold for head / upper layers)
        hT_ref[:, H:H + 1] = jnp.ones((N, 1), f32)

        def shifted(u, s):
            # row[t*Nx + i] = u[t*Nx + (i + s) mod Nx]   (periodic within each Nx block)
            if s == 0:
                return u
            main = pltpu.roll(u, (-s) % N, axis=1)               # u[(k+s) mod N]
            if s > 0:
                alt = pltpu.roll(u, (Nx - s) % N, axis=1)        # u[(k+s-Nx) mod N]
                return jnp.where(pos < Nx - s, main, alt)
            alt = pltpu.roll(u, (-s - Nx) % N, axis=1)           # u[(k+s+Nx) mod N]
            return jnp.where(pos >= -s, main, alt)

        def stage(u, hs, cs):
            """One RK stage: stencil + stacked LSTM + fc heads + fused flux.  All (., N)."""
            rows = [shifted(u, j - 3) for j in range(7)]
            up7 = jnp.concatenate(rows, axis=0)                          # (7, N)
            up8 = jnp.concatenate(rows + [ones_row], axis=0)             # (8, N), ones = bias fold

            # ---- stacked LSTM over all Nt steps --------------------------------
            for l in range(L):
                if l == 0:
                    # batched input-path matmul (off the serial chain), then one 128x128
                    # transpose so the per-step slice is sublane-aligned and lane-dense.
                    gxT = jnp.transpose(mm(wih[0], up8))                 # (N, 4H)
                else:
                    # previous layer's h sequence (with ones column) x augmented W_ih
                    gxT = mm_tb(hT_ref[...], wih[l])                     # (N, 4H)
                h, c = hs[l], cs[l]                                      # (Nx, H)
                for t in range(Nt):
                    g = gxT[t * Nx:(t + 1) * Nx, :] + mm(h, whhT[l])     # (Nx, 4H) lane-dense
                    a = act_s * jnp.tanh(act_s * g) + act_b              # i,f,o: sigmoid; g: tanh
                    c = a[:, H:2 * H] * c + a[:, 0:H] * a[:, 2 * H:3 * H]
                    h = a[:, 3 * H:4 * H] * jnp.tanh(c)
                    hT_ref[t * Nx:(t + 1) * Nx, 0:H] = h                 # collect sequence
                hs[l], cs[l] = h, c

            # ---- fc heads: trf-folded (rows 0:17) + raw (rows 17:34), one MXU pass
            f_all = mm_tb(w_head, hT_ref[...])                           # (34, N)

            # ---- fused flux reduction ------------------------------------------
            up5 = up7[1:6, :]
            g_mult = jnp.concatenate([(0.5 * inv_dx) * up5 * up5,
                                      (vis * inv_dx2) * up5,
                                      (hvis * inv_dx4) * up7], axis=0)   # (17, N)
            F = jnp.sum(f_all[0:NF, :] * g_mult, axis=0, keepdims=True)  # (1, N)
            return F, hs, cs, f_all

        u0 = u_ref[...]                                                  # (1, N)
        hs = [h0_ref[l] for l in range(L)]                               # (Nx, H)
        cs = [c0_ref[l] for l in range(L)]

        # SSP-RK3 with the LSTM hidden state threaded through the stages (as in the module).
        F, hs, cs, _ = stage(u0, hs, cs)
        u1 = u0 - dt * F
        F, hs, cs, _ = stage(u1, hs, cs)
        u2 = 0.75 * u0 + 0.25 * u1 - 0.25 * dt * F
        F, hs, cs, f_all = stage(u2, hs, cs)
        out_ref[...] = (1.0 / 3.0) * u0 + (2.0 / 3.0) * u2 - (2.0 / 3.0) * dt * F

        for l in range(L):
            hout_ref[l] = hs[l]
            cout_ref[l] = cs[l]

        # final pen = fi1^2 + fi2^2 ; pen2 = fi4^2 (third-stage raw fc outputs), lane-dense
        fi = f_all[NF:, :]                                               # (17, N)
        pen_ref[...] = fi[0:5, :] * fi[0:5, :] + fi[5:10, :] * fi[5:10, :]
        pen2_ref[...] = fi[10:17, :] * fi[10:17, :]

    return kernel


def build_pallas_forward(Nt, Nx, H, L, dt, dx):
    kernel = make_kernel(Nt, Nx, H, L, dt, dx)
    N = Nt * Nx
    out_shape = (
        jax.ShapeDtypeStruct((1, N), jnp.float32),          # out   (lane-dense flattened)
        jax.ShapeDtypeStruct((L, Nx, H), jnp.float32),      # h_n   (PyTorch layout)
        jax.ShapeDtypeStruct((L, Nx, H), jnp.float32),      # c_n
        jax.ShapeDtypeStruct((5, N), jnp.float32),          # pen   (lane-dense)
        jax.ShapeDtypeStruct((7, N), jnp.float32),          # pen2  (lane-dense)
    )
    n_in = 3 + 2 * L + 1
    vmem = lambda: pl.BlockSpec(memory_space=pltpu.MemorySpace.VMEM)
    return pl.pallas_call(
        kernel,
        out_shape=out_shape,
        in_specs=[vmem() for _ in range(n_in)],
        out_specs=tuple(vmem() for _ in range(5)),
        scratch_shapes=[pltpu.VMEM((N, H + 1), jnp.float32)],   # collected h sequence + ones col
    )


# ----------------------------------------------------------------------------- wrapper

def model_forward_pallas(ui, hidden, params, dt, dx):
    """ui: (1, Nt, Nx); hidden: (h0, c0) each (L, Nx, H)  [PyTorch layout, batch = Nx]."""
    Nt, Nx = ui.shape[1], ui.shape[2]
    h0, c0 = hidden
    L, _, H = h0.shape
    f32 = jnp.float32
    N = Nt * Nx

    u = ui[0].reshape(1, N).astype(f32)                     # lane-dense flattened (t*Nx + x)

    args = [u, h0.astype(f32), c0.astype(f32)]
    for l in range(L):
        b = (params['b_ih'][l] + params['b_hh'][l]).reshape(4 * H, 1)
        wih_aug = jnp.concatenate([params['w_ih'][l], b], axis=1).astype(f32)  # (4H, in+1)
        whhT = jnp.transpose(params['w_hh'][l]).astype(f32)                    # (H, 4H)
        args += [wih_aug, whhT]

    # Fold frozen trf layers into the fc heads (host-side, done once):
    #   f_k = cm_k @ (W_k h + b_k + c_k) + cv_k = (cm_k @ W_k) h + (cm_k @ (b_k + c_k) + cv_k)
    def fold(cm, w, b, c, cv):
        return cm @ w, cm @ (b + c) + cv

    w1f, b1f = fold(params['cm1'], params['fc1_w'], params['fc1_b'], params['c1'], params['cv1'])
    w2f, b2f = fold(params['cm2'], params['fc2_w'], params['fc2_b'], params['c2'], params['cv2'])
    w4f, b4f = fold(params['cm4'], params['fc4_w'], params['fc4_b'], params['c4'], params['cv4'])
    w_rows = jnp.concatenate([w1f, w2f, w4f,
                              params['fc1_w'], params['fc2_w'], params['fc4_w']], axis=0)  # (34, H)
    b_rows = jnp.concatenate([b1f, b2f, b4f,
                              params['fc1_b'], params['fc2_b'], params['fc4_b']], axis=0)  # (34,)
    w_head_aug = jnp.concatenate([w_rows, b_rows.reshape(-1, 1)], axis=1).astype(f32)      # (34, H+1)
    args.append(w_head_aug)

    call = build_pallas_forward(Nt, Nx, H, L, float(dt), float(dx))
    out_k, h_k, c_k, pen_k, pen2_k = call(*args)

    out = out_k.reshape(1, Nt, Nx)
    pen = jnp.transpose(pen_k.reshape(5, Nt, Nx), (2, 1, 0))    # (Nx, Nt, 5)
    pen2 = jnp.transpose(pen2_k.reshape(7, Nt, Nx), (2, 1, 0))  # (Nx, Nt, 7)
    return out, (h_k, c_k), pen, pen2


# ----------------------------------------------------------------------------- pure-JAX reference

def model_forward_ref(ui, hidden, params, dt, dx):
    Nt, Nx = ui.shape[1], ui.shape[2]
    h, c = hidden
    L, _, H = h.shape
    vis, hvis = 1.0, 0.1

    def reshKS(u3):                                          # (1,Nt,Nx) -> (Nx,Nt,7)
        u = u3[0]
        cols = [jnp.roll(u, 3 - j, axis=1) for j in range(7)]
        return jnp.transpose(jnp.stack(cols, axis=-1), (1, 0, 2))

    def lstm(x, h, c):                                       # x: (Nx, Nt, 7)
        hs = [h[l] for l in range(L)]
        cs = [c[l] for l in range(L)]
        outs = []
        for t in range(Nt):
            inp = x[:, t, :]
            for l in range(L):
                g = (inp @ params['w_ih'][l].T + hs[l] @ params['w_hh'][l].T
                     + params['b_ih'][l] + params['b_hh'][l])
                i = jax.nn.sigmoid(g[:, 0:H]); f = jax.nn.sigmoid(g[:, H:2 * H])
                gg = jnp.tanh(g[:, 2 * H:3 * H]); o = jax.nn.sigmoid(g[:, 3 * H:4 * H])
                cs[l] = f * cs[l] + i * gg
                hs[l] = o * jnp.tanh(cs[l])
                inp = hs[l]
            outs.append(inp)
        return jnp.stack(outs, axis=1), (jnp.stack(hs, 0), jnp.stack(cs, 0))

    c1 = jnp.broadcast_to(params['c1'], (Nx, Nt, 5))
    c2 = jnp.broadcast_to(params['c2'], (Nx, Nt, 5))
    c4 = jnp.broadcast_to(params['c4'], (Nx, Nt, 7))

    def stage(u3, hid):
        up = reshKS(u3)
        f, hid = lstm(up, *hid)
        fi1 = f @ params['fc1_w'].T + params['fc1_b']
        fi2 = f @ params['fc2_w'].T + params['fc2_b']
        fi4 = f @ params['fc4_w'].T + params['fc4_b']
        f1 = (fi1 + c1) @ params['cm1'].T + params['cv1']
        f2 = (fi2 + c2) @ params['cm2'].T + params['cv2']
        f4 = (fi4 + c4) @ params['cm4'].T + params['cv4']
        F1 = 0.5 * jnp.sum(f1 * up[:, :, 1:6] ** 2, axis=2).T[None] / dx
        F2 = jnp.sum(f2 * up[:, :, 1:6], axis=2).T[None] / dx ** 2
        F4 = jnp.sum(f4 * up, axis=2).T[None] / dx ** 4
        return F1 + F2 * vis + F4 * hvis, hid, fi1, fi2, fi4

    F, hidden, _, _, _ = stage(ui, hidden)
    u1 = ui - dt * F
    F, hidden, _, _, _ = stage(u1, hidden)
    u2 = 0.75 * ui + 0.25 * u1 - 0.25 * dt * F
    F, hidden, f21, f22, f24 = stage(u2, hidden)
    out = ui / 3.0 + 2.0 / 3.0 * u2 - 2.0 / 3.0 * dt * F
    return out, hidden, f21 ** 2 + f22 ** 2, f24 ** 2


# ----------------------------------------------------------------------------- main

if __name__ == "__main__":
    Nt, Nx, H, L = 8, 16, 32, 1            # seq len, spatial points, hidden_dim, n_layers
    cfl, dx = 0.01, 0.25
    dt = cfl * dx

    key = jax.random.PRNGKey(0)
    ks = jax.random.split(key, 12)
    s = float(1.0 / np.sqrt(H))
    U = lambda k, shape: jax.random.uniform(k, shape, jnp.float32, -s, s)

    params = {
        'w_ih': [U(ks[0], (4 * H, 7))], 'w_hh': [U(ks[1], (4 * H, H))],
        'b_ih': [U(ks[2], (4 * H,))], 'b_hh': [U(ks[3], (4 * H,))],
        'fc1_w': U(ks[4], (5, H)), 'fc1_b': U(ks[5], (5,)),
        'fc2_w': U(ks[6], (5, H)), 'fc2_b': U(ks[7], (5,)),
        'fc4_w': U(ks[8], (7, H)), 'fc4_b': U(ks[9], (7,)),
        'cm1': jnp.array([[4/35, -9/35, 3/35, 1/7, -3/35],
                          [-9/35, 22/35, -12/35, -6/35, 1/7],
                          [3/35, -12/35, 18/35, -12/35, 3/35],
                          [1/7, -6/35, -12/35, 22/35, -9/35],
                          [-3/35, 1/7, 3/35, -9/35, 4/35]], jnp.float32),
        'cm2': jnp.array([[1/70, -2/35, 3/35, -2/35, 1/70],
                          [-2/35, 8/35, -12/35, 8/35, -2/35],
                          [3/35, -12/35, 18/35, -12/35, 3/35],
                          [-2/35, 8/35, -12/35, 8/35, -2/35],
                          [1/70, -2/35, 3/35, -2/35, 1/70]], jnp.float32),
        'cm4': jnp.array([[1/924, -1/154, 5/308, -5/231, 5/308, -1/154, 1/924],
                          [-1/154, 3/77, -15/154, 10/77, -15/154, 3/77, -1/154],
                          [5/308, -15/154, 75/308, -25/77, 75/308, -15/154, 5/308],
                          [-5/231, 10/77, -25/77, 100/231, -25/77, 10/77, -5/231],
                          [5/308, -15/154, 75/308, -25/77, 75/308, -15/154, 5/308],
                          [-1/154, 3/77, -15/154, 10/77, -15/154, 3/77, -1/154],
                          [1/924, -1/154, 5/308, -5/231, 5/308, -1/154, 1/924]], jnp.float32),
        'cv1': jnp.array([-0.2, -0.1, 0.0, 0.1, 0.2], jnp.float32),
        'cv2': jnp.array([2/7, -1/7, -2/7, -1/7, 2/7], jnp.float32),
        'cv4': jnp.array([3/11, -7/11, 1/11, 6/11, 1/11, -7/11, 3/11], jnp.float32),
        'c1': jnp.array([1/12, -2/3, 0.0, 2/3, -1/12], jnp.float32),
        'c2': jnp.array([-1/12, 4/3, -5/2, 4/3, -1/12], jnp.float32),
        'c4': jnp.array([-1/6, 2.0, -13/2, 28/3, -13/2, 2.0, -1/6], jnp.float32),
    }

    ui = jax.random.normal(ks[10], (1, Nt, Nx), jnp.float32)
    h0 = jnp.zeros((L, Nx, H), jnp.float32)     # init_hidden(batch=Nx)
    c0 = jnp.zeros((L, Nx, H), jnp.float32)

    out, (hN, cN), pen, pen2 = model_forward_pallas(ui, (h0, c0), params, dt, dx)
    jax.block_until_ready((out, hN, cN, pen, pen2))

    out_r, (h_r, c_r), pen_r, pen2_r = model_forward_ref(ui, (h0, c0), params, dt, dx)
    for a, b in [(out, out_r), (hN, h_r), (cN, c_r), (pen, pen_r), (pen2, pen2_r)]:
        np.testing.assert_allclose(np.asarray(a), np.asarray(b), rtol=2e-3, atol=2e-3)

    print("KERNEL_OK")
</pallas_src>

<mosaic_0001>
module attributes {stable_mosaic.version = 11 : i64} {
  func.func @kernel(%arg0: memref<1x128xf32, #tpu.memory_space<vmem>>, %arg1: memref<1x16x32xf32, #tpu.memory_space<vmem>>, %arg2: memref<1x16x32xf32, #tpu.memory_space<vmem>>, %arg3: memref<128x8xf32, #tpu.memory_space<vmem>>, %arg4: memref<32x128xf32, #tpu.memory_space<vmem>>, %arg5: memref<34x33xf32, #tpu.memory_space<vmem>>, %arg6: memref<1x128xf32, #tpu.memory_space<vmem>>, %arg7: memref<1x16x32xf32, #tpu.memory_space<vmem>>, %arg8: memref<1x16x32xf32, #tpu.memory_space<vmem>>, %arg9: memref<5x128xf32, #tpu.memory_space<vmem>>, %arg10: memref<7x128xf32, #tpu.memory_space<vmem>>, %arg11: memref<128x33xf32, #tpu.memory_space<vmem>>) attributes {dimension_semantics = [], scalar_prefetch = 0 : i64, scratch_operands = 1 : i64, tpu.core_type = #tpu.core_type<tc>} {
    %cst = arith.constant 1.000000e+00 : f32
    %0 = vector.broadcast %cst : f32 to vector<1x128xf32>
    %1 = tpu.iota {dimensions = array<i32: 1>} : vector<1x128xi32>
    %c16_i32 = arith.constant 16 : i32
    %c0_i32 = arith.constant 0 : i32
    %2 = arith.cmpi eq, %c16_i32, %c0_i32 : i32
    %c1_i32 = arith.constant 1 : i32
    %3 = arith.select %2, %c1_i32, %c16_i32 : i32
    %4 = vector.broadcast %3 : i32 to vector<1x128xi32>
    %5 = arith.remsi %1, %4 : vector<1x128xi32>
    %c0_i32_0 = arith.constant 0 : i32
    %6 = vector.broadcast %c0_i32_0 : i32 to vector<1x128xi32>
    %7 = arith.cmpi ne, %5, %6 : vector<1x128xi32>
    %c0_i32_1 = arith.constant 0 : i32
    %8 = vector.broadcast %c0_i32_1 : i32 to vector<1x128xi32>
    %9 = arith.cmpi slt, %5, %8 : vector<1x128xi32>
    %c0_i32_2 = arith.constant 0 : i32
    %10 = arith.cmpi slt, %3, %c0_i32_2 : i32
    %11 = vector.broadcast %10 : i1 to vector<1x128xi1>
    %12 = vector.broadcast %11 : vector<1x128xi1> to vector<1x128xi1>
    %13 = arith.xori %9, %12 : vector<1x128xi1>
    %14 = arith.andi %13, %7 : vector<1x128xi1>
    %15 = vector.broadcast %3 : i32 to vector<1x128xi32>
    %16 = arith.addi %5, %15 : vector<1x128xi32>
    %17 = arith.select %14, %16, %5 : vector<1x128xi1>, vector<1x128xi32>
    %18 = tpu.iota {dimensions = array<i32: 1>} : vector<1x128xi32>
    %c64_i32 = arith.constant 64 : i32
    %19 = vector.broadcast %c64_i32 : i32 to vector<1x128xi32>
    %20 = arith.cmpi sge, %18, %19 : vector<1x128xi32>
    %c96_i32 = arith.constant 96 : i32
    %21 = vector.broadcast %c96_i32 : i32 to vector<1x128xi32>
    %22 = arith.cmpi slt, %18, %21 : vector<1x128xi32>
    %23 = arith.andi %20, %22 : vector<1x128xi1>
    %cst_3 = arith.constant 1.000000e+00 : f32
    %cst_4 = arith.constant 5.000000e-01 : f32
    %24 = vector.broadcast %cst_3 : f32 to vector<1x128xf32>
    %25 = vector.broadcast %cst_4 : f32 to vector<1x128xf32>
    %26 = arith.select %23, %24, %25 : vector<1x128xi1>, vector<1x128xf32>
    %cst_5 = arith.constant 0.000000e+00 : f32
    %cst_6 = arith.constant 5.000000e-01 : f32
    %27 = vector.broadcast %cst_5 : f32 to vector<1x128xf32>
    %28 = vector.broadcast %cst_6 : f32 to vector<1x128xf32>
    %29 = arith.select %23, %27, %28 : vector<1x128xi1>, vector<1x128xf32>
    %c0 = arith.constant 0 : index
    %c0_7 = arith.constant 0 : index
    %30 = vector.load %arg3[%c0, %c0_7] : memref<128x8xf32, #tpu.memory_space<vmem>>, vector<128x8xf32>
    %c0_8 = arith.constant 0 : index
    %c0_9 = arith.constant 0 : index
    %31 = vector.load %arg4[%c0_8, %c0_9] : memref<32x128xf32, #tpu.memory_space<vmem>>, vector<32x128xf32>
    %c0_10 = arith.constant 0 : index
    %c0_11 = arith.constant 0 : index
    %32 = vector.load %arg5[%c0_10, %c0_11] : memref<34x33xf32, #tpu.memory_space<vmem>>, vector<34x33xf32>
    %cst_12 = arith.constant 1.000000e+00 : f32
    %33 = vector.broadcast %cst_12 : f32 to vector<128x1xf32>
    %c0_13 = arith.constant 0 : index
    %c32 = arith.constant 32 : index
    %34 = vector.load %arg11[%c0_13, %c32] : memref<128x33xf32, #tpu.memory_space<vmem>>, vector<128x1xf32>
    tpu.vector_store %arg11[%c0_13, %c32], %33 {strides = array<i32>} : memref<128x33xf32, #tpu.memory_space<vmem>>, vector<128x1xf32>,
    %c0_14 = arith.constant 0 : index
    %c0_15 = arith.constant 0 : index
    %35 = vector.load %arg0[%c0_14, %c0_15] : memref<1x128xf32, #tpu.memory_space<vmem>>, vector<1x128xf32>
    %c0_16 = arith.constant 0 : index
    %c0_17 = arith.constant 0 : index
    %c0_18 = arith.constant 0 : index
    %36 = vector.load %arg1[%c0_16, %c0_17, %c0_18] : memref<1x16x32xf32, #tpu.memory_space<vmem>>, vector<1x16x32xf32>
    %37 = vector.shape_cast %36 : vector<1x16x32xf32> to vector<16x32xf32>
    %c0_19 = arith.constant 0 : index
    %c0_20 = arith.constant 0 : index
    %c0_21 = arith.constant 0 : index
    %38 = vector.load %arg2[%c0_19, %c0_20, %c0_21] : memref<1x16x32xf32, #tpu.memory_space<vmem>>, vector<1x16x32xf32>
    %39 = vector.shape_cast %38 : vector<1x16x32xf32> to vector<16x32xf32>
    %c3_i32 = arith.constant 3 : i32
    %40 = tpu.dynamic_rotate %35 by %c3_i32 dim 1 : vector<1x128xf32>, i32 -> vector<1x128xf32>
    %c115_i32 = arith.constant 115 : i32
    %41 = tpu.dynamic_rotate %35 by %c115_i32 dim 1 : vector<1x128xf32>, i32 -> vector<1x128xf32>
    %c3_i32_22 = arith.constant 3 : i32
    %42 = vector.broadcast %c3_i32_22 : i32 to vector<1x128xi32>
    %43 = arith.cmpi sge, %17, %42 : vector<1x128xi32>
    %44 = arith.select %43, %40, %41 : vector<1x128xi1>, vector<1x128xf32>
    %c2_i32 = arith.constant 2 : i32
    %45 = tpu.dynamic_rotate %35 by %c2_i32 dim 1 : vector<1x128xf32>, i32 -> vector<1x128xf32>
    %c114_i32 = arith.constant 114 : i32
    %46 = tpu.dynamic_rotate %35 by %c114_i32 dim 1 : vector<1x128xf32>, i32 -> vector<1x128xf32>
    %c2_i32_23 = arith.constant 2 : i32
    %47 = vector.broadcast %c2_i32_23 : i32 to vector<1x128xi32>
    %48 = arith.cmpi sge, %17, %47 : vector<1x128xi32>
    %49 = arith.select %48, %45, %46 : vector<1x128xi1>, vector<1x128xf32>
    %c1_i32_24 = arith.constant 1 : i32
    %50 = tpu.dynamic_rotate %35 by %c1_i32_24 dim 1 : vector<1x128xf32>, i32 -> vector<1x128xf32>
    %c113_i32 = arith.constant 113 : i32
    %51 = tpu.dynamic_rotate %35 by %c113_i32 dim 1 : vector<1x128xf32>, i32 -> vector<1x128xf32>
    %c1_i32_25 = arith.constant 1 : i32
    %52 = vector.broadcast %c1_i32_25 : i32 to vector<1x128xi32>
    %53 = arith.cmpi sge, %17, %52 : vector<1x128xi32>
    %54 = arith.select %53, %50, %51 : vector<1x128xi1>, vector<1x128xf32>
    %c127_i32 = arith.constant 127 : i32
    %55 = tpu.dynamic_rotate %35 by %c127_i32 dim 1 : vector<1x128xf32>, i32 -> vector<1x128xf32>
    %c15_i32 = arith.constant 15 : i32
    %56 = tpu.dynamic_rotate %35 by %c15_i32 dim 1 : vector<1x128xf32>, i32 -> vector<1x128xf32>
    %c15_i32_26 = arith.constant 15 : i32
    %57 = vector.broadcast %c15_i32_26 : i32 to vector<1x128xi32>
    %58 = arith.cmpi slt, %17, %57 : vector<1x128xi32>
    %59 = arith.select %58, %55, %56 : vector<1x128xi1>, vector<1x128xf32>
    %c126_i32 = arith.constant 126 : i32
    %60 = tpu.dynamic_rotate %35 by %c126_i32 dim 1 : vector<1x128xf32>, i32 -> vector<1x128xf32>
    %c14_i32 = arith.constant 14 : i32
    %61 = tpu.dynamic_rotate %35 by %c14_i32 dim 1 : vector<1x128xf32>, i32 -> vector<1x128xf32>
    %c14_i32_27 = arith.constant 14 : i32
    %62 = vector.broadcast %c14_i32_27 : i32 to vector<1x128xi32>
    %63 = arith.cmpi slt, %17, %62 : vector<1x128xi32>
    %64 = arith.select %63, %60, %61 : vector<1x128xi1>, vector<1x128xf32>
    %c125_i32 = arith.constant 125 : i32
    %65 = tpu.dynamic_rotate %35 by %c125_i32 dim 1 : vector<1x128xf32>, i32 -> vector<1x128xf32>
    %c13_i32 = arith.constant 13 : i32
    %66 = tpu.dynamic_rotate %35 by %c13_i32 dim 1 : vector<1x128xf32>, i32 -> vector<1x128xf32>
    %c13_i32_28 = arith.constant 13 : i32
    %67 = vector.broadcast %c13_i32_28 : i32 to vector<1x128xi32>
    %68 = arith.cmpi slt, %17, %67 : vector<1x128xi32>
    %69 = arith.select %68, %65, %66 : vector<1x128xi1>, vector<1x128xf32>
    %70 = tpu.concatenate %44, %49, %54, %35, %59, %64, %69 in 0 : vector<1x128xf32>, vector<1x128xf32>, vector<1x128xf32>, vector<1x128xf32>, vector<1x128xf32>, vector<1x128xf32>, vector<1x128xf32> -> vector<7x128xf32>
    %71 = tpu.concatenate %44, %49, %54, %35, %59, %64, %69, %0 in 0 : vector<1x128xf32>, vector<1x128xf32>, vector<1x128xf32>, vector<1x128xf32>, vector<1x128xf32>, vector<1x128xf32>, vector<1x128xf32>, vector<1x128xf32> -> vector<8x128xf32>
    %cst_29 = arith.constant dense<0.000000e+00> : vector<128x128xf32>
    %72 = tpu.matmul %30, %71, %cst_29 {dimension_numbers = #tpu.dot_dimension_numbers<[1], [0], [0], [1], [0, 0, 1, 1], [], []>} : vector<128x8xf32>, vector<8x128xf32>, vector<128x128xf32> -> vector<128x128xf32>
    %73 = tpu.transpose %72, [1, 0] : vector<128x128xf32> -> vector<128x128xf32>
    %74 = vector.extract_strided_slice %73 {offsets = [0, 0], sizes = [16, 128], strides = [1, 1]} : vector<128x128xf32> to vector<16x128xf32>
    %cst_30 = arith.constant dense<0.000000e+00> : vector<16x128xf32>
    %75 = tpu.matmul %37, %31, %cst_30 {dimension_numbers = #tpu.dot_dimension_numbers<[1], [0], [0], [1], [0, 0, 1, 1], [], []>} : vector<16x32xf32>, vector<32x128xf32>, vector<16x128xf32> -> vector<16x128xf32>
    %76 = arith.addf %74, %75 : vector<16x128xf32>
    %77 = vector.broadcast %26 : vector<1x128xf32> to vector<16x128xf32>
    %78 = arith.mulf %77, %76 : vector<16x128xf32>
    %79 = math.tanh %78 : vector<16x128xf32>
    %80 = vector.broadcast %26 : vector<1x128xf32> to vector<16x128xf32>
    %81 = arith.mulf %80, %79 : vector<16x128xf32>
    %82 = vector.broadcast %29 : vector<1x128xf32> to vector<16x128xf32>
    %83 = arith.addf %81, %82 : vector<16x128xf32>
    %84 = vector.extract_strided_slice %83 {offsets = [0, 32], sizes = [16, 32], strides = [1, 1]} : vector<16x128xf32> to vector<16x32xf32>
    %85 = arith.mulf %84, %39 : vector<16x32xf32>
    %86 = vector.extract_strided_slice %83 {offsets = [0, 0], sizes = [16, 32], strides = [1, 1]} : vector<16x128xf32> to vector<16x32xf32>
    %87 = vector.extract_strided_slice %83 {offsets = [0, 64], sizes = [16, 32], strides = [1, 1]} : vector<16x128xf32> to vector<16x32xf32>
    %88 = arith.mulf %86, %87 : vector<16x32xf32>
    %89 = arith.addf %85, %88 : vector<16x32xf32>
    %90 = vector.extract_strided_slice %83 {offsets = [0, 96], sizes = [16, 32], strides = [1, 1]} : vector<16x128xf32> to vector<16x32xf32>
    %91 = math.tanh %89 : vector<16x32xf32>
    %92 = arith.mulf %90, %91 : vector<16x32xf32>
    %c0_31 = arith.constant 0 : index
    %c0_32 = arith.constant 0 : index
    %93 = vector.load %arg11[%c0_31, %c0_32] : memref<128x33xf32, #tpu.memory_space<vmem>>, vector<16x32xf32>
    tpu.vector_store %arg11[%c0_31, %c0_32], %92 {strides = array<i32>} : memref<128x33xf32, #tpu.memory_space<vmem>>, vector<16x32xf32>,
    %94 = vector.extract_strided_slice %73 {offsets = [16, 0], sizes = [16, 128], strides = [1, 1]} : vector<128x128xf32> to vector<16x128xf32>
    %cst_33 = arith.constant dense<0.000000e+00> : vector<16x128xf32>
    %95 = tpu.matmul %92, %31, %cst_33 {dimension_numbers = #tpu.dot_dimension_numbers<[1], [0], [0], [1], [0, 0, 1, 1], [], []>} : vector<16x32xf32>, vector<32x128xf32>, vector<16x128xf32> -> vector<16x128xf32>
    %96 = arith.addf %94, %95 : vector<16x128xf32>
    %97 = vector.broadcast %26 : vector<1x128xf32> to vector<16x128xf32>
    %98 = arith.mulf %97, %96 : vector<16x128xf32>
    %99 = math.tanh %98 : vector<16x128xf32>
    %100 = vector.broadcast %26 : vector<1x128xf32> to vector<16x128xf32>
    %101 = arith.mulf %100, %99 : vector<16x128xf32>
    %102 = vector.broadcast %29 : vector<1x128xf32> to vector<16x128xf32>
    %103 = arith.addf %101, %102 : vector<16x128xf32>
    %104 = vector.extract_strided_slice %103 {offsets = [0, 32], sizes = [16, 32], strides = [1, 1]} : vector<16x128xf32> to vector<16x32xf32>
    %105 = arith.mulf %104, %89 : vector<16x32xf32>
    %106 = vector.extract_strided_slice %103 {offsets = [0, 0], sizes = [16, 32], strides = [1, 1]} : vector<16x128xf32> to vector<16x32xf32>
    %107 = vector.extract_strided_slice %103 {offsets = [0, 64], sizes = [16, 32], strides = [1, 1]} : vector<16x128xf32> to vector<16x32xf32>
    %108 = arith.mulf %106, %107 : vector<16x32xf32>
    %109 = arith.addf %105, %108 : vector<16x32xf32>
    %110 = vector.extract_strided_slice %103 {offsets = [0, 96], sizes = [16, 32], strides = [1, 1]} : vector<16x128xf32> to vector<16x32xf32>
    %111 = math.tanh %109 : vector<16x32xf32>
    %112 = arith.mulf %110, %111 : vector<16x32xf32>
    %c16 = arith.constant 16 : index
    %c0_34 = arith.constant 0 : index
    %113 = vector.load %arg11[%c16, %c0_34] : memref<128x33xf32, #tpu.memory_space<vmem>>, vector<16x32xf32>
    tpu.vector_store %arg11[%c16, %c0_34], %112 {strides = array<i32>} : memref<128x33xf32, #tpu.memory_space<vmem>>, vector<16x32xf32>,
    %114 = vector.extract_strided_slice %73 {offsets = [32, 0], sizes = [16, 128], strides = [1, 1]} : vector<128x128xf32> to vector<16x128xf32>
    %cst_35 = arith.constant dense<0.000000e+00> : vector<16x128xf32>
    %115 = tpu.matmul %112, %31, %cst_35 {dimension_numbers = #tpu.dot_dimension_numbers<[1], [0], [0], [1], [0, 0, 1, 1], [], []>} : vector<16x32xf32>, vector<32x128xf32>, vector<16x128xf32> -> vector<16x128xf32>
    %116 = arith.addf %114, %115 : vector<16x128xf32>
    %117 = vector.broadcast %26 : vector<1x128xf32> to vector<16x128xf32>
    %118 = arith.mulf %117, %116 : vector<16x128xf32>
    %119 = math.tanh %118 : vector<16x128xf32>
    %120 = vector.broadcast %26 : vector<1x128xf32> to vector<16x128xf32>
    %121 = arith.mulf %120, %119 : vector<16x128xf32>
    %122 = vector.broadcast %29 : vector<1x128xf32> to vector<16x128xf32>
    %123 = arith.addf %121, %122 : vector<16x128xf32>
    %124 = vector.extract_strided_slice %123 {offsets = [0, 32], sizes = [16, 32], strides = [1, 1]} : vector<16x128xf32> to vector<16x32xf32>
    %125 = arith.mulf %124, %109 : vector<16x32xf32>
    %126 = vector.extract_strided_slice %123 {offsets = [0, 0], sizes = [16, 32], strides = [1, 1]} : vector<16x128xf32> to vector<16x32xf32>
    %127 = vector.extract_strided_slice %123 {offsets = [0, 64], sizes = [16, 32], strides = [1, 1]} : vector<16x128xf32> to vector<16x32xf32>
    %128 = arith.mulf %126, %127 : vector<16x32xf32>
    %129 = arith.addf %125, %128 : vector<16x32xf32>
    %130 = vector.extract_strided_slice %123 {offsets = [0, 96], sizes = [16, 32], strides = [1, 1]} : vector<16x128xf32> to vector<16x32xf32>
    %131 = math.tanh %129 : vector<16x32xf32>
    %132 = arith.mulf %130, %131 : vector<16x32xf32>
    %c32_36 = arith.constant 32 : index
    %c0_37 = arith.constant 0 : index
    %133 = vector.load %arg11[%c32_36, %c0_37] : memref<128x33xf32, #tpu.memory_space<vmem>>, vector<16x32xf32>
    tpu.vector_store %arg11[%c32_36, %c0_37], %132 {strides = array<i32>} : memref<128x33xf32, #tpu.memory_space<vmem>>, vector<16x32xf32>,
    %134 = vector.extract_strided_slice %73 {offsets = [48, 0], sizes = [16, 128], strides = [1, 1]} : vector<128x128xf32> to vector<16x128xf32>
    %cst_38 = arith.constant dense<0.000000e+00> : vector<16x128xf32>
    %135 = tpu.matmul %132, %31, %cst_38 {dimension_numbers = #tpu.dot_dimension_numbers<[1], [0], [0], [1], [0, 0, 1, 1], [], []>} : vector<16x32xf32>, vector<32x128xf32>, vector<16x128xf32> -> vector<16x128xf32>
    %136 = arith.addf %134, %135 : vector<16x128xf32>
    %137 = vector.broadcast %26 : vector<1x128xf32> to vector<16x128xf32>
    %138 = arith.mulf %137, %136 : vector<16x128xf32>
    %139 = math.tanh %138 : vector<16x128xf32>
    %140 = vector.broadcast %26 : vector<1x128xf32> to vector<16x128xf32>
    %141 = arith.mulf %140, %139 : vector<16x128xf32>
    %142 = vector.broadcast %29 : vector<1x128xf32> to vector<16x128xf32>
    %143 = arith.addf %141, %142 : vector<16x128xf32>
    %144 = vector.extract_strided_slice %143 {offsets = [0, 32], sizes = [16, 32], strides = [1, 1]} : vector<16x128xf32> to vector<16x32xf32>
    %145 = arith.mulf %144, %129 : vector<16x32xf32>
    %146 = vector.extract_strided_slice %143 {offsets = [0, 0], sizes = [16, 32], strides = [1, 1]} : vector<16x128xf32> to vector<16x32xf32>
    %147 = vector.extract_strided_slice %143 {offsets = [0, 64], sizes = [16, 32], strides = [1, 1]} : vector<16x128xf32> to vector<16x32xf32>
    %148 = arith.mulf %146, %147 : vector<16x32xf32>
    %149 = arith.addf %145, %148 : vector<16x32xf32>
    %150 = vector.extract_strided_slice %143 {offsets = [0, 96], sizes = [16, 32], strides = [1, 1]} : vector<16x128xf32> to vector<16x32xf32>
    %151 = math.tanh %149 : vector<16x32xf32>
    %152 = arith.mulf %150, %151 : vector<16x32xf32>
    %c48 = arith.constant 48 : index
    %c0_39 = arith.constant 0 : index
    %153 = vector.load %arg11[%c48, %c0_39] : memref<128x33xf32, #tpu.memory_space<vmem>>, vector<16x32xf32>
    tpu.vector_store %arg11[%c48, %c0_39], %152 {strides = array<i32>} : memref<128x33xf32, #tpu.memory_space<vmem>>, vector<16x32xf32>,
    %154 = vector.extract_strided_slice %73 {offsets = [64, 0], sizes = [16, 128], strides = [1, 1]} : vector<128x128xf32> to vector<16x128xf32>
    %cst_40 = arith.constant dense<0.000000e+00> : vector<16x128xf32>
    %155 = tpu.matmul %152, %31, %cst_40 {dimension_numbers = #tpu.dot_dimension_numbers<[1], [0], [0], [1], [0, 0, 1, 1], [], []>} : vector<16x32xf32>, vector<32x128xf32>, vector<16x128xf32> -> vector<16x128xf32>
    %156 = arith.addf %154, %155 : vector<16x128xf32>
    %157 = vector.broadcast %26 : vector<1x128xf32> to vector<16x128xf32>
    %158 = arith.mulf %157, %156 : vector<16x128xf32>
    %159 = math.tanh %158 : vector<16x128xf32>
    %160 = vector.broadcast %26 : vector<1x128xf32> to vector<16x128xf32>
    %161 = arith.mulf %160, %159 : vector<16x128xf32>
    %162 = vector.broadcast %29 : vector<1x128xf32> to vector<16x128xf32>
    %163 = arith.addf %161, %162 : vector<16x128xf32>
    %164 = vector.extract_strided_slice %163 {offsets = [0, 32], sizes = [16, 32], strides = [1, 1]} : vector<16x128xf32> to vector<16x32xf32>
    %165 = arith.mulf %164, %149 : vector<16x32xf32>
    %166 = vector.extract_strided_slice %163 {offsets = [0, 0], sizes = [16, 32], strides = [1, 1]} : vector<16x128xf32> to vector<16x32xf32>
    %167 = vector.extract_strided_slice %163 {offsets = [0, 64], sizes = [16, 32], strides = [1, 1]} : vector<16x128xf32> to vector<16x32xf32>
    %168 = arith.mulf %166, %167 : vector<16x32xf32>
    %169 = arith.addf %165, %168 : vector<16x32xf32>
    %170 = vector.extract_strided_slice %163 {offsets = [0, 96], sizes = [16, 32], strides = [1, 1]} : vector<16x128xf32> to vector<16x32xf32>
    %171 = math.tanh %169 : vector<16x32xf32>
    %172 = arith.mulf %170, %171 : vector<16x32xf32>
    %c64 = arith.constant 64 : index
    %c0_41 = arith.constant 0 : index
    %173 = vector.load %arg11[%c64, %c0_41] : memref<128x33xf32, #tpu.memory_space<vmem>>, vector<16x32xf32>
    tpu.vector_store %arg11[%c64, %c0_41], %172 {strides = array<i32>} : memref<128x33xf32, #tpu.memory_space<vmem>>, vector<16x32xf32>,
    %174 = vector.extract_strided_slice %73 {offsets = [80, 0], sizes = [16, 128], strides = [1, 1]} : vector<128x128xf32> to vector<16x128xf32>
    %cst_42 = arith.constant dense<0.000000e+00> : vector<16x128xf32>
    %175 = tpu.matmul %172, %31, %cst_42 {dimension_numbers = #tpu.dot_dimension_numbers<[1], [0], [0], [1], [0, 0, 1, 1], [], []>} : vector<16x32xf32>, vector<32x128xf32>, vector<16x128xf32> -> vector<16x128xf32>
    %176 = arith.addf %174, %175 : vector<16x128xf32>
    %177 = vector.broadcast %26 : vector<1x128xf32> to vector<16x128xf32>
    %178 = arith.mulf %177, %176 : vector<16x128xf32>
    %179 = math.tanh %178 : vector<16x128xf32>
    %180 = vector.broadcast %26 : vector<1x128xf32> to vector<16x128xf32>
    %181 = arith.mulf %180, %179 : vector<16x128xf32>
    %182 = vector.broadcast %29 : vector<1x128xf32> to vector<16x128xf32>
    %183 = arith.addf %181, %182 : vector<16x128xf32>
    %184 = vector.extract_strided_slice %183 {offsets = [0, 32], sizes = [16, 32], strides = [1, 1]} : vector<16x128xf32> to vector<16x32xf32>
    %185 = arith.mulf %184, %169 : vector<16x32xf32>
    %186 = vector.extract_strided_slice %183 {offsets = [0, 0], sizes = [16, 32], strides = [1, 1]} : vector<16x128xf32> to vector<16x32xf32>
    %187 = vector.extract_strided_slice %183 {offsets = [0, 64], sizes = [16, 32], strides = [1, 1]} : vector<16x128xf32> to vector<16x32xf32>
    %188 = arith.mulf %186, %187 : vector<16x32xf32>
    %189 = arith.addf %185, %188 : vector<16x32xf32>
    %190 = vector.extract_strided_slice %183 {offsets = [0, 96], sizes = [16, 32], strides = [1, 1]} : vector<16x128xf32> to vector<16x32xf32>
    %191 = math.tanh %189 : vector<16x32xf32>
    %192 = arith.mulf %190, %191 : vector<16x32xf32>
    %c80 = arith.constant 80 : index
    %c0_43 = arith.constant 0 : index
    %193 = vector.load %arg11[%c80, %c0_43] : memref<128x33xf32, #tpu.memory_space<vmem>>, vector<16x32xf32>
    tpu.vector_store %arg11[%c80, %c0_43], %192 {strides = array<i32>} : memref<128x33xf32, #tpu.memory_space<vmem>>, vector<16x32xf32>,
    %194 = vector.extract_strided_slice %73 {offsets = [96, 0], sizes = [16, 128], strides = [1, 1]} : vector<128x128xf32> to vector<16x128xf32>
    %cst_44 = arith.constant dense<0.000000e+00> : vector<16x128xf32>
    %195 = tpu.matmul %192, %31, %cst_44 {dimension_numbers = #tpu.dot_dimension_numbers<[1], [0], [0], [1], [0, 0, 1, 1], [], []>} : vector<16x32xf32>, vector<32x128xf32>, vector<16x128xf32> -> vector<16x128xf32>
    %196 = arith.addf %194, %195 : vector<16x128xf32>
    %197 = vector.broadcast %26 : vector<1x128xf32> to vector<16x128xf32>
    %198 = arith.mulf %197, %196 : vector<16x128xf32>
    %199 = math.tanh %198 : vector<16x128xf32>
    %200 = vector.broadcast %26 : vector<1x128xf32> to vector<16x128xf32>
    %201 = arith.mulf %200, %199 : vector<16x128xf32>
    %202 = vector.broadcast %29 : vector<1x128xf32> to vector<16x128xf32>
    %203 = arith.addf %201, %202 : vector<16x128xf32>
    %204 = vector.extract_strided_slice %203 {offsets = [0, 32], sizes = [16, 32], strides = [1, 1]} : vector<16x128xf32> to vector<16x32xf32>
    %205 = arith.mulf %204, %189 : vector<16x32xf32>
    %206 = vector.extract_strided_slice %203 {offsets = [0, 0], sizes = [16, 32], strides = [1, 1]} : vector<16x128xf32> to vector<16x32xf32>
    %207 = vector.extract_strided_slice %203 {offsets = [0, 64], sizes = [16, 32], strides = [1, 1]} : vector<16x128xf32> to vector<16x32xf32>
    %208 = arith.mulf %206, %207 : vector<16x32xf32>
    %209 = arith.addf %205, %208 : vector<16x32xf32>
    %210 = vector.extract_strided_slice %203 {offsets = [0, 96], sizes = [16, 32], strides = [1, 1]} : vector<16x128xf32> to vector<16x32xf32>
    %211 = math.tanh %209 : vector<16x32xf32>
    %212 = arith.mulf %210, %211 : vector<16x32xf32>
    %c96 = arith.constant 96 : index
    %c0_45 = arith.constant 0 : index
    %213 = vector.load %arg11[%c96, %c0_45] : memref<128x33xf32, #tpu.memory_space<vmem>>, vector<16x32xf32>
    tpu.vector_store %arg11[%c96, %c0_45], %212 {strides = array<i32>} : memref<128x33xf32, #tpu.memory_space<vmem>>, vector<16x32xf32>,
    %214 = vector.extract_strided_slice %73 {offsets = [112, 0], sizes = [16, 128], strides = [1, 1]} : vector<128x128xf32> to vector<16x128xf32>
    %cst_46 = arith.constant dense<0.000000e+00> : vector<16x128xf32>
    %215 = tpu.matmul %212, %31, %cst_46 {dimension_numbers = #tpu.dot_dimension_numbers<[1], [0], [0], [1], [0, 0, 1, 1], [], []>} : vector<16x32xf32>, vector<32x128xf32>, vector<16x128xf32> -> vector<16x128xf32>
    %216 = arith.addf %214, %215 : vector<16x128xf32>
    %217 = vector.broadcast %26 : vector<1x128xf32> to vector<16x128xf32>
    %218 = arith.mulf %217, %216 : vector<16x128xf32>
    %219 = math.tanh %218 : vector<16x128xf32>
    %220 = vector.broadcast %26 : vector<1x128xf32> to vector<16x128xf32>
    %221 = arith.mulf %220, %219 : vector<16x128xf32>
    %222 = vector.broadcast %29 : vector<1x128xf32> to vector<16x128xf32>
    %223 = arith.addf %221, %222 : vector<16x128xf32>
    %224 = vector.extract_strided_slice %223 {offsets = [0, 32], sizes = [16, 32], strides = [1, 1]} : vector<16x128xf32> to vector<16x32xf32>
    %225 = arith.mulf %224, %209 : vector<16x32xf32>
    %226 = vector.extract_strided_slice %223 {offsets = [0, 0], sizes = [16, 32], strides = [1, 1]} : vector<16x128xf32> to vector<16x32xf32>
    %227 = vector.extract_strided_slice %223 {offsets = [0, 64], sizes = [16, 32], strides = [1, 1]} : vector<16x128xf32> to vector<16x32xf32>
    %228 = arith.mulf %226, %227 : vector<16x32xf32>
    %229 = arith.addf %225, %228 : vector<16x32xf32>
    %230 = vector.extract_strided_slice %223 {offsets = [0, 96], sizes = [16, 32], strides = [1, 1]} : vector<16x128xf32> to vector<16x32xf32>
    %231 = math.tanh %229 : vector<16x32xf32>
    %232 = arith.mulf %230, %231 : vector<16x32xf32>
    %c112 = arith.constant 112 : index
    %c0_47 = arith.constant 0 : index
    %233 = vector.load %arg11[%c112, %c0_47] : memref<128x33xf32, #tpu.memory_space<vmem>>, vector<16x32xf32>
    tpu.vector_store %arg11[%c112, %c0_47], %232 {strides = array<i32>} : memref<128x33xf32, #tpu.memory_space<vmem>>, vector<16x32xf32>,
    %c0_48 = arith.constant 0 : index
    %c0_49 = arith.constant 0 : index
    %234 = vector.load %arg11[%c0_48, %c0_49] : memref<128x33xf32, #tpu.memory_space<vmem>>, vector<128x33xf32>
    %cst_50 = arith.constant dense<0.000000e+00> : vector<34x128xf32>
    %235 = tpu.matmul %32, %234, %cst_50 {dimension_numbers = #tpu.dot_dimension_numbers<[1], [1], [0], [0], [0, 0, 1, 0], [], []>} : vector<34x33xf32>, vector<128x33xf32>, vector<34x128xf32> -> vector<34x128xf32>
    %236 = vector.extract_strided_slice %70 {offsets = [1, 0], sizes = [5, 128], strides = [1, 1]} : vector<7x128xf32> to vector<5x128xf32>
    %cst_51 = arith.constant 2.000000e+00 : f32
    %237 = vector.broadcast %cst_51 : f32 to vector<5x128xf32>
    %238 = arith.mulf %237, %236 : vector<5x128xf32>
    %239 = arith.mulf %238, %236 : vector<5x128xf32>
    %cst_52 = arith.constant 1.600000e+01 : f32
    %240 = vector.broadcast %cst_52 : f32 to vector<5x128xf32>
    %241 = arith.mulf %240, %236 : vector<5x128xf32>
    %cst_53 = arith.constant 2.560000e+01 : f32
    %242 = vector.broadcast %cst_53 : f32 to vector<7x128xf32>
    %243 = arith.mulf %242, %70 : vector<7x128xf32>
    %244 = tpu.concatenate %239, %241, %243 in 0 : vector<5x128xf32>, vector<5x128xf32>, vector<7x128xf32> -> vector<17x128xf32>
    %245 = vector.extract_strided_slice %235 {offsets = [0, 0], sizes = [17, 128], strides = [1, 1]} : vector<34x128xf32> to vector<17x128xf32>
    %246 = arith.mulf %245, %244 : vector<17x128xf32>
    %cst_54 = arith.constant dense<0.000000e+00> : vector<128xf32>
    %247 = vector.multi_reduction <add>, %246, %cst_54 [0] : vector<17x128xf32> to vector<128xf32>
    %248 = vector.shape_cast %247 : vector<128xf32> to vector<1x128xf32>
    %cst_55 = arith.constant 2.500000e-03 : f32
    %249 = vector.broadcast %cst_55 : f32 to vector<1x128xf32>
    %250 = arith.mulf %249, %248 : vector<1x128xf32>
    %251 = arith.subf %35, %250 : vector<1x128xf32>
    %c3_i32_56 = arith.constant 3 : i32
    %252 = tpu.dynamic_rotate %251 by %c3_i32_56 dim 1 : vector<1x128xf32>, i32 -> vector<1x128xf32>
    %c115_i32_57 = arith.constant 115 : i32
    %253 = tpu.dynamic_rotate %251 by %c115_i32_57 dim 1 : vector<1x128xf32>, i32 -> vector<1x128xf32>
    %c3_i32_58 = arith.constant 3 : i32
    %254 = vector.broadcast %c3_i32_58 : i32 to vector<1x128xi32>
    %255 = arith.cmpi sge, %17, %254 : vector<1x128xi32>
    %256 = arith.select %255, %252, %253 : vector<1x128xi1>, vector<1x128xf32>
    %c2_i32_59 = arith.constant 2 : i32
    %257 = tpu.dynamic_rotate %251 by %c2_i32_59 dim 1 : vector<1x128xf32>, i32 -> vector<1x128xf32>
    %c114_i32_60 = arith.constant 114 : i32
    %258 = tpu.dynamic_rotate %251 by %c114_i32_60 dim 1 : vector<1x128xf32>, i32 -> vector<1x128xf32>
    %c2_i32_61 = arith.constant 2 : i32
    %259 = vector.broadcast %c2_i32_61 : i32 to vector<1x128xi32>
    %260 = arith.cmpi sge, %17, %259 : vector<1x128xi32>
    %261 = arith.select %260, %257, %258 : vector<1x128xi1>, vector<1x128xf32>
    %c1_i32_62 = arith.constant 1 : i32
    %262 = tpu.dynamic_rotate %251 by %c1_i32_62 dim 1 : vector<1x128xf32>, i32 -> vector<1x128xf32>
    %c113_i32_63 = arith.constant 113 : i32
    %263 = tpu.dynamic_rotate %251 by %c113_i32_63 dim 1 : vector<1x128xf32>, i32 -> vector<1x128xf32>
    %c1_i32_64 = arith.constant 1 : i32
    %264 = vector.broadcast %c1_i32_64 : i32 to vector<1x128xi32>
    %265 = arith.cmpi sge, %17, %264 : vector<1x128xi32>
    %266 = arith.select %265, %262, %263 : vector<1x128xi1>, vector<1x128xf32>
    %c127_i32_65 = arith.constant 127 : i32
    %267 = tpu.dynamic_rotate %251 by %c127_i32_65 dim 1 : vector<1x128xf32>, i32 -> vector<1x128xf32>
    %c15_i32_66 = arith.constant 15 : i32
    %268 = tpu.dynamic_rotate %251 by %c15_i32_66 dim 1 : vector<1x128xf32>, i32 -> vector<1x128xf32>
    %c15_i32_67 = arith.constant 15 : i32
    %269 = vector.broadcast %c15_i32_67 : i32 to vector<1x128xi32>
    %270 = arith.cmpi slt, %17, %269 : vector<1x128xi32>
    %271 = arith.select %270, %267, %268 : vector<1x128xi1>, vector<1x128xf32>
    %c126_i32_68 = arith.constant 126 : i32
    %272 = tpu.dynamic_rotate %251 by %c126_i32_68 dim 1 : vector<1x128xf32>, i32 -> vector<1x128xf32>
    %c14_i32_69 = arith.constant 14 : i32
    %273 = tpu.dynamic_rotate %251 by %c14_i32_69 dim 1 : vector<1x128xf32>, i32 -> vector<1x128xf32>
    %c14_i32_70 = arith.constant 14 : i32
    %274 = vector.broadcast %c14_i32_70 : i32 to vector<1x128xi32>
    %275 = arith.cmpi slt, %17, %274 : vector<1x128xi32>
    %276 = arith.select %275, %272, %273 : vector<1x128xi1>, vector<1x128xf32>
    %c125_i32_71 = arith.constant 125 : i32
    %277 = tpu.dynamic_rotate %251 by %c125_i32_71 dim 1 : vector<1x128xf32>, i32 -> vector<1x128xf32>
    %c13_i32_72 = arith.constant 13 : i32
    %278 = tpu.dynamic_rotate %251 by %c13_i32_72 dim 1 : vector<1x128xf32>, i32 -> vector<1x128xf32>
    %c13_i32_73 = arith.constant 13 : i32
    %279 = vector.broadcast %c13_i32_73 : i32 to vector<1x128xi32>
    %280 = arith.cmpi slt, %17, %279 : vector<1x128xi32>
    %281 = arith.select %280, %277, %278 : vector<1x128xi1>, vector<1x128xf32>
    %282 = tpu.concatenate %256, %261, %266, %251, %271, %276, %281 in 0 : vector<1x128xf32>, vector<1x128xf32>, vector<1x128xf32>, vector<1x128xf32>, vector<1x128xf32>, vector<1x128xf32>, vector<1x128xf32> -> vector<7x128xf32>
    %283 = tpu.concatenate %256, %261, %266, %251, %271, %276, %281, %0 in 0 : vector<1x128xf32>, vector<1x128xf32>, vector<1x128xf32>, vector<1x128xf32>, vector<1x128xf32>, vector<1x128xf32>, vector<1x128xf32>, vector<1x128xf32> -> vector<8x128xf32>
    %cst_74 = arith.constant dense<0.000000e+00> : vector<128x128xf32>
    %284 = tpu.matmul %30, %283, %cst_74 {dimension_numbers = #tpu.dot_dimension_numbers<[1], [0], [0], [1], [0, 0, 1, 1], [], []>} : vector<128x8xf32>, vector<8x128xf32>, vector<128x128xf32> -> vector<128x128xf32>
    %285 = tpu.transpose %284, [1, 0] : vector<128x128xf32> -> vector<128x128xf32>
    %286 = vector.extract_strided_slice %285 {offsets = [0, 0], sizes = [16, 128], strides = [1, 1]} : vector<128x128xf32> to vector<16x128xf32>
    %cst_75 = arith.constant dense<0.000000e+00> : vector<16x128xf32>
    %287 = tpu.matmul %232, %31, %cst_75 {dimension_numbers = #tpu.dot_dimension_numbers<[1], [0], [0], [1], [0, 0, 1, 1], [], []>} : vector<16x32xf32>, vector<32x128xf32>, vector<16x128xf32> -> vector<16x128xf32>
    %288 = arith.addf %286, %287 : vector<16x128xf32>
    %289 = vector.broadcast %26 : vector<1x128xf32> to vector<16x128xf32>
    %290 = arith.mulf %289, %288 : vector<16x128xf32>
    %291 = math.tanh %290 : vector<16x128xf32>
    %292 = vector.broadcast %26 : vector<1x128xf32> to vector<16x128xf32>
    %293 = arith.mulf %292, %291 : vector<16x128xf32>
    %294 = vector.broadcast %29 : vector<1x128xf32> to vector<16x128xf32>
    %295 = arith.addf %293, %294 : vector<16x128xf32>
    %296 = vector.extract_strided_slice %295 {offsets = [0, 32], sizes = [16, 32], strides = [1, 1]} : vector<16x128xf32> to vector<16x32xf32>
    %297 = arith.mulf %296, %229 : vector<16x32xf32>
    %298 = vector.extract_strided_slice %295 {offsets = [0, 0], sizes = [16, 32], strides = [1, 1]} : vector<16x128xf32> to vector<16x32xf32>
    %299 = vector.extract_strided_slice %295 {offsets = [0, 64], sizes = [16, 32], strides = [1, 1]} : vector<16x128xf32> to vector<16x32xf32>
    %300 = arith.mulf %298, %299 : vector<16x32xf32>
    %301 = arith.addf %297, %300 : vector<16x32xf32>
    %302 = vector.extract_strided_slice %295 {offsets = [0, 96], sizes = [16, 32], strides = [1, 1]} : vector<16x128xf32> to vector<16x32xf32>
    %303 = math.tanh %301 : vector<16x32xf32>
    %304 = arith.mulf %302, %303 : vector<16x32xf32>
    %c0_76 = arith.constant 0 : index
    %c0_77 = arith.constant 0 : index
    %305 = vector.load %arg11[%c0_76, %c0_77] : memref<128x33xf32, #tpu.memory_space<vmem>>, vector<16x32xf32>
    tpu.vector_store %arg11[%c0_76, %c0_77], %304 {strides = array<i32>} : memref<128x33xf32, #tpu.memory_space<vmem>>, vector<16x32xf32>,
    %306 = vector.extract_strided_slice %285 {offsets = [16, 0], sizes = [16, 128], strides = [1, 1]} : vector<128x128xf32> to vector<16x128xf32>
    %cst_78 = arith.constant dense<0.000000e+00> : vector<16x128xf32>
    %307 = tpu.matmul %304, %31, %cst_78 {dimension_numbers = #tpu.dot_dimension_numbers<[1], [0], [0], [1], [0, 0, 1, 1], [], []>} : vector<16x32xf32>, vector<32x128xf32>, vector<16x128xf32> -> vector<16x128xf32>
    %308 = arith.addf %306, %307 : vector<16x128xf32>
    %309 = vector.broadcast %26 : vector<1x128xf32> to vector<16x128xf32>
    %310 = arith.mulf %309, %308 : vector<16x128xf32>
    %311 = math.tanh %310 : vector<16x128xf32>
    %312 = vector.broadcast %26 : vector<1x128xf32> to vector<16x128xf32>
    %313 = arith.mulf %312, %311 : vector<16x128xf32>
    %314 = vector.broadcast %29 : vector<1x128xf32> to vector<16x128xf32>
    %315 = arith.addf %313, %314 : vector<16x128xf32>
    %316 = vector.extract_strided_slice %315 {offsets = [0, 32], sizes = [16, 32], strides = [1, 1]} : vector<16x128xf32> to vector<16x32xf32>
    %317 = arith.mulf %316, %301 : vector<16x32xf32>
    %318 = vector.extract_strided_slice %315 {offsets = [0, 0], sizes = [16, 32], strides = [1, 1]} : vector<16x128xf32> to vector<16x32xf32>
    %319 = vector.extract_strided_slice %315 {offsets = [0, 64], sizes = [16, 32], strides = [1, 1]} : vector<16x128xf32> to vector<16x32xf32>
    %320 = arith.mulf %318, %319 : vector<16x32xf32>
    %321 = arith.addf %317, %320 : vector<16x32xf32>
    %322 = vector.extract_strided_slice %315 {offsets = [0, 96], sizes = [16, 32], strides = [1, 1]} : vector<16x128xf32> to vector<16x32xf32>
    %323 = math.tanh %321 : vector<16x32xf32>
    %324 = arith.mulf %322, %323 : vector<16x32xf32>
    %c16_79 = arith.constant 16 : index
    %c0_80 = arith.constant 0 : index
    %325 = vector.load %arg11[%c16_79, %c0_80] : memref<128x33xf32, #tpu.memory_space<vmem>>, vector<16x32xf32>
    tpu.vector_store %arg11[%c16_79, %c0_80], %324 {strides = array<i32>} : memref<128x33xf32, #tpu.memory_space<vmem>>, vector<16x32xf32>,
    %326 = vector.extract_strided_slice %285 {offsets = [32, 0], sizes = [16, 128], strides = [1, 1]} : vector<128x128xf32> to vector<16x128xf32>
    %cst_81 = arith.constant dense<0.000000e+00> : vector<16x128xf32>
    %327 = tpu.matmul %324, %31, %cst_81 {dimension_numbers = #tpu.dot_dimension_numbers<[1], [0], [0], [1], [0, 0, 1, 1], [], []>} : vector<16x32xf32>, vector<32x128xf32>, vector<16x128xf32> -> vector<16x128xf32>
    %328 = arith.addf %326, %327 : vector<16x128xf32>
    %329 = vector.broadcast %26 : vector<1x128xf32> to vector<16x128xf32>
    %330 = arith.mulf %329, %328 : vector<16x128xf32>
    %331 = math.tanh %330 : vector<16x128xf32>
    %332 = vector.broadcast %26 : vector<1x128xf32> to vector<16x128xf32>
    %333 = arith.mulf %332, %331 : vector<16x128xf32>
    %334 = vector.broadcast %29 : vector<1x128xf32> to vector<16x128xf32>
    %335 = arith.addf %333, %334 : vector<16x128xf32>
    %336 = vector.extract_strided_slice %335 {offsets = [0, 32], sizes = [16, 32], strides = [1, 1]} : vector<16x128xf32> to vector<16x32xf32>
    %337 = arith.mulf %336, %321 : vector<16x32xf32>
    %338 = vector.extract_strided_slice %335 {offsets = [0, 0], sizes = [16, 32], strides = [1, 1]} : vector<16x128xf32> to vector<16x32xf32>
    %339 = vector.extract_strided_slice %335 {offsets = [0, 64], sizes = [16, 32], strides = [1, 1]} : vector<16x128xf32> to vector<16x32xf32>
    %340 = arith.mulf %338, %339 : vector<16x32xf32>
    %341 = arith.addf %337, %340 : vector<16x32xf32>
    %342 = vector.extract_strided_slice %335 {offsets = [0, 96], sizes = [16, 32], strides = [1, 1]} : vector<16x128xf32> to vector<16x32xf32>
    %343 = math.tanh %341 : vector<16x32xf32>
    %344 = arith.mulf %342, %343 : vector<16x32xf32>
    %c32_82 = arith.constant 32 : index
    %c0_83 = arith.constant 0 : index
    %345 = vector.load %arg11[%c32_82, %c0_83] : memref<128x33xf32, #tpu.memory_space<vmem>>, vector<16x32xf32>
    tpu.vector_store %arg11[%c32_82, %c0_83], %344 {strides = array<i32>} : memref<128x33xf32, #tpu.memory_space<vmem>>, vector<16x32xf32>,
    %346 = vector.extract_strided_slice %285 {offsets = [48, 0], sizes = [16, 128], strides = [1, 1]} : vector<128x128xf32> to vector<16x128xf32>
    %cst_84 = arith.constant dense<0.000000e+00> : vector<16x128xf32>
    %347 = tpu.matmul %344, %31, %cst_84 {dimension_numbers = #tpu.dot_dimension_numbers<[1], [0], [0], [1], [0, 0, 1, 1], [], []>} : vector<16x32xf32>, vector<32x128xf32>, vector<16x128xf32> -> vector<16x128xf32>
    %348 = arith.addf %346, %347 : vector<16x128xf32>
    %349 = vector.broadcast %26 : vector<1x128xf32> to vector<16x128xf32>
    %350 = arith.mulf %349, %348 : vector<16x128xf32>
    %351 = math.tanh %350 : vector<16x128xf32>
    %352 = vector.broadcast %26 : vector<1x128xf32> to vector<16x128xf32>
    %353 = arith.mulf %352, %351 : vector<16x128xf32>
    %354 = vector.broadcast %29 : vector<1x128xf32> to vector<16x128xf32>
    %355 = arith.addf %353, %354 : vector<16x128xf32>
    %356 = vector.extract_strided_slice %355 {offsets = [0, 32], sizes = [16, 32], strides = [1, 1]} : vector<16x128xf32> to vector<16x32xf32>
    %357 = arith.mulf %356, %341 : vector<16x32xf32>
    %358 = vector.extract_strided_slice %355 {offsets = [0, 0], sizes = [16, 32], strides = [1, 1]} : vector<16x128xf32> to vector<16x32xf32>
    %359 = vector.extract_strided_slice %355 {offsets = [0, 64], sizes = [16, 32], strides = [1, 1]} : vector<16x128xf32> to vector<16x32xf32>
    %360 = arith.mulf %358, %359 : vector<16x32xf32>
    %361 = arith.addf %357, %360 : vector<16x32xf32>
    %362 = vector.extract_strided_slice %355 {offsets = [0, 96], sizes = [16, 32], strides = [1, 1]} : vector<16x128xf32> to vector<16x32xf32>
    %363 = math.tanh %361 : vector<16x32xf32>
    %364 = arith.mulf %362, %363 : vector<16x32xf32>
    %c48_85 = arith.constant 48 : index
    %c0_86 = arith.constant 0 : index
    %365 = vector.load %arg11[%c48_85, %c0_86] : memref<128x33xf32, #tpu.memory_space<vmem>>, vector<16x32xf32>
    tpu.vector_store %arg11[%c48_85, %c0_86], %364 {strides = array<i32>} : memref<128x33xf32, #tpu.memory_space<vmem>>, vector<16x32xf32>,
    %366 = vector.extract_strided_slice %285 {offsets = [64, 0], sizes = [16, 128], strides = [1, 1]} : vector<128x128xf32> to vector<16x128xf32>
    %cst_87 = arith.constant dense<0.000000e+00> : vector<16x128xf32>
    %367 = tpu.matmul %364, %31, %cst_87 {dimension_numbers = #tpu.dot_dimension_numbers<[1], [0], [0], [1], [0, 0, 1, 1], [], []>} : vector<16x32xf32>, vector<32x128xf32>, vector<16x128xf32> -> vector<16x128xf32>
    %368 = arith.addf %366, %367 : vector<16x128xf32>
    %369 = vector.broadcast %26 : vector<1x128xf32> to vector<16x128xf32>
    %370 = arith.mulf %369, %368 : vector<16x128xf32>
    %371 = math.tanh %370 : vector<16x128xf32>
    %372 = vector.broadcast %26 : vector<1x128xf32> to vector<16x128xf32>
    %373 = arith.mulf %372, %371 : vector<16x128xf32>
    %374 = vector.broadcast %29 : vector<1x128xf32> to vector<16x128xf32>
    %375 = arith.addf %373, %374 : vector<16x128xf32>
    %376 = vector.extract_strided_slice %375 {offsets = [0, 32], sizes = [16, 32], strides = [1, 1]} : vector<16x128xf32> to vector<16x32xf32>
    %377 = arith.mulf %376, %361 : vector<16x32xf32>
    %378 = vector.extract_strided_slice %375 {offsets = [0, 0], sizes = [16, 32], strides = [1, 1]} : vector<16x128xf32> to vector<16x32xf32>
    %379 = vector.extract_strided_slice %375 {offsets = [0, 64], sizes = [16, 32], strides = [1, 1]} : vector<16x128xf32> to vector<16x32xf32>
    %380 = arith.mulf %378, %379 : vector<16x32xf32>
    %381 = arith.addf %377, %380 : vector<16x32xf32>
    %382 = vector.extract_strided_slice %375 {offsets = [0, 96], sizes = [16, 32], strides = [1, 1]} : vector<16x128xf32> to vector<16x32xf32>
    %383 = math.tanh %381 : vector<16x32xf32>
    %384 = arith.mulf %382, %383 : vector<16x32xf32>
    %c64_88 = arith.constant 64 : index
    %c0_89 = arith.constant 0 : index
    %385 = vector.load %arg11[%c64_88, %c0_89] : memref<128x33xf32, #tpu.memory_space<vmem>>, vector<16x32xf32>
    tpu.vector_store %arg11[%c64_88, %c0_89], %384 {strides = array<i32>} : memref<128x33xf32, #tpu.memory_space<vmem>>, vector<16x32xf32>,
    %386 = vector.extract_strided_slice %285 {offsets = [80, 0], sizes = [16, 128], strides = [1, 1]} : vector<128x128xf32> to vector<16x128xf32>
    %cst_90 = arith.constant dense<0.000000e+00> : vector<16x128xf32>
    %387 = tpu.matmul %384, %31, %cst_90 {dimension_numbers = #tpu.dot_dimension_numbers<[1], [0], [0], [1], [0, 0, 1, 1], [], []>} : vector<16x32xf32>, vector<32x128xf32>, vector<16x128xf32> -> vector<16x128xf32>
    %388 = arith.addf %386, %387 : vector<16x128xf32>
    %389 = vector.broadcast %26 : vector<1x128xf32> to vector<16x128xf32>
    %390 = arith.mulf %389, %388 : vector<16x128xf32>
    %391 = math.tanh %390 : vector<16x128xf32>
    %392 = vector.broadcast %26 : vector<1x128xf32> to vector<16x128xf32>
    %393 = arith.mulf %392, %391 : vector<16x128xf32>
    %394 = vector.broadcast %29 : vector<1x128xf32> to vector<16x128xf32>
    %395 = arith.addf %393, %394 : vector<16x128xf32>
    %396 = vector.extract_strided_slice %395 {offsets = [0, 32], sizes = [16, 32], strides = [1, 1]} : vector<16x128xf32> to vector<16x32xf32>
    %397 = arith.mulf %396, %381 : vector<16x32xf32>
    %398 = vector.extract_strided_slice %395 {offsets = [0, 0], sizes = [16, 32], strides = [1, 1]} : vector<16x128xf32> to vector<16x32xf32>
    %399 = vector.extract_strided_slice %395 {offsets = [0, 64], sizes = [16, 32], strides = [1, 1]} : vector<16x128xf32> to vector<16x32xf32>
    %400 = arith.mulf %398, %399 : vector<16x32xf32>
    %401 = arith.addf %397, %400 : vector<16x32xf32>
    %402 = vector.extract_strided_slice %395 {offsets = [0, 96], sizes = [16, 32], strides = [1, 1]} : vector<16x128xf32> to vector<16x32xf32>
    %403 = math.tanh %401 : vector<16x32xf32>
    %404 = arith.mulf %402, %403 : vector<16x32xf32>
    %c80_91 = arith.constant 80 : index
    %c0_92 = arith.constant 0 : index
    %405 = vector.load %arg11[%c80_91, %c0_92] : memref<128x33xf32, #tpu.memory_space<vmem>>, vector<16x32xf32>
    tpu.vector_store %arg11[%c80_91, %c0_92], %404 {strides = array<i32>} : memref<128x33xf32, #tpu.memory_space<vmem>>, vector<16x32xf32>,
    %406 = vector.extract_strided_slice %285 {offsets = [96, 0], sizes = [16, 128], strides = [1, 1]} : vector<128x128xf32> to vector<16x128xf32>
    %cst_93 = arith.constant dense<0.000000e+00> : vector<16x128xf32>
    %407 = tpu.matmul %404, %31, %cst_93 {dimension_numbers = #tpu.dot_dimension_numbers<[1], [0], [0], [1], [0, 0, 1, 1], [], []>} : vector<16x32xf32>, vector<32x128xf32>, vector<16x128xf32> -> vector<16x128xf32>
    %408 = arith.addf %406, %407 : vector<16x128xf32>
    %409 = vector.broadcast %26 : vector<1x128xf32> to vector<16x128xf32>
    %410 = arith.mulf %409, %408 : vector<16x128xf32>
    %411 = math.tanh %410 : vector<16x128xf32>
    %412 = vector.broadcast %26 : vector<1x128xf32> to vector<16x128xf32>
    %413 = arith.mulf %412, %411 : vector<16x128xf32>
    %414 = vector.broadcast %29 : vector<1x128xf32> to vector<16x128xf32>
    %415 = arith.addf %413, %414 : vector<16x128xf32>
    %416 = vector.extract_strided_slice %415 {offsets = [0, 32], sizes = [16, 32], strides = [1, 1]} : vector<16x128xf32> to vector<16x32xf32>
    %417 = arith.mulf %416, %401 : vector<16x32xf32>
    %418 = vector.extract_strided_slice %415 {offsets = [0, 0], sizes = [16, 32], strides = [1, 1]} : vector<16x128xf32> to vector<16x32xf32>
    %419 = vector.extract_strided_slice %415 {offsets = [0, 64], sizes = [16, 32], strides = [1, 1]} : vector<16x128xf32> to vector<16x32xf32>
    %420 = arith.mulf %418, %419 : vector<16x32xf32>
    %421 = arith.addf %417, %420 : vector<16x32xf32>
    %422 = vector.extract_strided_slice %415 {offsets = [0, 96], sizes = [16, 32], strides = [1, 1]} : vector<16x128xf32> to vector<16x32xf32>
    %423 = math.tanh %421 : vector<16x32xf32>
    %424 = arith.mulf %422, %423 : vector<16x32xf32>
    %c96_94 = arith.constant 96 : index
    %c0_95 = arith.constant 0 : index
    %425 = vector.load %arg11[%c96_94, %c0_95] : memref<128x33xf32, #tpu.memory_space<vmem>>, vector<16x32xf32>
    tpu.vector_store %arg11[%c96_94, %c0_95], %424 {strides = array<i32>} : memref<128x33xf32, #tpu.memory_space<vmem>>, vector<16x32xf32>,
    %426 = vector.extract_strided_slice %285 {offsets = [112, 0], sizes = [16, 128], strides = [1, 1]} : vector<128x128xf32> to vector<16x128xf32>
    %cst_96 = arith.constant dense<0.000000e+00> : vector<16x128xf32>
    %427 = tpu.matmul %424, %31, %cst_96 {dimension_numbers = #tpu.dot_dimension_numbers<[1], [0], [0], [1], [0, 0, 1, 1], [], []>} : vector<16x32xf32>, vector<32x128xf32>, vector<16x128xf32> -> vector<16x128xf32>
    %428 = arith.addf %426, %427 : vector<16x128xf32>
    %429 = vector.broadcast %26 : vector<1x128xf32> to vector<16x128xf32>
    %430 = arith.mulf %429, %428 : vector<16x128xf32>
    %431 = math.tanh %430 : vector<16x128xf32>
    %432 = vector.broadcast %26 : vector<1x128xf32> to vector<16x128xf32>
    %433 = arith.mulf %432, %431 : vector<16x128xf32>
    %434 = vector.broadcast %29 : vector<1x128xf32> to vector<16x128xf32>
    %435 = arith.addf %433, %434 : vector<16x128xf32>
    %436 = vector.extract_strided_slice %435 {offsets = [0, 32], sizes = [16, 32], strides = [1, 1]} : vector<16x128xf32> to vector<16x32xf32>
    %437 = arith.mulf %436, %421 : vector<16x32xf32>
    %438 = vector.extract_strided_slice %435 {offsets = [0, 0], sizes = [16, 32], strides = [1, 1]} : vector<16x128xf32> to vector<16x32xf32>
    %439 = vector.extract_strided_slice %435 {offsets = [0, 64], sizes = [16, 32], strides = [1, 1]} : vector<16x128xf32> to vector<16x32xf32>
    %440 = arith.mulf %438, %439 : vector<16x32xf32>
    %441 = arith.addf %437, %440 : vector<16x32xf32>
    %442 = vector.extract_strided_slice %435 {offsets = [0, 96], sizes = [16, 32], strides = [1, 1]} : vector<16x128xf32> to vector<16x32xf32>
    %443 = math.tanh %441 : vector<16x32xf32>
    %444 = arith.mulf %442, %443 : vector<16x32xf32>
    %c112_97 = arith.constant 112 : index
    %c0_98 = arith.constant 0 : index
    %445 = vector.load %arg11[%c112_97, %c0_98] : memref<128x33xf32, #tpu.memory_space<vmem>>, vector<16x32xf32>
    tpu.vector_store %arg11[%c112_97, %c0_98], %444 {strides = array<i32>} : memref<128x33xf32, #tpu.memory_space<vmem>>, vector<16x32xf32>,
    %c0_99 = arith.constant 0 : index
    %c0_100 = arith.constant 0 : index
    %446 = vector.load %arg11[%c0_99, %c0_100] : memref<128x33xf32, #tpu.memory_space<vmem>>, vector<128x33xf32>
    %cst_101 = arith.constant dense<0.000000e+00> : vector<34x128xf32>
    %447 = tpu.matmul %32, %446, %cst_101 {dimension_numbers = #tpu.dot_dimension_numbers<[1], [1], [0], [0], [0, 0, 1, 0], [], []>} : vector<34x33xf32>, vector<128x33xf32>, vector<34x128xf32> -> vector<34x128xf32>
    %448 = vector.extract_strided_slice %282 {offsets = [1, 0], sizes = [5, 128], strides = [1, 1]} : vector<7x128xf32> to vector<5x128xf32>
    %cst_102 = arith.constant 2.000000e+00 : f32
    %449 = vector.broadcast %cst_102 : f32 to vector<5x128xf32>
    %450 = arith.mulf %449, %448 : vector<5x128xf32>
    %451 = arith.mulf %450, %448 : vector<5x128xf32>
    %cst_103 = arith.constant 1.600000e+01 : f32
    %452 = vector.broadcast %cst_103 : f32 to vector<5x128xf32>
    %453 = arith.mulf %452, %448 : vector<5x128xf32>
    %cst_104 = arith.constant 2.560000e+01 : f32
    %454 = vector.broadcast %cst_104 : f32 to vector<7x128xf32>
    %455 = arith.mulf %454, %282 : vector<7x128xf32>
    %456 = tpu.concatenate %451, %453, %455 in 0 : vector<5x128xf32>, vector<5x128xf32>, vector<7x128xf32> -> vector<17x128xf32>
    %457 = vector.extract_strided_slice %447 {offsets = [0, 0], sizes = [17, 128], strides = [1, 1]} : vector<34x128xf32> to vector<17x128xf32>
    %458 = arith.mulf %457, %456 : vector<17x128xf32>
    %cst_105 = arith.constant dense<0.000000e+00> : vector<128xf32>
    %459 = vector.multi_reduction <add>, %458, %cst_105 [0] : vector<17x128xf32> to vector<128xf32>
    %460 = vector.shape_cast %459 : vector<128xf32> to vector<1x128xf32>
    %cst_106 = arith.constant 7.500000e-01 : f32
    %461 = vector.broadcast %cst_106 : f32 to vector<1x128xf32>
    %462 = arith.mulf %461, %35 : vector<1x128xf32>
    %cst_107 = arith.constant 2.500000e-01 : f32
    %463 = vector.broadcast %cst_107 : f32 to vector<1x128xf32>
    %464 = arith.mulf %463, %251 : vector<1x128xf32>
    %465 = arith.addf %462, %464 : vector<1x128xf32>
    %cst_108 = arith.constant 6.250000e-04 : f32
    %466 = vector.broadcast %cst_108 : f32 to vector<1x128xf32>
    %467 = arith.mulf %466, %460 : vector<1x128xf32>
    %468 = arith.subf %465, %467 : vector<1x128xf32>
    %c3_i32_109 = arith.constant 3 : i32
    %469 = tpu.dynamic_rotate %468 by %c3_i32_109 dim 1 : vector<1x128xf32>, i32 -> vector<1x128xf32>
    %c115_i32_110 = arith.constant 115 : i32
    %470 = tpu.dynamic_rotate %468 by %c115_i32_110 dim 1 : vector<1x128xf32>, i32 -> vector<1x128xf32>
    %c3_i32_111 = arith.constant 3 : i32
    %471 = vector.broadcast %c3_i32_111 : i32 to vector<1x128xi32>
    %472 = arith.cmpi sge, %17, %471 : vector<1x128xi32>
    %473 = arith.select %472, %469, %470 : vector<1x128xi1>, vector<1x128xf32>
    %c2_i32_112 = arith.constant 2 : i32
    %474 = tpu.dynamic_rotate %468 by %c2_i32_112 dim 1 : vector<1x128xf32>, i32 -> vector<1x128xf32>
    %c114_i32_113 = arith.constant 114 : i32
    %475 = tpu.dynamic_rotate %468 by %c114_i32_113 dim 1 : vector<1x128xf32>, i32 -> vector<1x128xf32>
    %c2_i32_114 = arith.constant 2 : i32
    %476 = vector.broadcast %c2_i32_114 : i32 to vector<1x128xi32>
    %477 = arith.cmpi sge, %17, %476 : vector<1x128xi32>
    %478 = arith.select %477, %474, %475 : vector<1x128xi1>, vector<1x128xf32>
    %c1_i32_115 = arith.constant 1 : i32
    %479 = tpu.dynamic_rotate %468 by %c1_i32_115 dim 1 : vector<1x128xf32>, i32 -> vector<1x128xf32>
    %c113_i32_116 = arith.constant 113 : i32
    %480 = tpu.dynamic_rotate %468 by %c113_i32_116 dim 1 : vector<1x128xf32>, i32 -> vector<1x128xf32>
    %c1_i32_117 = arith.constant 1 : i32
    %481 = vector.broadcast %c1_i32_117 : i32 to vector<1x128xi32>
    %482 = arith.cmpi sge, %17, %481 : vector<1x128xi32>
    %483 = arith.select %482, %479, %480 : vector<1x128xi1>, vector<1x128xf32>
    %c127_i32_118 = arith.constant 127 : i32
    %484 = tpu.dynamic_rotate %468 by %c127_i32_118 dim 1 : vector<1x128xf32>, i32 -> vector<1x128xf32>
    %c15_i32_119 = arith.constant 15 : i32
    %485 = tpu.dynamic_rotate %468 by %c15_i32_119 dim 1 : vector<1x128xf32>, i32 -> vector<1x128xf32>
    %c15_i32_120 = arith.constant 15 : i32
    %486 = vector.broadcast %c15_i32_120 : i32 to vector<1x128xi32>
    %487 = arith.cmpi slt, %17, %486 : vector<1x128xi32>
    %488 = arith.select %487, %484, %485 : vector<1x128xi1>, vector<1x128xf32>
    %c126_i32_121 = arith.constant 126 : i32
    %489 = tpu.dynamic_rotate %468 by %c126_i32_121 dim 1 : vector<1x128xf32>, i32 -> vector<1x128xf32>
    %c14_i32_122 = arith.constant 14 : i32
    %490 = tpu.dynamic_rotate %468 by %c14_i32_122 dim 1 : vector<1x128xf32>, i32 -> vector<1x128xf32>
    %c14_i32_123 = arith.constant 14 : i32
    %491 = vector.broadcast %c14_i32_123 : i32 to vector<1x128xi32>
    %492 = arith.cmpi slt, %17, %491 : vector<1x128xi32>
    %493 = arith.select %492, %489, %490 : vector<1x128xi1>, vector<1x128xf32>
    %c125_i32_124 = arith.constant 125 : i32
    %494 = tpu.dynamic_rotate %468 by %c125_i32_124 dim 1 : vector<1x128xf32>, i32 -> vector<1x128xf32>
    %c13_i32_125 = arith.constant 13 : i32
    %495 = tpu.dynamic_rotate %468 by %c13_i32_125 dim 1 : vector<1x128xf32>, i32 -> vector<1x128xf32>
    %c13_i32_126 = arith.constant 13 : i32
    %496 = vector.broadcast %c13_i32_126 : i32 to vector<1x128xi32>
    %497 = arith.cmpi slt, %17, %496 : vector<1x128xi32>
    %498 = arith.select %497, %494, %495 : vector<1x128xi1>, vector<1x128xf32>
    %499 = tpu.concatenate %473, %478, %483, %468, %488, %493, %498 in 0 : vector<1x128xf32>, vector<1x128xf32>, vector<1x128xf32>, vector<1x128xf32>, vector<1x128xf32>, vector<1x128xf32>, vector<1x128xf32> -> vector<7x128xf32>
    %500 = tpu.concatenate %473, %478, %483, %468, %488, %493, %498, %0 in 0 : vector<1x128xf32>, vector<1x128xf32>, vector<1x128xf32>, vector<1x128xf32>, vector<1x128xf32>, vector<1x128xf32>, vector<1x128xf32>, vector<1x128xf32> -> vector<8x128xf32>
    %cst_127 = arith.constant dense<0.000000e+00> : vector<128x128xf32>
    %501 = tpu.matmul %30, %500, %cst_127 {dimension_numbers = #tpu.dot_dimension_numbers<[1], [0], [0], [1], [0, 0, 1, 1], [], []>} : vector<128x8xf32>, vector<8x128xf32>, vector<128x128xf32> -> vector<128x128xf32>
    %502 = tpu.transpose %501, [1, 0] : vector<128x128xf32> -> vector<128x128xf32>
    %503 = vector.extract_strided_slice %502 {offsets = [0, 0], sizes = [16, 128], strides = [1, 1]} : vector<128x128xf32> to vector<16x128xf32>
    %cst_128 = arith.constant dense<0.000000e+00> : vector<16x128xf32>
    %504 = tpu.matmul %444, %31, %cst_128 {dimension_numbers = #tpu.dot_dimension_numbers<[1], [0], [0], [1], [0, 0, 1, 1], [], []>} : vector<16x32xf32>, vector<32x128xf32>, vector<16x128xf32> -> vector<16x128xf32>
    %505 = arith.addf %503, %504 : vector<16x128xf32>
    %506 = vector.broadcast %26 : vector<1x128xf32> to vector<16x128xf32>
    %507 = arith.mulf %506, %505 : vector<16x128xf32>
    %508 = math.tanh %507 : vector<16x128xf32>
    %509 = vector.broadcast %26 : vector<1x128xf32> to vector<16x128xf32>
    %510 = arith.mulf %509, %508 : vector<16x128xf32>
    %511 = vector.broadcast %29 : vector<1x128xf32> to vector<16x128xf32>
    %512 = arith.addf %510, %511 : vector<16x128xf32>
    %513 = vector.extract_strided_slice %512 {offsets = [0, 32], sizes = [16, 32], strides = [1, 1]} : vector<16x128xf32> to vector<16x32xf32>
    %514 = arith.mulf %513, %441 : vector<16x32xf32>
    %515 = vector.extract_strided_slice %512 {offsets = [0, 0], sizes = [16, 32], strides = [1, 1]} : vector<16x128xf32> to vector<16x32xf32>
    %516 = vector.extract_strided_slice %512 {offsets = [0, 64], sizes = [16, 32], strides = [1, 1]} : vector<16x128xf32> to vector<16x32xf32>
    %517 = arith.mulf %515, %516 : vector<16x32xf32>
    %518 = arith.addf %514, %517 : vector<16x32xf32>
    %519 = vector.extract_strided_slice %512 {offsets = [0, 96], sizes = [16, 32], strides = [1, 1]} : vector<16x128xf32> to vector<16x32xf32>
    %520 = math.tanh %518 : vector<16x32xf32>
    %521 = arith.mulf %519, %520 : vector<16x32xf32>
    %c0_129 = arith.constant 0 : index
    %c0_130 = arith.constant 0 : index
    %522 = vector.load %arg11[%c0_129, %c0_130] : memref<128x33xf32, #tpu.memory_space<vmem>>, vector<16x32xf32>
    tpu.vector_store %arg11[%c0_129, %c0_130], %521 {strides = array<i32>} : memref<128x33xf32, #tpu.memory_space<vmem>>, vector<16x32xf32>,
    %523 = vector.extract_strided_slice %502 {offsets = [16, 0], sizes = [16, 128], strides = [1, 1]} : vector<128x128xf32> to vector<16x128xf32>
    %cst_131 = arith.constant dense<0.000000e+00> : vector<16x128xf32>
    %524 = tpu.matmul %521, %31, %cst_131 {dimension_numbers = #tpu.dot_dimension_numbers<[1], [0], [0], [1], [0, 0, 1, 1], [], []>} : vector<16x32xf32>, vector<32x128xf32>, vector<16x128xf32> -> vector<16x128xf32>
    %525 = arith.addf %523, %524 : vector<16x128xf32>
    %526 = vector.broadcast %26 : vector<1x128xf32> to vector<16x128xf32>
    %527 = arith.mulf %526, %525 : vector<16x128xf32>
    %528 = math.tanh %527 : vector<16x128xf32>
    %529 = vector.broadcast %26 : vector<1x128xf32> to vector<16x128xf32>
    %530 = arith.mulf %529, %528 : vector<16x128xf32>
    %531 = vector.broadcast %29 : vector<1x128xf32> to vector<16x128xf32>
    %532 = arith.addf %530, %531 : vector<16x128xf32>
    %533 = vector.extract_strided_slice %532 {offsets = [0, 32], sizes = [16, 32], strides = [1, 1]} : vector<16x128xf32> to vector<16x32xf32>
    %534 = arith.mulf %533, %518 : vector<16x32xf32>
    %535 = vector.extract_strided_slice %532 {offsets = [0, 0], sizes = [16, 32], strides = [1, 1]} : vector<16x128xf32> to vector<16x32xf32>
    %536 = vector.extract_strided_slice %532 {offsets = [0, 64], sizes = [16, 32], strides = [1, 1]} : vector<16x128xf32> to vector<16x32xf32>
    %537 = arith.mulf %535, %536 : vector<16x32xf32>
    %538 = arith.addf %534, %537 : vector<16x32xf32>
    %539 = vector.extract_strided_slice %532 {offsets = [0, 96], sizes = [16, 32], strides = [1, 1]} : vector<16x128xf32> to vector<16x32xf32>
    %540 = math.tanh %538 : vector<16x32xf32>
    %541 = arith.mulf %539, %540 : vector<16x32xf32>
    %c16_132 = arith.constant 16 : index
    %c0_133 = arith.constant 0 : index
    %542 = vector.load %arg11[%c16_132, %c0_133] : memref<128x33xf32, #tpu.memory_space<vmem>>, vector<16x32xf32>
    tpu.vector_store %arg11[%c16_132, %c0_133], %541 {strides = array<i32>} : memref<128x33xf32, #tpu.memory_space<vmem>>, vector<16x32xf32>,
    %543 = vector.extract_strided_slice %502 {offsets = [32, 0], sizes = [16, 128], strides = [1, 1]} : vector<128x128xf32> to vector<16x128xf32>
    %cst_134 = arith.constant dense<0.000000e+00> : vector<16x128xf32>
    %544 = tpu.matmul %541, %31, %cst_134 {dimension_numbers = #tpu.dot_dimension_numbers<[1], [0], [0], [1], [0, 0, 1, 1], [], []>} : vector<16x32xf32>, vector<32x128xf32>, vector<16x128xf32> -> vector<16x128xf32>
    %545 = arith.addf %543, %544 : vector<16x128xf32>
    %546 = vector.broadcast %26 : vector<1x128xf32> to vector<16x128xf32>
    %547 = arith.mulf %546, %545 : vector<16x128xf32>
    %548 = math.tanh %547 : vector<16x128xf32>
    %549 = vector.broadcast %26 : vector<1x128xf32> to vector<16x128xf32>
    %550 = arith.mulf %549, %548 : vector<16x128xf32>
    %551 = vector.broadcast %29 : vector<1x128xf32> to vector<16x128xf32>
    %552 = arith.addf %550, %551 : vector<16x128xf32>
    %553 = vector.extract_strided_slice %552 {offsets = [0, 32], sizes = [16, 32], strides = [1, 1]} : vector<16x128xf32> to vector<16x32xf32>
    %554 = arith.mulf %553, %538 : vector<16x32xf32>
    %555 = vector.extract_strided_slice %552 {offsets = [0, 0], sizes = [16, 32], strides = [1, 1]} : vector<16x128xf32> to vector<16x32xf32>
    %556 = vector.extract_strided_slice %552 {offsets = [0, 64], sizes = [16, 32], strides = [1, 1]} : vector<16x128xf32> to vector<16x32xf32>
    %557 = arith.mulf %555, %556 : vector<16x32xf32>
    %558 = arith.addf %554, %557 : vector<16x32xf32>
    %559 = vector.extract_strided_slice %552 {offsets = [0, 96], sizes = [16, 32], strides = [1, 1]} : vector<16x128xf32> to vector<16x32xf32>
    %560 = math.tanh %558 : vector<16x32xf32>
    %561 = arith.mulf %559, %560 : vector<16x32xf32>
    %c32_135 = arith.constant 32 : index
    %c0_136 = arith.constant 0 : index
    %562 = vector.load %arg11[%c32_135, %c0_136] : memref<128x33xf32, #tpu.memory_space<vmem>>, vector<16x32xf32>
    tpu.vector_store %arg11[%c32_135, %c0_136], %561 {strides = array<i32>} : memref<128x33xf32, #tpu.memory_space<vmem>>, vector<16x32xf32>,
    %563 = vector.extract_strided_slice %502 {offsets = [48, 0], sizes = [16, 128], strides = [1, 1]} : vector<128x128xf32> to vector<16x128xf32>
    %cst_137 = arith.constant dense<0.000000e+00> : vector<16x128xf32>
    %564 = tpu.matmul %561, %31, %cst_137 {dimension_numbers = #tpu.dot_dimension_numbers<[1], [0], [0], [1], [0, 0, 1, 1], [], []>} : vector<16x32xf32>, vector<32x128xf32>, vector<16x128xf32> -> vector<16x128xf32>
    %565 = arith.addf %563, %564 : vector<16x128xf32>
    %566 = vector.broadcast %26 : vector<1x128xf32> to vector<16x128xf32>
    %567 = arith.mulf %566, %565 : vector<16x128xf32>
    %568 = math.tanh %567 : vector<16x128xf32>
    %569 = vector.broadcast %26 : vector<1x128xf32> to vector<16x128xf32>
    %570 = arith.mulf %569, %568 : vector<16x128xf32>
    %571 = vector.broadcast %29 : vector<1x128xf32> to vector<16x128xf32>
    %572 = arith.addf %570, %571 : vector<16x128xf32>
    %573 = vector.extract_strided_slice %572 {offsets = [0, 32], sizes = [16, 32], strides = [1, 1]} : vector<16x128xf32> to vector<16x32xf32>
    %574 = arith.mulf %573, %558 : vector<16x32xf32>
    %575 = vector.extract_strided_slice %572 {offsets = [0, 0], sizes = [16, 32], strides = [1, 1]} : vector<16x128xf32> to vector<16x32xf32>
    %576 = vector.extract_strided_slice %572 {offsets = [0, 64], sizes = [16, 32], strides = [1, 1]} : vector<16x128xf32> to vector<16x32xf32>
    %577 = arith.mulf %575, %576 : vector<16x32xf32>
    %578 = arith.addf %574, %577 : vector<16x32xf32>
    %579 = vector.extract_strided_slice %572 {offsets = [0, 96], sizes = [16, 32], strides = [1, 1]} : vector<16x128xf32> to vector<16x32xf32>
    %580 = math.tanh %578 : vector<16x32xf32>
    %581 = arith.mulf %579, %580 : vector<16x32xf32>
    %c48_138 = arith.constant 48 : index
    %c0_139 = arith.constant 0 : index
    %582 = vector.load %arg11[%c48_138, %c0_139] : memref<128x33xf32, #tpu.memory_space<vmem>>, vector<16x32xf32>
    tpu.vector_store %arg11[%c48_138, %c0_139], %581 {strides = array<i32>} : memref<128x33xf32, #tpu.memory_space<vmem>>, vector<16x32xf32>,
    %583 = vector.extract_strided_slice %502 {offsets = [64, 0], sizes = [16, 128], strides = [1, 1]} : vector<128x128xf32> to vector<16x128xf32>
    %cst_140 = arith.constant dense<0.000000e+00> : vector<16x128xf32>
    %584 = tpu.matmul %581, %31, %cst_140 {dimension_numbers = #tpu.dot_dimension_numbers<[1], [0], [0], [1], [0, 0, 1, 1], [], []>} : vector<16x32xf32>, vector<32x128xf32>, vector<16x128xf32> -> vector<16x128xf32>
    %585 = arith.addf %583, %584 : vector<16x128xf32>
    %586 = vector.broadcast %26 : vector<1x128xf32> to vector<16x128xf32>
    %587 = arith.mulf %586, %585 : vector<16x128xf32>
    %588 = math.tanh %587 : vector<16x128xf32>
    %589 = vector.broadcast %26 : vector<1x128xf32> to vector<16x128xf32>
    %590 = arith.mulf %589, %588 : vector<16x128xf32>
    %591 = vector.broadcast %29 : vector<1x128xf32> to vector<16x128xf32>
    %592 = arith.addf %590, %591 : vector<16x128xf32>
    %593 = vector.extract_strided_slice %592 {offsets = [0, 32], sizes = [16, 32], strides = [1, 1]} : vector<16x128xf32> to vector<16x32xf32>
    %594 = arith.mulf %593, %578 : vector<16x32xf32>
    %595 = vector.extract_strided_slice %592 {offsets = [0, 0], sizes = [16, 32], strides = [1, 1]} : vector<16x128xf32> to vector<16x32xf32>
    %596 = vector.extract_strided_slice %592 {offsets = [0, 64], sizes = [16, 32], strides = [1, 1]} : vector<16x128xf32> to vector<16x32xf32>
    %597 = arith.mulf %595, %596 : vector<16x32xf32>
    %598 = arith.addf %594, %597 : vector<16x32xf32>
    %599 = vector.extract_strided_slice %592 {offsets = [0, 96], sizes = [16, 32], strides = [1, 1]} : vector<16x128xf32> to vector<16x32xf32>
    %600 = math.tanh %598 : vector<16x32xf32>
    %601 = arith.mulf %599, %600 : vector<16x32xf32>
    %c64_141 = arith.constant 64 : index
    %c0_142 = arith.constant 0 : index
    %602 = vector.load %arg11[%c64_141, %c0_142] : memref<128x33xf32, #tpu.memory_space<vmem>>, vector<16x32xf32>
    tpu.vector_store %arg11[%c64_141, %c0_142], %601 {strides = array<i32>} : memref<128x33xf32, #tpu.memory_space<vmem>>, vector<16x32xf32>,
    %603 = vector.extract_strided_slice %502 {offsets = [80, 0], sizes = [16, 128], strides = [1, 1]} : vector<128x128xf32> to vector<16x128xf32>
    %cst_143 = arith.constant dense<0.000000e+00> : vector<16x128xf32>
    %604 = tpu.matmul %601, %31, %cst_143 {dimension_numbers = #tpu.dot_dimension_numbers<[1], [0], [0], [1], [0, 0, 1, 1], [], []>} : vector<16x32xf32>, vector<32x128xf32>, vector<16x128xf32> -> vector<16x128xf32>
    %605 = arith.addf %603, %604 : vector<16x128xf32>
    %606 = vector.broadcast %26 : vector<1x128xf32> to vector<16x128xf32>
    %607 = arith.mulf %606, %605 : vector<16x128xf32>
    %608 = math.tanh %607 : vector<16x128xf32>
    %609 = vector.broadcast %26 : vector<1x128xf32> to vector<16x128xf32>
    %610 = arith.mulf %609, %608 : vector<16x128xf32>
    %611 = vector.broadcast %29 : vector<1x128xf32> to vector<16x128xf32>
    %612 = arith.addf %610, %611 : vector<16x128xf32>
    %613 = vector.extract_strided_slice %612 {offsets = [0, 32], sizes = [16, 32], strides = [1, 1]} : vector<16x128xf32> to vector<16x32xf32>
    %614 = arith.mulf %613, %598 : vector<16x32xf32>
    %615 = vector.extract_strided_slice %612 {offsets = [0, 0], sizes = [16, 32], strides = [1, 1]} : vector<16x128xf32> to vector<16x32xf32>
    %616 = vector.extract_strided_slice %612 {offsets = [0, 64], sizes = [16, 32], strides = [1, 1]} : vector<16x128xf32> to vector<16x32xf32>
    %617 = arith.mulf %615, %616 : vector<16x32xf32>
    %618 = arith.addf %614, %617 : vector<16x32xf32>
    %619 = vector.extract_strided_slice %612 {offsets = [0, 96], sizes = [16, 32], strides = [1, 1]} : vector<16x128xf32> to vector<16x32xf32>
    %620 = math.tanh %618 : vector<16x32xf32>
    %621 = arith.mulf %619, %620 : vector<16x32xf32>
    %c80_144 = arith.constant 80 : index
    %c0_145 = arith.constant 0 : index
    %622 = vector.load %arg11[%c80_144, %c0_145] : memref<128x33xf32, #tpu.memory_space<vmem>>, vector<16x32xf32>
    tpu.vector_store %arg11[%c80_144, %c0_145], %621 {strides = array<i32>} : memref<128x33xf32, #tpu.memory_space<vmem>>, vector<16x32xf32>,
    %623 = vector.extract_strided_slice %502 {offsets = [96, 0], sizes = [16, 128], strides = [1, 1]} : vector<128x128xf32> to vector<16x128xf32>
    %cst_146 = arith.constant dense<0.000000e+00> : vector<16x128xf32>
    %624 = tpu.matmul %621, %31, %cst_146 {dimension_numbers = #tpu.dot_dimension_numbers<[1], [0], [0], [1], [0, 0, 1, 1], [], []>} : vector<16x32xf32>, vector<32x128xf32>, vector<16x128xf32> -> vector<16x128xf32>
    %625 = arith.addf %623, %624 : vector<16x128xf32>
    %626 = vector.broadcast %26 : vector<1x128xf32> to vector<16x128xf32>
    %627 = arith.mulf %626, %625 : vector<16x128xf32>
    %628 = math.tanh %627 : vector<16x128xf32>
    %629 = vector.broadcast %26 : vector<1x128xf32> to vector<16x128xf32>
    %630 = arith.mulf %629, %628 : vector<16x128xf32>
    %631 = vector.broadcast %29 : vector<1x128xf32> to vector<16x128xf32>
    %632 = arith.addf %630, %631 : vector<16x128xf32>
    %633 = vector.extract_strided_slice %632 {offsets = [0, 32], sizes = [16, 32], strides = [1, 1]} : vector<16x128xf32> to vector<16x32xf32>
    %634 = arith.mulf %633, %618 : vector<16x32xf32>
    %635 = vector.extract_strided_slice %632 {offsets = [0, 0], sizes = [16, 32], strides = [1, 1]} : vector<16x128xf32> to vector<16x32xf32>
    %636 = vector.extract_strided_slice %632 {offsets = [0, 64], sizes = [16, 32], strides = [1, 1]} : vector<16x128xf32> to vector<16x32xf32>
    %637 = arith.mulf %635, %636 : vector<16x32xf32>
    %638 = arith.addf %634, %637 : vector<16x32xf32>
    %639 = vector.extract_strided_slice %632 {offsets = [0, 96], sizes = [16, 32], strides = [1, 1]} : vector<16x128xf32> to vector<16x32xf32>
    %640 = math.tanh %638 : vector<16x32xf32>
    %641 = arith.mulf %639, %640 : vector<16x32xf32>
    %c96_147 = arith.constant 96 : index
    %c0_148 = arith.constant 0 : index
    %642 = vector.load %arg11[%c96_147, %c0_148] : memref<128x33xf32, #tpu.memory_space<vmem>>, vector<16x32xf32>
    tpu.vector_store %arg11[%c96_147, %c0_148], %641 {strides = array<i32>} : memref<128x33xf32, #tpu.memory_space<vmem>>, vector<16x32xf32>,
    %643 = vector.extract_strided_slice %502 {offsets = [112, 0], sizes = [16, 128], strides = [1, 1]} : vector<128x128xf32> to vector<16x128xf32>
    %cst_149 = arith.constant dense<0.000000e+00> : vector<16x128xf32>
    %644 = tpu.matmul %641, %31, %cst_149 {dimension_numbers = #tpu.dot_dimension_numbers<[1], [0], [0], [1], [0, 0, 1, 1], [], []>} : vector<16x32xf32>, vector<32x128xf32>, vector<16x128xf32> -> vector<16x128xf32>
    %645 = arith.addf %643, %644 : vector<16x128xf32>
    %646 = vector.broadcast %26 : vector<1x128xf32> to vector<16x128xf32>
    %647 = arith.mulf %646, %645 : vector<16x128xf32>
    %648 = math.tanh %647 : vector<16x128xf32>
    %649 = vector.broadcast %26 : vector<1x128xf32> to vector<16x128xf32>
    %650 = arith.mulf %649, %648 : vector<16x128xf32>
    %651 = vector.broadcast %29 : vector<1x128xf32> to vector<16x128xf32>
    %652 = arith.addf %650, %651 : vector<16x128xf32>
    %653 = vector.extract_strided_slice %652 {offsets = [0, 32], sizes = [16, 32], strides = [1, 1]} : vector<16x128xf32> to vector<16x32xf32>
    %654 = arith.mulf %653, %638 : vector<16x32xf32>
    %655 = vector.extract_strided_slice %652 {offsets = [0, 0], sizes = [16, 32], strides = [1, 1]} : vector<16x128xf32> to vector<16x32xf32>
    %656 = vector.extract_strided_slice %652 {offsets = [0, 64], sizes = [16, 32], strides = [1, 1]} : vector<16x128xf32> to vector<16x32xf32>
    %657 = arith.mulf %655, %656 : vector<16x32xf32>
    %658 = arith.addf %654, %657 : vector<16x32xf32>
    %659 = vector.extract_strided_slice %652 {offsets = [0, 96], sizes = [16, 32], strides = [1, 1]} : vector<16x128xf32> to vector<16x32xf32>
    %660 = math.tanh %658 : vector<16x32xf32>
    %661 = arith.mulf %659, %660 : vector<16x32xf32>
    %c112_150 = arith.constant 112 : index
    %c0_151 = arith.constant 0 : index
    %662 = vector.load %arg11[%c112_150, %c0_151] : memref<128x33xf32, #tpu.memory_space<vmem>>, vector<16x32xf32>
    tpu.vector_store %arg11[%c112_150, %c0_151], %661 {strides = array<i32>} : memref<128x33xf32, #tpu.memory_space<vmem>>, vector<16x32xf32>,
    %c0_152 = arith.constant 0 : index
    %c0_153 = arith.constant 0 : index
    %663 = vector.load %arg11[%c0_152, %c0_153] : memref<128x33xf32, #tpu.memory_space<vmem>>, vector<128x33xf32>
    %cst_154 = arith.constant dense<0.000000e+00> : vector<34x128xf32>
    %664 = tpu.matmul %32, %663, %cst_154 {dimension_numbers = #tpu.dot_dimension_numbers<[1], [1], [0], [0], [0, 0, 1, 0], [], []>} : vector<34x33xf32>, vector<128x33xf32>, vector<34x128xf32> -> vector<34x128xf32>
    %665 = vector.extract_strided_slice %499 {offsets = [1, 0], sizes = [5, 128], strides = [1, 1]} : vector<7x128xf32> to vector<5x128xf32>
    %cst_155 = arith.constant 2.000000e+00 : f32
    %666 = vector.broadcast %cst_155 : f32 to vector<5x128xf32>
    %667 = arith.mulf %666, %665 : vector<5x128xf32>
    %668 = arith.mulf %667, %665 : vector<5x128xf32>
    %cst_156 = arith.constant 1.600000e+01 : f32
    %669 = vector.broadcast %cst_156 : f32 to vector<5x128xf32>
    %670 = arith.mulf %669, %665 : vector<5x128xf32>
    %cst_157 = arith.constant 2.560000e+01 : f32
    %671 = vector.broadcast %cst_157 : f32 to vector<7x128xf32>
    %672 = arith.mulf %671, %499 : vector<7x128xf32>
    %673 = tpu.concatenate %668, %670, %672 in 0 : vector<5x128xf32>, vector<5x128xf32>, vector<7x128xf32> -> vector<17x128xf32>
    %674 = vector.extract_strided_slice %664 {offsets = [0, 0], sizes = [17, 128], strides = [1, 1]} : vector<34x128xf32> to vector<17x128xf32>
    %675 = arith.mulf %674, %673 : vector<17x128xf32>
    %cst_158 = arith.constant dense<0.000000e+00> : vector<128xf32>
    %676 = vector.multi_reduction <add>, %675, %cst_158 [0] : vector<17x128xf32> to vector<128xf32>
    %677 = vector.shape_cast %676 : vector<128xf32> to vector<1x128xf32>
    %cst_159 = arith.constant 0.333333343 : f32
    %678 = vector.broadcast %cst_159 : f32 to vector<1x128xf32>
    %679 = arith.mulf %678, %35 : vector<1x128xf32>
    %cst_160 = arith.constant 0.666666686 : f32
    %680 = vector.broadcast %cst_160 : f32 to vector<1x128xf32>
    %681 = arith.mulf %680, %468 : vector<1x128xf32>
    %682 = arith.addf %679, %681 : vector<1x128xf32>
    %cst_161 = arith.constant 0.00166666671 : f32
    %683 = vector.broadcast %cst_161 : f32 to vector<1x128xf32>
    %684 = arith.mulf %683, %677 : vector<1x128xf32>
    %685 = arith.subf %682, %684 : vector<1x128xf32>
    %c0_162 = arith.constant 0 : index
    %c0_163 = arith.constant 0 : index
    %686 = vector.load %arg6[%c0_162, %c0_163] : memref<1x128xf32, #tpu.memory_space<vmem>>, vector<1x128xf32>
    tpu.vector_store %arg6[%c0_162, %c0_163], %685 {strides = array<i32>} : memref<1x128xf32, #tpu.memory_space<vmem>>, vector<1x128xf32>,
    %c0_164 = arith.constant 0 : index
    %c0_165 = arith.constant 0 : index
    %c0_166 = arith.constant 0 : index
    %687 = vector.load %arg7[%c0_164, %c0_165, %c0_166] : memref<1x16x32xf32, #tpu.memory_space<vmem>>, vector<1x16x32xf32>
    %688 = vector.shape_cast %687 : vector<1x16x32xf32> to vector<16x32xf32>
    %689 = vector.shape_cast %661 : vector<16x32xf32> to vector<1x16x32xf32>
    tpu.vector_store %arg7[%c0_164, %c0_165, %c0_166], %689 {strides = array<i32>} : memref<1x16x32xf32, #tpu.memory_space<vmem>>, vector<1x16x32xf32>,
    %c0_167 = arith.constant 0 : index
    %c0_168 = arith.constant 0 : index
    %c0_169 = arith.constant 0 : index
    %690 = vector.load %arg8[%c0_167, %c0_168, %c0_169] : memref<1x16x32xf32, #tpu.memory_space<vmem>>, vector<1x16x32xf32>
    %691 = vector.shape_cast %690 : vector<1x16x32xf32> to vector<16x32xf32>
    %692 = vector.shape_cast %658 : vector<16x32xf32> to vector<1x16x32xf32>
    tpu.vector_store %arg8[%c0_167, %c0_168, %c0_169], %692 {strides = array<i32>} : memref<1x16x32xf32, #tpu.memory_space<vmem>>, vector<1x16x32xf32>,
    %693 = vector.extract_strided_slice %664 {offsets = [17, 0], sizes = [17, 128], strides = [1, 1]} : vector<34x128xf32> to vector<17x128xf32>
    %694 = vector.extract_strided_slice %693 {offsets = [0, 0], sizes = [5, 128], strides = [1, 1]} : vector<17x128xf32> to vector<5x128xf32>
    %695 = vector.extract_strided_slice %693 {offsets = [0, 0], sizes = [5, 128], strides = [1, 1]} : vector<17x128xf32> to vector<5x128xf32>
    %696 = arith.mulf %694, %695 : vector<5x128xf32>
    %697 = vector.extract_strided_slice %693 {offsets = [5, 0], sizes = [5, 128], strides = [1, 1]} : vector<17x128xf32> to vector<5x128xf32>
    %698 = vector.extract_strided_slice %693 {offsets = [5, 0], sizes = [5, 128], strides = [1, 1]} : vector<17x128xf32> to vector<5x128xf32>
    %699 = arith.mulf %697, %698 : vector<5x128xf32>
    %700 = arith.addf %696, %699 : vector<5x128xf32>
    %c0_170 = arith.constant 0 : index
    %c0_171 = arith.constant 0 : index
    %701 = vector.load %arg9[%c0_170, %c0_171] : memref<5x128xf32, #tpu.memory_space<vmem>>, vector<5x128xf32>
    tpu.vector_store %arg9[%c0_170, %c0_171], %700 {strides = array<i32>} : memref<5x128xf32, #tpu.memory_space<vmem>>, vector<5x128xf32>,
    %702 = vector.extract_strided_slice %693 {offsets = [10, 0], sizes = [7, 128], strides = [1, 1]} : vector<17x128xf32> to vector<7x128xf32>
    %703 = vector.extract_strided_slice %693 {offsets = [10, 0], sizes = [7, 128], strides = [1, 1]} : vector<17x128xf32> to vector<7x128xf32>
    %704 = arith.mulf %702, %703 : vector<7x128xf32>
    %c0_172 = arith.constant 0 : index
    %c0_173 = arith.constant 0 : index
    %705 = vector.load %arg10[%c0_172, %c0_173] : memref<7x128xf32, #tpu.memory_space<vmem>>, vector<7x128xf32>
    tpu.vector_store %arg10[%c0_172, %c0_173], %704 {strides = array<i32>} : memref<7x128xf32, #tpu.memory_space<vmem>>, vector<7x128xf32>,
    return
  }
}

</mosaic_0001>

<llo_original>
// kernel: tpu_custom_call.1
$region0: #{tpu_custom_call.1}
  #allocation0 [shape = 'u32[]', space=smem, size = 0x4, offset = 0x4, fixed_abs, tag = 'smem constant byte address 0x4 - core index']
  #allocation1 [shape = 'u32[144,128]{1,0:T(1,128)}', space=vmem, size = 0x12000, scoped, tag = 'internal scratch']
  #allocation2 [shape = 'f32[128,33]{1,0:T(8,128)}', space=vmem, size = 0x10000, scoped, tag = 'scratch operand']
  %s0 = inlined_call_operand.vmem [shape: f32[1,128], index: 0, kind: input, shape index: {}]
  %s1 = inlined_call_operand.vmem [shape: f32[1,16,32], index: 1, kind: input, shape index: {}]
  %s2 = inlined_call_operand.vmem [shape: f32[1,16,32], index: 2, kind: input, shape index: {}]
  %s3 = inlined_call_operand.vmem [shape: f32[128,8], index: 3, kind: input, shape index: {}]
  %s4 = inlined_call_operand.vmem [shape: f32[32,128], index: 4, kind: input, shape index: {}]
  %s5 = inlined_call_operand.vmem [shape: f32[34,33], index: 5, kind: input, shape index: {}]
  %s6 = inlined_call_operand.hbm [shape: f32[1,128], index: 6, kind: output, shape index: {0}]
  %s7 = inlined_call_operand.hbm [shape: f32[1,16,32], index: 7, kind: output, shape index: {1}]
  %s8 = inlined_call_operand.hbm [shape: f32[1,16,32], index: 8, kind: output, shape index: {2}]
  %s9 = inlined_call_operand.hbm [shape: f32[5,128], index: 9, kind: output, shape index: {3}]
  %s10 = inlined_call_operand.hbm [shape: f32[7,128], index: 10, kind: output, shape index: {4}]
  %11 = xla_tuple %s6, %s7, %s8, %s9, %s10
  %s12 = sld [smem:[#allocation0]]
  $region66: #{tpu_custom_call.1} parent=0
    _
  %s14 = ssub.s32 1, %s12
  %s15 = scalar_select 0, %s14, %s12
  $region1: #{tpu_custom_call.1} parent=0
    #allocation3 [shape = 'u8[512]{0}', space=vmem, size = 0x400, scoped, tag = 'output window, operand 0, single buffered']
    #allocation4 [shape = 's32[1]{0}', space=sflag, size = 0x4, scoped, tag = 'scoped memory for tpu_custom_call.1']
    #allocation5 [shape = 'u8[8192]{0}', space=vmem, size = 0x2000, scoped, tag = 'output window, operand 1, single buffered']
    #allocation6 [shape = 's32[1]{0}', space=sflag, size = 0x4, scoped, tag = 'scoped memory for tpu_custom_call.1']
    #allocation7 [shape = 'u8[8192]{0}', space=vmem, size = 0x2000, scoped, tag = 'output window, operand 2, single buffered']
    #allocation8 [shape = 'u8[4096]{0}', space=vmem, size = 0x1000, scoped, tag = 'output window, operand 3, single buffered']
    #allocation9 [shape = 's32[1]{0}', space=sflag, size = 0x4, scoped, tag = 'scoped memory for tpu_custom_call.1']
    #allocation10 [shape = 'u8[4096]{0}', space=vmem, size = 0x1000, scoped, tag = 'output window, operand 4, single buffered']
    %16 = vsyncpa [#allocation4], 0
    %17 = vsyncpa [#allocation6], 0
    %18 = vsyncpa [#allocation9], 0
    // Predicated region
    $region2: #{tpu_custom_call.1} parent=1 // pred_check
      _
    $region3: #{tpu_custom_call.1} parent=1 // pred_check_branch
      %20 = sbr.rel (0) target = $region5
    $region4: #{tpu_custom_call.1} parent=1 // pred_region
      _
    $region5: #{tpu_custom_call.1} parent=1 // pred_fallthru
      _
    // Predicated region
    $region6: #{tpu_custom_call.1} parent=1 // pred_check
      _
    $region7: #{tpu_custom_call.1} parent=1 // pred_check_branch
      %22 = sbr.rel (0) target = $region9
    $region8: #{tpu_custom_call.1} parent=1 // pred_region
      _
    $region9: #{tpu_custom_call.1} parent=1 // pred_fallthru
      _
    // Predicated region
    $region10: #{tpu_custom_call.1} parent=1 // pred_check
      _
    $region11: #{tpu_custom_call.1} parent=1 // pred_check_branch
      %24 = sbr.rel (0) target = $region13
    $region12: #{tpu_custom_call.1} parent=1 // pred_region
      _
    $region13: #{tpu_custom_call.1} parent=1 // pred_fallthru
      _
    // Predicated region
    $region14: #{tpu_custom_call.1} parent=1 // pred_check
      _
    $region15: #{tpu_custom_call.1} parent=1 // pred_check_branch
      %26 = sbr.rel (0) target = $region17
    $region16: #{tpu_custom_call.1} parent=1 // pred_region
      _
    $region17: #{tpu_custom_call.1} parent=1 // pred_fallthru
      _
    // Predicated region
    $region18: #{tpu_custom_call.1} parent=1 // pred_check
      _
    $region19: #{tpu_custom_call.1} parent=1 // pred_check_branch
      %28 = sbr.rel (0) target = $region21
    $region20: #{tpu_custom_call.1} parent=1 // pred_region
      _
    $region21: #{tpu_custom_call.1} parent=1 // pred_fallthru
      _
    // Predicated region
    $region22: #{tpu_custom_call.1} parent=1 // pred_check
      _
    $region23: #{tpu_custom_call.1} parent=1 // pred_check_branch
      %30 = sbr.rel (0) target = $region25
    $region24: #{tpu_custom_call.1} parent=1 // pred_region
      _
    $region25: #{tpu_custom_call.1} parent=1 // pred_fallthru
      _
    %v31 = vlaneseq
    %v32 = vand.u32 %v31, 127
    %vm33 = vcmp.lt.s32.totalorder %v32, 0
    %v34 = vsub.s32 0, %v32
    %v35 = vsel %vm33, %v34, %v32
    %v36 = vshrl.u32 %v35, 4
    %v37 = vand.u32 %v35, 15
    %v38 = vsub.s32 0, %v37
    %v39 = vsel %vm33, %v38, %v37
    %vm40 = vcmp.ne.s32.totalorder %v39, 0
    %vm41 = vcmp.lt.s32.totalorder %v39, 0
    %vm42 = vmand %vm41, %vm40
    %v43 = vadd.s32 %v39, 16
    %v44 = vsel %vm42, %v43, %v39
    %vm45 = vcmp.ge.s32.totalorder %v32, 64
    %vm46 = vcmp.lt.s32.totalorder %v32, 96
    %vm47 = vmand %vm45, %vm46
    %v48 = vsel %vm47, 1.0, 0.5
    %v49 = vsel %vm47, 0.0, 0.5
    %v50 = vld [vmem:[%s3] sm:$0xff]
    %v51 = vld [vmem:[%s3 + $0x8] sm:$0xff]
    %v52 = vld [vmem:[%s3 + $0x10] sm:$0xff]
    %v53 = vld [vmem:[%s3 + $0x18] sm:$0xff]
    %v54 = vld [vmem:[%s3 + $0x20] sm:$0xff]
    %v55 = vld [vmem:[%s3 + $0x28] sm:$0xff]
    %v56 = vld [vmem:[%s3 + $0x30] sm:$0xff]
    %v57 = vld [vmem:[%s3 + $0x38] sm:$0xff]
    %v58 = vld [vmem:[%s3 + $0x40] sm:$0xff]
    %v59 = vld [vmem:[%s3 + $0x48] sm:$0xff]
    %v60 = vld [vmem:[%s3 + $0x50] sm:$0xff]
    %v61 = vld [vmem:[%s3 + $0x58] sm:$0xff]
    %v62 = vld [vmem:[%s3 + $0x60] sm:$0xff]
    %v63 = vld [vmem:[%s3 + $0x68] sm:$0xff]
    %v64 = vld [vmem:[%s3 + $0x70] sm:$0xff]
    %v65 = vld [vmem:[%s3 + $0x78] sm:$0xff]
    %v66 = vld [vmem:[%s4] sm:$0xff]
    %v67 = vld [vmem:[%s4 + $0x8] sm:$0xff]
    %v68 = vld [vmem:[%s4 + $0x10] sm:$0xff]
    %v69 = vld [vmem:[%s4 + $0x18] sm:$0xff]
    %v70 = vld [vmem:[%s5] sm:$0xff]
    %v71 = vld [vmem:[%s5 + $0x8] sm:$0xff]
    %v72 = vld [vmem:[%s5 + $0x10] sm:$0xff]
    %v73 = vld [vmem:[%s5 + $0x18] sm:$0xff]
    %v74 = vld [vmem:[%s5 + $0x20] sm:$0x3]
    %vm75 = vcmask 269568
    %76 = vst.msk [vmem:[#allocation2] sm:$0xff] %vm75, 1.0
    %77 = vst.msk [vmem:[#allocation2 + $0x8] sm:$0xff] %vm75, 1.0
    %78 = vst.msk [vmem:[#allocation2 + $0x10] sm:$0xff] %vm75, 1.0
    %79 = vst.msk [vmem:[#allocation2 + $0x18] sm:$0xff] %vm75, 1.0
    %80 = vst.msk [vmem:[#allocation2 + $0x20] sm:$0xff] %vm75, 1.0
    %81 = vst.msk [vmem:[#allocation2 + $0x28] sm:$0xff] %vm75, 1.0
    %82 = vst.msk [vmem:[#allocation2 + $0x30] sm:$0xff] %vm75, 1.0
    %83 = vst.msk [vmem:[#allocation2 + $0x38] sm:$0xff] %vm75, 1.0
    %84 = vst.msk [vmem:[#allocation2 + $0x40] sm:$0xff] %vm75, 1.0
    %85 = vst.msk [vmem:[#allocation2 + $0x48] sm:$0xff] %vm75, 1.0
    %86 = vst.msk [vmem:[#allocation2 + $0x50] sm:$0xff] %vm75, 1.0
    %87 = vst.msk [vmem:[#allocation2 + $0x58] sm:$0xff] %vm75, 1.0
    %88 = vst.msk [vmem:[#allocation2 + $0x60] sm:$0xff] %vm75, 1.0
    %89 = vst.msk [vmem:[#allocation2 + $0x68] sm:$0xff] %vm75, 1.0
    %90 = vst.msk [vmem:[#allocation2 + $0x70] sm:$0xff] %vm75, 1.0
    %91 = vst.msk [vmem:[#allocation2 + $0x78] sm:$0xff] %vm75, 1.0
    %v92 = vld [vmem:[%s0] sm:$0x1]
    %v93 = vld [vmem:[%s1] sm:$0xff]
    %v94 = vld [vmem:[%s1 + $0x8] sm:$0xff]
    %v95 = vld [vmem:[%s2] sm:$0xff]
    %v96 = vld [vmem:[%s2 + $0x8] sm:$0xff]
    %97 = vrot.lane.b32.xlu0 %v92, 3
    %v98 = vpop.permute.xlu0 %97
    %99 = vrot.lane.b32.xlu0 %v92, 115
    %v100 = vpop.permute.xlu0 %99
    %vm101 = vcmp.ge.s32.totalorder %v44, 3
    %v102 = vsel %vm101, %v98, %v100
    %103 = vrot.lane.b32.xlu0 %v92, 2
    %v104 = vpop.permute.xlu0 %103
    %105 = vrot.lane.b32.xlu0 %v92, 114
    %v106 = vpop.permute.xlu0 %105
    %vm107 = vcmp.ge.s32.totalorder %v44, 2
    %v108 = vsel %vm107, %v104, %v106
    %109 = vrot.lane.b32.xlu0 %v92, 1
    %v110 = vpop.permute.xlu0 %109
    %111 = vrot.lane.b32.xlu0 %v92, 113
    %v112 = vpop.permute.xlu0 %111
    %vm113 = vcmp.ge.s32.totalorder %v44, 1
    %v114 = vsel %vm113, %v110, %v112
    %115 = vrot.lane.b32.xlu0 %v92, 127
    %v116 = vpop.permute.xlu0 %115
    %117 = vrot.lane.b32.xlu0 %v92, 15
    %v118 = vpop.permute.xlu0 %117
    %vm119 = vcmp.lt.s32.totalorder %v44, 15
    %v120 = vsel %vm119, %v116, %v118
    %121 = vrot.lane.b32.xlu0 %v92, 126
    %v122 = vpop.permute.xlu0 %121
    %123 = vrot.lane.b32.xlu0 %v92, 14
    %v124 = vpop.permute.xlu0 %123
    %vm125 = vcmp.lt.s32.totalorder %v44, 14
    %v126 = vsel %vm125, %v122, %v124
    %127 = vrot.lane.b32.xlu0 %v92, 125
    %v128 = vpop.permute.xlu0 %127
    %129 = vrot.lane.b32.xlu0 %v92, 13
    %v130 = vpop.permute.xlu0 %129
    %vm131 = vcmp.lt.s32.totalorder %v44, 13
    %v132 = vsel %vm131, %v128, %v130
    %v134 = vrot.slane %v108, 7
    %v137 = vrot.slane %v114, 6
    %v140 = vlaneseq
    %v141 = vshrl.u32 %v140, 7
    %v142 = vsub.s32 0, %v141
    %v143 = vrot.slane %v92, %v142
    %v146 = vrot.slane %v120, 4
    %v149 = vrot.slane %v126, 3
    %v152 = vrot.slane %v132, 2
    %vm154 = vcmask 1040384
    %v155 = vsel %vm154, %v102, %v134
    %vm156 = vcmask 1041408
    %v157 = vsel %vm156, %v155, %v137
    %vm158 = vcmask 1042432
    %v159 = vsel %vm158, %v157, %v143
    %vm160 = vcmask 1043456
    %v161 = vsel %vm160, %v159, %v146
    %vm162 = vcmask 1044480
    %v163 = vsel %vm162, %v161, %v149
    %vm164 = vcmask 1045504
    %v165 = vsel %vm164, %v163, %v152
    %vm166 = vcmask 1046528
    %v167 = vsel %vm166, %v165, 1.0
    %vm168 = vcmask 64512
    %v170 = vsel %vm168, %v50, 0
    %v173 = vsel %vm168, %v51, 0
    %v176 = vsel %vm168, %v52, 0
    %v179 = vsel %vm168, %v53, 0
    %v182 = vsel %vm168, %v54, 0
    %v185 = vsel %vm168, %v55, 0
    %v188 = vsel %vm168, %v56, 0
    %v191 = vsel %vm168, %v57, 0
    %v194 = vsel %vm168, %v58, 0
    %v197 = vsel %vm168, %v59, 0
    %v200 = vsel %vm168, %v60, 0
    %v203 = vsel %vm168, %v61, 0
    %v206 = vsel %vm168, %v62, 0
    %v209 = vsel %vm168, %v63, 0
    %v212 = vsel %vm168, %v64, 0
    %v215 = vsel %vm168, %v65, 0
    %217 = vmatprep.subr.mxu0 0.0
    %218 = vmatpush1.msra.mxu0 %v167
    %219 = vmatprep.subr.mxu0 0.0
    %220 = vmatpush1.msra.mxu0 0.0
    %221 = vmatprep.subr.mxu0 0.0
    %222 = vmatpush1.msra.mxu0 0.0
    %223 = vmatprep.subr.mxu0 0.0
    %224 = vmatpush1.msra.mxu0 0.0
    %225 = vmatprep.subr.mxu0 0.0
    %226 = vmatpush1.msra.mxu0 0.0
    %227 = vmatprep.subr.mxu0 0.0
    %228 = vmatpush1.msra.mxu0 0.0
    %229 = vmatprep.subr.mxu0 0.0
    %230 = vmatpush1.msra.mxu0 0.0
    %231 = vmatprep.subr.mxu0 0.0
    %232 = vmatpush1.msra.mxu0 0.0
    %233 = vmatprep.subr.mxu0 0.0
    %234 = vmatpush1.msra.mxu0 0.0
    %235 = vmatprep.subr.mxu0 0.0
    %236 = vmatpush1.msra.mxu0 0.0
    %237 = vmatprep.subr.mxu0 0.0
    %238 = vmatpush1.msra.mxu0 0.0
    %239 = vmatprep.subr.mxu0 0.0
    %240 = vmatpush1.msra.mxu0 0.0
    %241 = vmatprep.subr.mxu0 0.0
    %242 = vmatpush1.msra.mxu0 0.0
    %243 = vmatprep.subr.mxu0 0.0
    %244 = vmatpush1.msra.mxu0 0.0
    %245 = vmatprep.subr.mxu0 0.0
    %246 = vmatpush1.msra.mxu0 0.0
    %247 = vmatprep.subr.mxu0 0.0
    %248 = vmatpush1.msra.mxu0 0.0
    %249 = vmatprep.subr.mxu0 0.0
    %250 = vmatpush1.msra.mxu0 0.0
    %251 = vmatprep.subr.mxu0 0.0
    %252 = vmatpush1.msra.mxu0 0.0
    %253 = vmatprep.subr.mxu0 0.0
    %254 = vmatpush1.msra.mxu0 0.0
    %255 = vmatprep.subr.mxu0 0.0
    %256 = vmatpush1.msra.mxu0 0.0
    %257 = vmatprep.subr.mxu0 0.0
    %258 = vmatpush1.msra.mxu0 0.0
    %259 = vmatprep.subr.mxu0 0.0
    %260 = vmatpush1.msra.mxu0 0.0
    %261 = vmatprep.subr.mxu0 0.0
    %262 = vmatpush1.msra.mxu0 0.0
    %263 = vmatprep.subr.mxu0 0.0
    %264 = vmatpush1.msra.mxu0 0.0
    %265 = vmatprep.subr.mxu0 0.0
    %266 = vmatpush1.msra.mxu0 0.0
    %267 = vmatprep.subr.mxu0 0.0
    %268 = vmatpush1.msra.mxu0 0.0
    %269 = vmatprep.subr.mxu0 0.0
    %270 = vmatpush1.msra.mxu0 0.0
    %271 = vmatprep.subr.mxu0 0.0
    %272 = vmatpush1.msra.mxu0 0.0
    %273 = vmatprep.subr.mxu0 0.0
    %274 = vmatpush1.msra.mxu0 0.0
    %275 = vmatprep.subr.mxu0 0.0
    %276 = vmatpush1.msra.mxu0 0.0
    %277 = vmatprep.subr.mxu0 0.0
    %278 = vmatpush1.msra.mxu0 0.0
    %279 = vmatprep.subr.mxu0 0.0
    %280 = vmatpush1.msra.mxu0 0.0
    %281 = vmatprep.mubr.f32.mxu0 0.0
    %282 = vmatmul.mubr.f32.gmra.mrb[0].mxu0 %v170
    %v283 = vpop.f32.mrb[0].mxu0
    %v284 = vadd.f32 0.0, %v283
    %v285 = vpop.f32.mrb[0].mxu0
    %286 = vmatprep.mubr.f32.mxu0 0.0
    %287 = vmatmul.mubr.f32.gmra.mrb[0].mxu0 %v173
    %v288 = vpop.f32.mrb[0].mxu0
    %v289 = vadd.f32 0.0, %v288
    %v290 = vpop.f32.mrb[0].mxu0
    %291 = vmatprep.mubr.f32.mxu0 0.0
    %292 = vmatmul.mubr.f32.gmra.mrb[0].mxu0 %v176
    %v293 = vpop.f32.mrb[0].mxu0
    %v294 = vadd.f32 0.0, %v293
    %v295 = vpop.f32.mrb[0].mxu0
    %296 = vmatprep.mubr.f32.mxu0 0.0
    %297 = vmatmul.mubr.f32.gmra.mrb[0].mxu0 %v179
    %v298 = vpop.f32.mrb[0].mxu0
    %v299 = vadd.f32 0.0, %v298
    %v300 = vpop.f32.mrb[0].mxu0
    %301 = vmatprep.mubr.f32.mxu0 0.0
    %302 = vmatmul.mubr.f32.gmra.mrb[0].mxu0 %v182
    %v303 = vpop.f32.mrb[0].mxu0
    %v304 = vadd.f32 0.0, %v303
    %v305 = vpop.f32.mrb[0].mxu0
    %306 = vmatprep.mubr.f32.mxu0 0.0
    %307 = vmatmul.mubr.f32.gmra.mrb[0].mxu0 %v185
    %v308 = vpop.f32.mrb[0].mxu0
    %v309 = vadd.f32 0.0, %v308
    %v310 = vpop.f32.mrb[0].mxu0
    %311 = vmatprep.mubr.f32.mxu0 0.0
    %312 = vmatmul.mubr.f32.gmra.mrb[0].mxu0 %v188
    %v313 = vpop.f32.mrb[0].mxu0
    %v314 = vadd.f32 0.0, %v313
    %v315 = vpop.f32.mrb[0].mxu0
    %316 = vmatprep.mubr.f32.mxu0 0.0
    %317 = vmatmul.mubr.f32.gmra.mrb[0].mxu0 %v191
    %v318 = vpop.f32.mrb[0].mxu0
    %v319 = vadd.f32 0.0, %v318
    %v320 = vpop.f32.mrb[0].mxu0
    %321 = vmatprep.mubr.f32.mxu0 0.0
    %322 = vmatmul.mubr.f32.gmra.mrb[0].mxu0 %v194
    %v323 = vpop.f32.mrb[0].mxu0
    %v324 = vadd.f32 0.0, %v323
    %v325 = vpop.f32.mrb[0].mxu0
    %326 = vmatprep.mubr.f32.mxu0 0.0
    %327 = vmatmul.mubr.f32.gmra.mrb[0].mxu0 %v197
    %v328 = vpop.f32.mrb[0].mxu0
    %v329 = vadd.f32 0.0, %v328
    %v330 = vpop.f32.mrb[0].mxu0
    %331 = vmatprep.mubr.f32.mxu0 0.0
    %332 = vmatmul.mubr.f32.gmra.mrb[0].mxu0 %v200
    %v333 = vpop.f32.mrb[0].mxu0
    %v334 = vadd.f32 0.0, %v333
    %v335 = vpop.f32.mrb[0].mxu0
    %336 = vmatprep.mubr.f32.mxu0 0.0
    %337 = vmatmul.mubr.f32.gmra.mrb[0].mxu0 %v203
    %v338 = vpop.f32.mrb[0].mxu0
    %v339 = vadd.f32 0.0, %v338
    %v340 = vpop.f32.mrb[0].mxu0
    %341 = vmatprep.mubr.f32.mxu0 0.0
    %342 = vmatmul.mubr.f32.gmra.mrb[0].mxu0 %v206
    %v343 = vpop.f32.mrb[0].mxu0
    %v344 = vadd.f32 0.0, %v343
    %v345 = vpop.f32.mrb[0].mxu0
    %346 = vmatprep.mubr.f32.mxu0 0.0
    %347 = vmatmul.mubr.f32.gmra.mrb[0].mxu0 %v209
    %v348 = vpop.f32.mrb[0].mxu0
    %v349 = vadd.f32 0.0, %v348
    %v350 = vpop.f32.mrb[0].mxu0
    %351 = vmatprep.mubr.f32.mxu0 0.0
    %352 = vmatmul.mubr.f32.gmra.mrb[0].mxu0 %v212
    %v353 = vpop.f32.mrb[0].mxu0
    %v354 = vadd.f32 0.0, %v353
    %v355 = vpop.f32.mrb[0].mxu0
    %356 = vmatprep.mubr.f32.mxu0 0.0
    %357 = vmatmul.mubr.f32.gmra.mrb[0].mxu0 %v215
    %v358 = vpop.f32.mrb[0].mxu0
    %v359 = vadd.f32 0.0, %v358
    %v360 = vpop.f32.mrb[0].mxu0
    %361 = vdwg.mxu0
    %362 = vxpose.xlu0.b32.start [1/16] %v284, 128
    %363 = vxpose.xlu0.b32.cont [2/16] %v289, 128
    %364 = vxpose.xlu0.b32.cont [3/16] %v294, 128
    %365 = vxpose.xlu0.b32.cont [4/16] %v299, 128
    %366 = vxpose.xlu0.b32.cont [5/16] %v304, 128
    %367 = vxpose.xlu0.b32.cont [6/16] %v309, 128
    %368 = vxpose.xlu0.b32.cont [7/16] %v314, 128
    %369 = vxpose.xlu0.b32.cont [8/16] %v319, 128
    %370 = vxpose.xlu0.b32.cont [9/16] %v324, 128
    %371 = vxpose.xlu0.b32.cont [10/16] %v329, 128
    %372 = vxpose.xlu0.b32.cont [11/16] %v334, 128
    %373 = vxpose.xlu0.b32.cont [12/16] %v339, 128
    %374 = vxpose.xlu0.b32.cont [13/16] %v344, 128
    %375 = vxpose.xlu0.b32.cont [14/16] %v349, 128
    %376 = vxpose.xlu0.b32.cont [15/16] %v354, 128
    %377 = vxpose.xlu0.b32.end [16/16] %v359, 128
    %v378 = vpop.trf.xlu0
    %v379 = vpop.trf.xlu0
    %v380 = vpop.trf.xlu0
    %v381 = vpop.trf.xlu0
    %v382 = vpop.trf.xlu0
    %v383 = vpop.trf.xlu0
    %v384 = vpop.trf.xlu0
    %v385 = vpop.trf.xlu0
    %v386 = vpop.trf.xlu0
    %v387 = vpop.trf.xlu0
    %v388 = vpop.trf.xlu0
    %v389 = vpop.trf.xlu0
    %v390 = vpop.trf.xlu0
    %v391 = vpop.trf.xlu0
    %v392 = vpop.trf.xlu0
    %v393 = vpop.trf.xlu0
    %vm394 = vcmask 261120
    %v396 = vsel %vm394, %v93, 0
    %v399 = vsel %vm394, %v94, 0
    %401 = vmatprep.subr.mxu0 0.0
    %402 = vmatpush1.msra.mxu0 %v66
    %403 = vmatprep.subr.mxu0 0.0
    %404 = vmatpush1.msra.mxu0 %v67
    %405 = vmatprep.subr.mxu0 0.0
    %406 = vmatpush1.msra.mxu0 %v68
    %407 = vmatprep.subr.mxu0 0.0
    %408 = vmatpush1.msra.mxu0 %v69
    %409 = vmatprep.subr.mxu0 0.0
    %410 = vmatpush1.msra.mxu0 0.0
    %411 = vmatprep.subr.mxu0 0.0
    %412 = vmatpush1.msra.mxu0 0.0
    %413 = vmatprep.subr.mxu0 0.0
    %414 = vmatpush1.msra.mxu0 0.0
    %415 = vmatprep.subr.mxu0 0.0
    %416 = vmatpush1.msra.mxu0 0.0
    %417 = vmatprep.subr.mxu0 0.0
    %418 = vmatpush1.msra.mxu0 0.0
    %419 = vmatprep.subr.mxu0 0.0
    %420 = vmatpush1.msra.mxu0 0.0
    %421 = vmatprep.subr.mxu0 0.0
    %422 = vmatpush1.msra.mxu0 0.0
    %423 = vmatprep.subr.mxu0 0.0
    %424 = vmatpush1.msra.mxu0 0.0
    %425 = vmatprep.subr.mxu0 0.0
    %426 = vmatpush1.msra.mxu0 0.0
    %427 = vmatprep.subr.mxu0 0.0
    %428 = vmatpush1.msra.mxu0 0.0
    %429 = vmatprep.subr.mxu0 0.0
    %430 = vmatpush1.msra.mxu0 0.0
    %431 = vmatprep.subr.mxu0 0.0
    %432 = vmatpush1.msra.mxu0 0.0
    %433 = vmatprep.subr.mxu0 0.0
    %434 = vmatpush1.msra.mxu0 0.0
    %435 = vmatprep.subr.mxu0 0.0
    %436 = vmatpush1.msra.mxu0 0.0
    %437 = vmatprep.subr.mxu0 0.0
    %438 = vmatpush1.msra.mxu0 0.0
    %439 = vmatprep.subr.mxu0 0.0
    %440 = vmatpush1.msra.mxu0 0.0
    %441 = vmatprep.subr.mxu0 0.0
    %442 = vmatpush1.msra.mxu0 0.0
    %443 = vmatprep.subr.mxu0 0.0
    %444 = vmatpush1.msra.mxu0 0.0
    %445 = vmatprep.subr.mxu0 0.0
    %446 = vmatpush1.msra.mxu0 0.0
    %447 = vmatprep.subr.mxu0 0.0
    %448 = vmatpush1.msra.mxu0 0.0
    %449 = vmatprep.subr.mxu0 0.0
    %450 = vmatpush1.msra.mxu0 0.0
    %451 = vmatprep.subr.mxu0 0.0
    %452 = vmatpush1.msra.mxu0 0.0
    %453 = vmatprep.subr.mxu0 0.0
    %454 = vmatpush1.msra.mxu0 0.0
    %455 = vmatprep.subr.mxu0 0.0
    %456 = vmatpush1.msra.mxu0 0.0
    %457 = vmatprep.subr.mxu0 0.0
    %458 = vmatpush1.msra.mxu0 0.0
    %459 = vmatprep.subr.mxu0 0.0
    %460 = vmatpush1.msra.mxu0 0.0
    %461 = vmatprep.subr.mxu0 0.0
    %462 = vmatpush1.msra.mxu0 0.0
    %463 = vmatprep.subr.mxu0 0.0
    %464 = vmatpush1.msra.mxu0 0.0
    %465 = vmatprep.mubr.f32.mxu0 0.0
    %466 = vmatmul.mubr.f32.gmra.mrb[0].mxu0 %v396
    %v467 = vpop.f32.mrb[0].mxu0
    %v468 = vadd.f32 0.0, %v467
    %v469 = vpop.f32.mrb[0].mxu0
    %470 = vmatprep.mubr.f32.mxu0 0.0
    %471 = vmatmul.mubr.f32.gmra.mrb[0].mxu0 %v399
    %v472 = vpop.f32.mrb[0].mxu0
    %v473 = vadd.f32 0.0, %v472
    %v474 = vpop.f32.mrb[0].mxu0
    %475 = vdwg.mxu0
    %v476 = vadd.f32 %v378, %v468
    %v477 = vadd.f32 %v379, %v473
    %v478 = vmul.f32 %v48, %v476
    %v479 = vmul.f32 %v48, %v477
    %v480 = vtanh.pop %v478
    %v481 = vtanh.pop %v479
    %v482 = vmul.f32 %v48, %v480
    %v483 = vmul.f32 %v48, %v481
    %v484 = vadd.f32 %v482, %v49
    %v485 = vadd.f32 %v483, %v49
    %488 = vrot.lane.b32.xlu0 %v95, 32
    %v489 = vpop.permute.xlu0 %488
    %490 = vrot.lane.b32.xlu0 %v96, 32
    %v491 = vpop.permute.xlu0 %490
    %v494 = vmul.f32 %v484, %v489
    %v495 = vmul.f32 %v485, %v491
    %498 = vrot.lane.b32.xlu0 %v484, 64
    %v499 = vpop.permute.xlu0 %498
    %500 = vrot.lane.b32.xlu0 %v485, 64
    %v501 = vpop.permute.xlu0 %500
    %v504 = vmul.f32 %v484, %v499
    %v505 = vmul.f32 %v485, %v501
    %508 = vrot.lane.b32.xlu0 %v504, 32
    %v509 = vpop.permute.xlu0 %508
    %510 = vrot.lane.b32.xlu0 %v505, 32
    %v511 = vpop.permute.xlu0 %510
    %v514 = vadd.f32 %v494, %v509
    %v515 = vadd.f32 %v495, %v511
    %v516 = vtanh.pop %v514
    %v517 = vtanh.pop %v515
    %520 = vrot.lane.b32.xlu0 %v516, 64
    %v521 = vpop.permute.xlu0 %520
    %522 = vrot.lane.b32.xlu0 %v517, 64
    %v523 = vpop.permute.xlu0 %522
    %v526 = vmul.f32 %v484, %v521
    %v527 = vmul.f32 %v485, %v523
    %530 = vrot.lane.b32.xlu0 %v526, 32
    %v531 = vpop.permute.xlu0 %530
    %532 = vrot.lane.b32.xlu0 %v527, 32
    %v533 = vpop.permute.xlu0 %532
    %536 = vst.msk [vmem:[#allocation2] sm:$0xff] %vm394, %v531
    %537 = vst.msk [vmem:[#allocation2 + $0x8] sm:$0xff] %vm394, %v533
    %v538 = vsel %vm394, %v531, 0
    %v540 = vsel %vm394, %v533, 0
    %542 = vmatprep.subr.mxu0 0.0
    %543 = vmatpush1.msra.mxu0 %v66
    %544 = vmatprep.subr.mxu0 0.0
    %545 = vmatpush1.msra.mxu0 %v67
    %546 = vmatprep.subr.mxu0 0.0
    %547 = vmatpush1.msra.mxu0 %v68
    %548 = vmatprep.subr.mxu0 0.0
    %549 = vmatpush1.msra.mxu0 %v69
    %550 = vmatprep.subr.mxu0 0.0
    %551 = vmatpush1.msra.mxu0 0.0
    %552 = vmatprep.subr.mxu0 0.0
    %553 = vmatpush1.msra.mxu0 0.0
    %554 = vmatprep.subr.mxu0 0.0
    %555 = vmatpush1.msra.mxu0 0.0
    %556 = vmatprep.subr.mxu0 0.0
    %557 = vmatpush1.msra.mxu0 0.0
    %558 = vmatprep.subr.mxu0 0.0
    %559 = vmatpush1.msra.mxu0 0.0
    %560 = vmatprep.subr.mxu0 0.0
    %561 = vmatpush1.msra.mxu0 0.0
    %562 = vmatprep.subr.mxu0 0.0
    %563 = vmatpush1.msra.mxu0 0.0
    %564 = vmatprep.subr.mxu0 0.0
    %565 = vmatpush1.msra.mxu0 0.0
    %566 = vmatprep.subr.mxu0 0.0
    %567 = vmatpush1.msra.mxu0 0.0
    %568 = vmatprep.subr.mxu0 0.0
    %569 = vmatpush1.msra.mxu0 0.0
    %570 = vmatprep.subr.mxu0 0.0
    %571 = vmatpush1.msra.mxu0 0.0
    %572 = vmatprep.subr.mxu0 0.0
    %573 = vmatpush1.msra.mxu0 0.0
    %574 = vmatprep.subr.mxu0 0.0
    %575 = vmatpush1.msra.mxu0 0.0
    %576 = vmatprep.subr.mxu0 0.0
    %577 = vmatpush1.msra.mxu0 0.0
    %578 = vmatprep.subr.mxu0 0.0
    %579 = vmatpush1.msra.mxu0 0.0
    %580 = vmatprep.subr.mxu0 0.0
    %581 = vmatpush1.msra.mxu0 0.0
    %582 = vmatprep.subr.mxu0 0.0
    %583 = vmatpush1.msra.mxu0 0.0
    %584 = vmatprep.subr.mxu0 0.0
    %585 = vmatpush1.msra.mxu0 0.0
    %586 = vmatprep.subr.mxu0 0.0
    %587 = vmatpush1.msra.mxu0 0.0
    %588 = vmatprep.subr.mxu0 0.0
    %589 = vmatpush1.msra.mxu0 0.0
    %590 = vmatprep.subr.mxu0 0.0
    %591 = vmatpush1.msra.mxu0 0.0
    %592 = vmatprep.subr.mxu0 0.0
    %593 = vmatpush1.msra.mxu0 0.0
    %594 = vmatprep.subr.mxu0 0.0
    %595 = vmatpush1.msra.mxu0 0.0
    %596 = vmatprep.subr.mxu0 0.0
    %597 = vmatpush1.msra.mxu0 0.0
    %598 = vmatprep.subr.mxu0 0.0
    %599 = vmatpush1.msra.mxu0 0.0
    %600 = vmatprep.subr.mxu0 0.0
    %601 = vmatpush1.msra.mxu0 0.0
    %602 = vmatprep.subr.mxu0 0.0
    %603 = vmatpush1.msra.mxu0 0.0
    %604 = vmatprep.subr.mxu0 0.0
    %605 = vmatpush1.msra.mxu0 0.0
    %606 = vmatprep.mubr.f32.mxu0 0.0
    %607 = vmatmul.mubr.f32.gmra.mrb[0].mxu0 %v538
    %v608 = vpop.f32.mrb[0].mxu0
    %v609 = vadd.f32 0.0, %v608
    %v610 = vpop.f32.mrb[0].mxu0
    %611 = vmatprep.mubr.f32.mxu0 0.0
    %612 = vmatmul.mubr.f32.gmra.mrb[0].mxu0 %v540
    %v613 = vpop.f32.mrb[0].mxu0
    %v614 = vadd.f32 0.0, %v613
    %v615 = vpop.f32.mrb[0].mxu0
    %616 = vdwg.mxu0
    %v617 = vadd.f32 %v380, %v609
    %v618 = vadd.f32 %v381, %v614
    %v619 = vmul.f32 %v48, %v617
    %v620 = vmul.f32 %v48, %v618
    %v621 = vtanh.pop %v619
    %v622 = vtanh.pop %v620
    %v623 = vmul.f32 %v48, %v621
    %v624 = vmul.f32 %v48, %v622
    %v625 = vadd.f32 %v623, %v49
    %v626 = vadd.f32 %v624, %v49
    %v627 = vmul.f32 %v625, %v514
    %v628 = vmul.f32 %v626, %v515
    %631 = vrot.lane.b32.xlu0 %v625, 64
    %v632 = vpop.permute.xlu0 %631
    %633 = vrot.lane.b32.xlu0 %v626, 64
    %v634 = vpop.permute.xlu0 %633
    %v637 = vmul.f32 %v625, %v632
    %v638 = vmul.f32 %v626, %v634
    %641 = vrot.lane.b32.xlu0 %v637, 32
    %v642 = vpop.permute.xlu0 %641
    %643 = vrot.lane.b32.xlu0 %v638, 32
    %v644 = vpop.permute.xlu0 %643
    %v647 = vadd.f32 %v627, %v642
    %v648 = vadd.f32 %v628, %v644
    %v649 = vtanh.pop %v647
    %v650 = vtanh.pop %v648
    %653 = vrot.lane.b32.xlu0 %v649, 64
    %v654 = vpop.permute.xlu0 %653
    %655 = vrot.lane.b32.xlu0 %v650, 64
    %v656 = vpop.permute.xlu0 %655
    %v659 = vmul.f32 %v625, %v654
    %v660 = vmul.f32 %v626, %v656
    %663 = vrot.lane.b32.xlu0 %v659, 32
    %v664 = vpop.permute.xlu0 %663
    %665 = vrot.lane.b32.xlu0 %v660, 32
    %v666 = vpop.permute.xlu0 %665
    %669 = vst.msk [vmem:[#allocation2 + $0x10] sm:$0xff] %vm394, %v664
    %670 = vst.msk [vmem:[#allocation2 + $0x18] sm:$0xff] %vm394, %v666
    %v671 = vsel %vm394, %v664, 0
    %v673 = vsel %vm394, %v666, 0
    %675 = vmatprep.subr.mxu0 0.0
    %676 = vmatpush1.msra.mxu0 %v66
    %677 = vmatprep.subr.mxu0 0.0
    %678 = vmatpush1.msra.mxu0 %v67
    %679 = vmatprep.subr.mxu0 0.0
    %680 = vmatpush1.msra.mxu0 %v68
    %681 = vmatprep.subr.mxu0 0.0
    %682 = vmatpush1.msra.mxu0 %v69
    %683 = vmatprep.subr.mxu0 0.0
    %684 = vmatpush1.msra.mxu0 0.0
    %685 = vmatprep.subr.mxu0 0.0
    %686 = vmatpush1.msra.mxu0 0.0
    %687 = vmatprep.subr.mxu0 0.0
    %688 = vmatpush1.msra.mxu0 0.0
    %689 = vmatprep.subr.mxu0 0.0
    %690 = vmatpush1.msra.mxu0 0.0
    %691 = vmatprep.subr.mxu0 0.0
    %692 = vmatpush1.msra.mxu0 0.0
    %693 = vmatprep.subr.mxu0 0.0
    %694 = vmatpush1.msra.mxu0 0.0
    %695 = vmatprep.subr.mxu0 0.0
    %696 = vmatpush1.msra.mxu0 0.0
    %697 = vmatprep.subr.mxu0 0.0
    %698 = vmatpush1.msra.mxu0 0.0
    %699 = vmatprep.subr.mxu0 0.0
    %700 = vmatpush1.msra.mxu0 0.0
    %701 = vmatprep.subr.mxu0 0.0
    %702 = vmatpush1.msra.mxu0 0.0
    %703 = vmatprep.subr.mxu0 0.0
    %704 = vmatpush1.msra.mxu0 0.0
    %705 = vmatprep.subr.mxu0 0.0
    %706 = vmatpush1.msra.mxu0 0.0
    %707 = vmatprep.subr.mxu0 0.0
    %708 = vmatpush1.msra.mxu0 0.0
    %709 = vmatprep.subr.mxu0 0.0
    %710 = vmatpush1.msra.mxu0 0.0
    %711 = vmatprep.subr.mxu0 0.0
    %712 = vmatpush1.msra.mxu0 0.0
    %713 = vmatprep.subr.mxu0 0.0
    %714 = vmatpush1.msra.mxu0 0.0
    %715 = vmatprep.subr.mxu0 0.0
    %716 = vmatpush1.msra.mxu0 0.0
    %717 = vmatprep.subr.mxu0 0.0
    %718 = vmatpush1.msra.mxu0 0.0
    %719 = vmatprep.subr.mxu0 0.0
    %720 = vmatpush1.msra.mxu0 0.0
    %721 = vmatprep.subr.mxu0 0.0
    %722 = vmatpush1.msra.mxu0 0.0
    %723 = vmatprep.subr.mxu0 0.0
    %724 = vmatpush1.msra.mxu0 0.0
    %725 = vmatprep.subr.mxu0 0.0
    %726 = vmatpush1.msra.mxu0 0.0
    %727 = vmatprep.subr.mxu0 0.0
    %728 = vmatpush1.msra.mxu0 0.0
    %729 = vmatprep.subr.mxu0 0.0
    %730 = vmatpush1.msra.mxu0 0.0
    %731 = vmatprep.subr.mxu0 0.0
    %732 = vmatpush1.msra.mxu0 0.0
    %733 = vmatprep.subr.mxu0 0.0
    %734 = vmatpush1.msra.mxu0 0.0
    %735 = vmatprep.subr.mxu0 0.0
    %736 = vmatpush1.msra.mxu0 0.0
    %737 = vmatprep.subr.mxu0 0.0
    %738 = vmatpush1.msra.mxu0 0.0
    %739 = vmatprep.mubr.f32.mxu0 0.0
    %740 = vmatmul.mubr.f32.gmra.mrb[0].mxu0 %v671
    %v741 = vpop.f32.mrb[0].mxu0
    %v742 = vadd.f32 0.0, %v741
    %v743 = vpop.f32.mrb[0].mxu0
    %744 = vmatprep.mubr.f32.mxu0 0.0
    %745 = vmatmul.mubr.f32.gmra.mrb[0].mxu0 %v673
    %v746 = vpop.f32.mrb[0].mxu0
    %v747 = vadd.f32 0.0, %v746
    %v748 = vpop.f32.mrb[0].mxu0
    %749 = vdwg.mxu0
    %v750 = vadd.f32 %v382, %v742
    %v751 = vadd.f32 %v383, %v747
    %v752 = vmul.f32 %v48, %v750
    %v753 = vmul.f32 %v48, %v751
    %v754 = vtanh.pop %v752
    %v755 = vtanh.pop %v753
    %v756 = vmul.f32 %v48, %v754
    %v757 = vmul.f32 %v48, %v755
    %v758 = vadd.f32 %v756, %v49
    %v759 = vadd.f32 %v757, %v49
    %v760 = vmul.f32 %v758, %v647
    %v761 = vmul.f32 %v759, %v648
    %764 = vrot.lane.b32.xlu0 %v758, 64
    %v765 = vpop.permute.xlu0 %764
    %766 = vrot.lane.b32.xlu0 %v759, 64
    %v767 = vpop.permute.xlu0 %766
    %v770 = vmul.f32 %v758, %v765
    %v771 = vmul.f32 %v759, %v767
    %774 = vrot.lane.b32.xlu0 %v770, 32
    %v775 = vpop.permute.xlu0 %774
    %776 = vrot.lane.b32.xlu0 %v771, 32
    %v777 = vpop.permute.xlu0 %776
    %v780 = vadd.f32 %v760, %v775
    %v781 = vadd.f32 %v761, %v777
    %v782 = vtanh.pop %v780
    %v783 = vtanh.pop %v781
    %786 = vrot.lane.b32.xlu0 %v782, 64
    %v787 = vpop.permute.xlu0 %786
    %788 = vrot.lane.b32.xlu0 %v783, 64
    %v789 = vpop.permute.xlu0 %788
    %v792 = vmul.f32 %v758, %v787
    %v793 = vmul.f32 %v759, %v789
    %796 = vrot.lane.b32.xlu0 %v792, 32
    %v797 = vpop.permute.xlu0 %796
    %798 = vrot.lane.b32.xlu0 %v793, 32
    %v799 = vpop.permute.xlu0 %798
    %802 = vst.msk [vmem:[#allocation2 + $0x20] sm:$0xff] %vm394, %v797
    %803 = vst.msk [vmem:[#allocation2 + $0x28] sm:$0xff] %vm394, %v799
    %v804 = vsel %vm394, %v797, 0
    %v806 = vsel %vm394, %v799, 0
    %808 = vmatprep.subr.mxu0 0.0
    %809 = vmatpush1.msra.mxu0 %v66
    %810 = vmatprep.subr.mxu0 0.0
    %811 = vmatpush1.msra.mxu0 %v67
    %812 = vmatprep.subr.mxu0 0.0
    %813 = vmatpush1.msra.mxu0 %v68
    %814 = vmatprep.subr.mxu0 0.0
    %815 = vmatpush1.msra.mxu0 %v69
    %816 = vmatprep.subr.mxu0 0.0
    %817 = vmatpush1.msra.mxu0 0.0
    %818 = vmatprep.subr.mxu0 0.0
    %819 = vmatpush1.msra.mxu0 0.0
    %820 = vmatprep.subr.mxu0 0.0
    %821 = vmatpush1.msra.mxu0 0.0
    %822 = vmatprep.subr.mxu0 0.0
    %823 = vmatpush1.msra.mxu0 0.0
    %824 = vmatprep.subr.mxu0 0.0
    %825 = vmatpush1.msra.mxu0 0.0
    %826 = vmatprep.subr.mxu0 0.0
    %827 = vmatpush1.msra.mxu0 0.0
    %828 = vmatprep.subr.mxu0 0.0
    %829 = vmatpush1.msra.mxu0 0.0
    %830 = vmatprep.subr.mxu0 0.0
    %831 = vmatpush1.msra.mxu0 0.0
    %832 = vmatprep.subr.mxu0 0.0
    %833 = vmatpush1.msra.mxu0 0.0
    %834 = vmatprep.subr.mxu0 0.0
    %835 = vmatpush1.msra.mxu0 0.0
    %836 = vmatprep.subr.mxu0 0.0
    %837 = vmatpush1.msra.mxu0 0.0
    %838 = vmatprep.subr.mxu0 0.0
    %839 = vmatpush1.msra.mxu0 0.0
    %840 = vmatprep.subr.mxu0 0.0
    %841 = vmatpush1.msra.mxu0 0.0
    %842 = vmatprep.subr.mxu0 0.0
    %843 = vmatpush1.msra.mxu0 0.0
    %844 = vmatprep.subr.mxu0 0.0
    %845 = vmatpush1.msra.mxu0 0.0
    %846 = vmatprep.subr.mxu0 0.0
    %847 = vmatpush1.msra.mxu0 0.0
    %848 = vmatprep.subr.mxu0 0.0
    %849 = vmatpush1.msra.mxu0 0.0
    %850 = vmatprep.subr.mxu0 0.0
    %851 = vmatpush1.msra.mxu0 0.0
    %852 = vmatprep.subr.mxu0 0.0
    %853 = vmatpush1.msra.mxu0 0.0
    %854 = vmatprep.subr.mxu0 0.0
    %855 = vmatpush1.msra.mxu0 0.0
    %856 = vmatprep.subr.mxu0 0.0
    %857 = vmatpush1.msra.mxu0 0.0
    %858 = vmatprep.subr.mxu0 0.0
    %859 = vmatpush1.msra.mxu0 0.0
    %860 = vmatprep.subr.mxu0 0.0
    %861 = vmatpush1.msra.mxu0 0.0
    %862 = vmatprep.subr.mxu0 0.0
    %863 = vmatpush1.msra.mxu0 0.0
    %864 = vmatprep.subr.mxu0 0.0
    %865 = vmatpush1.msra.mxu0 0.0
    %866 = vmatprep.subr.mxu0 0.0
    %867 = vmatpush1.msra.mxu0 0.0
    %868 = vmatprep.subr.mxu0 0.0
    %869 = vmatpush1.msra.mxu0 0.0
    %870 = vmatprep.subr.mxu0 0.0
    %871 = vmatpush1.msra.mxu0 0.0
    %872 = vmatprep.mubr.f32.mxu0 0.0
    %873 = vmatmul.mubr.f32.gmra.mrb[0].mxu0 %v804
    %v874 = vpop.f32.mrb[0].mxu0
    %v875 = vadd.f32 0.0, %v874
    %v876 = vpop.f32.mrb[0].mxu0
    %877 = vmatprep.mubr.f32.mxu0 0.0
    %878 = vmatmul.mubr.f32.gmra.mrb[0].mxu0 %v806
    %v879 = vpop.f32.mrb[0].mxu0
    %v880 = vadd.f32 0.0, %v879
    %v881 = vpop.f32.mrb[0].mxu0
    %882 = vdwg.mxu0
    %v883 = vadd.f32 %v384, %v875
    %v884 = vadd.f32 %v385, %v880
    %v885 = vmul.f32 %v48, %v883
    %v886 = vmul.f32 %v48, %v884
    %v887 = vtanh.pop %v885
    %v888 = vtanh.pop %v886
    %v889 = vmul.f32 %v48, %v887
    %v890 = vmul.f32 %v48, %v888
    %v891 = vadd.f32 %v889, %v49
    %v892 = vadd.f32 %v890, %v49
    %v893 = vmul.f32 %v891, %v780
    %v894 = vmul.f32 %v892, %v781
    %897 = vrot.lane.b32.xlu0 %v891, 64
    %v898 = vpop.permute.xlu0 %897
    %899 = vrot.lane.b32.xlu0 %v892, 64
    %v900 = vpop.permute.xlu0 %899
    %v903 = vmul.f32 %v891, %v898
    %v904 = vmul.f32 %v892, %v900
    %907 = vrot.lane.b32.xlu0 %v903, 32
    %v908 = vpop.permute.xlu0 %907
    %909 = vrot.lane.b32.xlu0 %v904, 32
    %v910 = vpop.permute.xlu0 %909
    %v913 = vadd.f32 %v893, %v908
    %v914 = vadd.f32 %v894, %v910
    %v915 = vtanh.pop %v913
    %v916 = vtanh.pop %v914
    %919 = vrot.lane.b32.xlu0 %v915, 64
    %v920 = vpop.permute.xlu0 %919
    %921 = vrot.lane.b32.xlu0 %v916, 64
    %v922 = vpop.permute.xlu0 %921
    %v925 = vmul.f32 %v891, %v920
    %v926 = vmul.f32 %v892, %v922
    %929 = vrot.lane.b32.xlu0 %v925, 32
    %v930 = vpop.permute.xlu0 %929
    %931 = vrot.lane.b32.xlu0 %v926, 32
    %v932 = vpop.permute.xlu0 %931
    %935 = vst.msk [vmem:[#allocation2 + $0x30] sm:$0xff] %vm394, %v930
    %936 = vst.msk [vmem:[#allocation2 + $0x38] sm:$0xff] %vm394, %v932
    %v937 = vsel %vm394, %v930, 0
    %v939 = vsel %vm394, %v932, 0
    %941 = vmatprep.subr.mxu0 0.0
    %942 = vmatpush1.msra.mxu0 %v66
    %943 = vmatprep.subr.mxu0 0.0
    %944 = vmatpush1.msra.mxu0 %v67
    %945 = vmatprep.subr.mxu0 0.0
    %946 = vmatpush1.msra.mxu0 %v68
    %947 = vmatprep.subr.mxu0 0.0
    %948 = vmatpush1.msra.mxu0 %v69
    %949 = vmatprep.subr.mxu0 0.0
    %950 = vmatpush1.msra.mxu0 0.0
    %951 = vmatprep.subr.mxu0 0.0
    %952 = vmatpush1.msra.mxu0 0.0
    %953 = vmatprep.subr.mxu0 0.0
    %954 = vmatpush1.msra.mxu0 0.0
    %955 = vmatprep.subr.mxu0 0.0
    %956 = vmatpush1.msra.mxu0 0.0
    %957 = vmatprep.subr.mxu0 0.0
    %958 = vmatpush1.msra.mxu0 0.0
    %959 = vmatprep.subr.mxu0 0.0
    %960 = vmatpush1.msra.mxu0 0.0
    %961 = vmatprep.subr.mxu0 0.0
    %962 = vmatpush1.msra.mxu0 0.0
    %963 = vmatprep.subr.mxu0 0.0
    %964 = vmatpush1.msra.mxu0 0.0
    %965 = vmatprep.subr.mxu0 0.0
    %966 = vmatpush1.msra.mxu0 0.0
    %967 = vmatprep.subr.mxu0 0.0
    %968 = vmatpush1.msra.mxu0 0.0
    %969 = vmatprep.subr.mxu0 0.0
    %970 = vmatpush1.msra.mxu0 0.0
    %971 = vmatprep.subr.mxu0 0.0
    %972 = vmatpush1.msra.mxu0 0.0
    %973 = vmatprep.subr.mxu0 0.0
    %974 = vmatpush1.msra.mxu0 0.0
    %975 = vmatprep.subr.mxu0 0.0
    %976 = vmatpush1.msra.mxu0 0.0
    %977 = vmatprep.subr.mxu0 0.0
    %978 = vmatpush1.msra.mxu0 0.0
    %979 = vmatprep.subr.mxu0 0.0
    %980 = vmatpush1.msra.mxu0 0.0
    %981 = vmatprep.subr.mxu0 0.0
    %982 = vmatpush1.msra.mxu0 0.0
    %983 = vmatprep.subr.mxu0 0.0
    %984 = vmatpush1.msra.mxu0 0.0
    %985 = vmatprep.subr.mxu0 0.0
    %986 = vmatpush1.msra.mxu0 0.0
    %987 = vmatprep.subr.mxu0 0.0
    %988 = vmatpush1.msra.mxu0 0.0
    %989 = vmatprep.subr.mxu0 0.0
    %990 = vmatpush1.msra.mxu0 0.0
    %991 = vmatprep.subr.mxu0 0.0
    %992 = vmatpush1.msra.mxu0 0.0
    %993 = vmatprep.subr.mxu0 0.0
    %994 = vmatpush1.msra.mxu0 0.0
    %995 = vmatprep.subr.mxu0 0.0
    %996 = vmatpush1.msra.mxu0 0.0
    %997 = vmatprep.subr.mxu0 0.0
    %998 = vmatpush1.msra.mxu0 0.0
    %999 = vmatprep.subr.mxu0 0.0
    %1000 = vmatpush1.msra.mxu0 0.0
    %1001 = vmatprep.subr.mxu0 0.0
    %1002 = vmatpush1.msra.mxu0 0.0
    %1003 = vmatprep.subr.mxu0 0.0
    %1004 = vmatpush1.msra.mxu0 0.0
    %1005 = vmatprep.mubr.f32.mxu0 0.0
    %1006 = vmatmul.mubr.f32.gmra.mrb[0].mxu0 %v937
    %v1007 = vpop.f32.mrb[0].mxu0
    %v1008 = vadd.f32 0.0, %v1007
    %v1009 = vpop.f32.mrb[0].mxu0
    %1010 = vmatprep.mubr.f32.mxu0 0.0
    %1011 = vmatmul.mubr.f32.gmra.mrb[0].mxu0 %v939
    %v1012 = vpop.f32.mrb[0].mxu0
    %v1013 = vadd.f32 0.0, %v1012
    %v1014 = vpop.f32.mrb[0].mxu0
    %1015 = vdwg.mxu0
    %v1016 = vadd.f32 %v386, %v1008
    %v1017 = vadd.f32 %v387, %v1013
    %v1018 = vmul.f32 %v48, %v1016
    %v1019 = vmul.f32 %v48, %v1017
    %v1020 = vtanh.pop %v1018
    %v1021 = vtanh.pop %v1019
    %v1022 = vmul.f32 %v48, %v1020
    %v1023 = vmul.f32 %v48, %v1021
    %v1024 = vadd.f32 %v1022, %v49
    %v1025 = vadd.f32 %v1023, %v49
    %v1026 = vmul.f32 %v1024, %v913
    %v1027 = vmul.f32 %v1025, %v914
    %1030 = vrot.lane.b32.xlu0 %v1024, 64
    %v1031 = vpop.permute.xlu0 %1030
    %1032 = vrot.lane.b32.xlu0 %v1025, 64
    %v1033 = vpop.permute.xlu0 %1032
    %v1036 = vmul.f32 %v1024, %v1031
    %v1037 = vmul.f32 %v1025, %v1033
    %1040 = vrot.lane.b32.xlu0 %v1036, 32
    %v1041 = vpop.permute.xlu0 %1040
    %1042 = vrot.lane.b32.xlu0 %v1037, 32
    %v1043 = vpop.permute.xlu0 %1042
    %v1046 = vadd.f32 %v1026, %v1041
    %v1047 = vadd.f32 %v1027, %v1043
    %v1048 = vtanh.pop %v1046
    %v1049 = vtanh.pop %v1047
    %1052 = vrot.lane.b32.xlu0 %v1048, 64
    %v1053 = vpop.permute.xlu0 %1052
    %1054 = vrot.lane.b32.xlu0 %v1049, 64
    %v1055 = vpop.permute.xlu0 %1054
    %v1058 = vmul.f32 %v1024, %v1053
    %v1059 = vmul.f32 %v1025, %v1055
    %1062 = vrot.lane.b32.xlu0 %v1058, 32
    %v1063 = vpop.permute.xlu0 %1062
    %1064 = vrot.lane.b32.xlu0 %v1059, 32
    %v1065 = vpop.permute.xlu0 %1064
    %1068 = vst.msk [vmem:[#allocation2 + $0x40] sm:$0xff] %vm394, %v1063
    %1069 = vst.msk [vmem:[#allocation2 + $0x48] sm:$0xff] %vm394, %v1065
    %v1070 = vsel %vm394, %v1063, 0
    %v1072 = vsel %vm394, %v1065, 0
    %1074 = vmatprep.subr.mxu0 0.0
    %1075 = vmatpush1.msra.mxu0 %v66
    %1076 = vmatprep.subr.mxu0 0.0
    %1077 = vmatpush1.msra.mxu0 %v67
    %1078 = vmatprep.subr.mxu0 0.0
    %1079 = vmatpush1.msra.mxu0 %v68
    %1080 = vmatprep.subr.mxu0 0.0
    %1081 = vmatpush1.msra.mxu0 %v69
    %1082 = vmatprep.subr.mxu0 0.0
    %1083 = vmatpush1.msra.mxu0 0.0
    %1084 = vmatprep.subr.mxu0 0.0
    %1085 = vmatpush1.msra.mxu0 0.0
    %1086 = vmatprep.subr.mxu0 0.0
    %1087 = vmatpush1.msra.mxu0 0.0
    %1088 = vmatprep.subr.mxu0 0.0
    %1089 = vmatpush1.msra.mxu0 0.0
    %1090 = vmatprep.subr.mxu0 0.0
    %1091 = vmatpush1.msra.mxu0 0.0
    %1092 = vmatprep.subr.mxu0 0.0
    %1093 = vmatpush1.msra.mxu0 0.0
    %1094 = vmatprep.subr.mxu0 0.0
    %1095 = vmatpush1.msra.mxu0 0.0
    %1096 = vmatprep.subr.mxu0 0.0
    %1097 = vmatpush1.msra.mxu0 0.0
    %1098 = vmatprep.subr.mxu0 0.0
    %1099 = vmatpush1.msra.mxu0 0.0
    %1100 = vmatprep.subr.mxu0 0.0
    %1101 = vmatpush1.msra.mxu0 0.0
    %1102 = vmatprep.subr.mxu0 0.0
    %1103 = vmatpush1.msra.mxu0 0.0
    %1104 = vmatprep.subr.mxu0 0.0
    %1105 = vmatpush1.msra.mxu0 0.0
    %1106 = vmatprep.subr.mxu0 0.0
    %1107 = vmatpush1.msra.mxu0 0.0
    %1108 = vmatprep.subr.mxu0 0.0
    %1109 = vmatpush1.msra.mxu0 0.0
    %1110 = vmatprep.subr.mxu0 0.0
    %1111 = vmatpush1.msra.mxu0 0.0
    %1112 = vmatprep.subr.mxu0 0.0
    %1113 = vmatpush1.msra.mxu0 0.0
    %1114 = vmatprep.subr.mxu0 0.0
    %1115 = vmatpush1.msra.mxu0 0.0
    %1116 = vmatprep.subr.mxu0 0.0
    %1117 = vmatpush1.msra.mxu0 0.0
    %1118 = vmatprep.subr.mxu0 0.0
    %1119 = vmatpush1.msra.mxu0 0.0
    %1120 = vmatprep.subr.mxu0 0.0
    %1121 = vmatpush1.msra.mxu0 0.0
    %1122 = vmatprep.subr.mxu0 0.0
    %1123 = vmatpush1.msra.mxu0 0.0
    %1124 = vmatprep.subr.mxu0 0.0
    %1125 = vmatpush1.msra.mxu0 0.0
    %1126 = vmatprep.subr.mxu0 0.0
    %1127 = vmatpush1.msra.mxu0 0.0
    %1128 = vmatprep.subr.mxu0 0.0
    %1129 = vmatpush1.msra.mxu0 0.0
    %1130 = vmatprep.subr.mxu0 0.0
    %1131 = vmatpush1.msra.mxu0 0.0
    %1132 = vmatprep.subr.mxu0 0.0
    %1133 = vmatpush1.msra.mxu0 0.0
    %1134 = vmatprep.subr.mxu0 0.0
    %1135 = vmatpush1.msra.mxu0 0.0
    %1136 = vmatprep.subr.mxu0 0.0
    %1137 = vmatpush1.msra.mxu0 0.0
    %1138 = vmatprep.mubr.f32.mxu0 0.0
    %1139 = vmatmul.mubr.f32.gmra.mrb[0].mxu0 %v1070
    %v1140 = vpop.f32.mrb[0].mxu0
    %v1141 = vadd.f32 0.0, %v1140
    %v1142 = vpop.f32.mrb[0].mxu0
    %1143 = vmatprep.mubr.f32.mxu0 0.0
    %1144 = vmatmul.mubr.f32.gmra.mrb[0].mxu0 %v1072
    %v1145 = vpop.f32.mrb[0].mxu0
    %v1146 = vadd.f32 0.0, %v1145
    %v1147 = vpop.f32.mrb[0].mxu0
    %1148 = vdwg.mxu0
    %v1149 = vadd.f32 %v388, %v1141
    %v1150 = vadd.f32 %v389, %v1146
    %v1151 = vmul.f32 %v48, %v1149
    %v1152 = vmul.f32 %v48, %v1150
    %v1153 = vtanh.pop %v1151
    %v1154 = vtanh.pop %v1152
    %v1155 = vmul.f32 %v48, %v1153
    %v1156 = vmul.f32 %v48, %v1154
    %v1157 = vadd.f32 %v1155, %v49
    %v1158 = vadd.f32 %v1156, %v49
    %v1159 = vmul.f32 %v1157, %v1046
    %v1160 = vmul.f32 %v1158, %v1047
    %1163 = vrot.lane.b32.xlu0 %v1157, 64
    %v1164 = vpop.permute.xlu0 %1163
    %1165 = vrot.lane.b32.xlu0 %v1158, 64
    %v1166 = vpop.permute.xlu0 %1165
    %v1169 = vmul.f32 %v1157, %v1164
    %v1170 = vmul.f32 %v1158, %v1166
    %1173 = vrot.lane.b32.xlu0 %v1169, 32
    %v1174 = vpop.permute.xlu0 %1173
    %1175 = vrot.lane.b32.xlu0 %v1170, 32
    %v1176 = vpop.permute.xlu0 %1175
    %v1179 = vadd.f32 %v1159, %v1174
    %v1180 = vadd.f32 %v1160, %v1176
    %v1181 = vtanh.pop %v1179
    %v1182 = vtanh.pop %v1180
    %1185 = vrot.lane.b32.xlu0 %v1181, 64
    %v1186 = vpop.permute.xlu0 %1185
    %1187 = vrot.lane.b32.xlu0 %v1182, 64
    %v1188 = vpop.permute.xlu0 %1187
    %v1191 = vmul.f32 %v1157, %v1186
    %v1192 = vmul.f32 %v1158, %v1188
    %1195 = vrot.lane.b32.xlu0 %v1191, 32
    %v1196 = vpop.permute.xlu0 %1195
    %1197 = vrot.lane.b32.xlu0 %v1192, 32
    %v1198 = vpop.permute.xlu0 %1197
    %1201 = vst.msk [vmem:[#allocation2 + $0x50] sm:$0xff] %vm394, %v1196
    %1202 = vst.msk [vmem:[#allocation2 + $0x58] sm:$0xff] %vm394, %v1198
    %v1203 = vsel %vm394, %v1196, 0
    %v1205 = vsel %vm394, %v1198, 0
    %1207 = vmatprep.subr.mxu0 0.0
    %1208 = vmatpush1.msra.mxu0 %v66
    %1209 = vmatprep.subr.mxu0 0.0
    %1210 = vmatpush1.msra.mxu0 %v67
    %1211 = vmatprep.subr.mxu0 0.0
    %1212 = vmatpush1.msra.mxu0 %v68
    %1213 = vmatprep.subr.mxu0 0.0
    %1214 = vmatpush1.msra.mxu0 %v69
    %1215 = vmatprep.subr.mxu0 0.0
    %1216 = vmatpush1.msra.mxu0 0.0
    %1217 = vmatprep.subr.mxu0 0.0
    %1218 = vmatpush1.msra.mxu0 0.0
    %1219 = vmatprep.subr.mxu0 0.0
    %1220 = vmatpush1.msra.mxu0 0.0
    %1221 = vmatprep.subr.mxu0 0.0
    %1222 = vmatpush1.msra.mxu0 0.0
    %1223 = vmatprep.subr.mxu0 0.0
    %1224 = vmatpush1.msra.mxu0 0.0
    %1225 = vmatprep.subr.mxu0 0.0
    %1226 = vmatpush1.msra.mxu0 0.0
    %1227 = vmatprep.subr.mxu0 0.0
    %1228 = vmatpush1.msra.mxu0 0.0
    %1229 = vmatprep.subr.mxu0 0.0
    %1230 = vmatpush1.msra.mxu0 0.0
    %1231 = vmatprep.subr.mxu0 0.0
    %1232 = vmatpush1.msra.mxu0 0.0
    %1233 = vmatprep.subr.mxu0 0.0
    %1234 = vmatpush1.msra.mxu0 0.0
    %1235 = vmatprep.subr.mxu0 0.0
    %1236 = vmatpush1.msra.mxu0 0.0
    %1237 = vmatprep.subr.mxu0 0.0
    %1238 = vmatpush1.msra.mxu0 0.0
    %1239 = vmatprep.subr.mxu0 0.0
    %1240 = vmatpush1.msra.mxu0 0.0
    %1241 = vmatprep.subr.mxu0 0.0
    %1242 = vmatpush1.msra.mxu0 0.0
    %1243 = vmatprep.subr.mxu0 0.0
    %1244 = vmatpush1.msra.mxu0 0.0
    %1245 = vmatprep.subr.mxu0 0.0
    %1246 = vmatpush1.msra.mxu0 0.0
    %1247 = vmatprep.subr.mxu0 0.0
    %1248 = vmatpush1.msra.mxu0 0.0
    %1249 = vmatprep.subr.mxu0 0.0
    %1250 = vmatpush1.msra.mxu0 0.0
    %1251 = vmatprep.subr.mxu0 0.0
    %1252 = vmatpush1.msra.mxu0 0.0
    %1253 = vmatprep.subr.mxu0 0.0
    %1254 = vmatpush1.msra.mxu0 0.0
    %1255 = vmatprep.subr.mxu0 0.0
    %1256 = vmatpush1.msra.mxu0 0.0
    %1257 = vmatprep.subr.mxu0 0.0
    %1258 = vmatpush1.msra.mxu0 0.0
    %1259 = vmatprep.subr.mxu0 0.0
    %1260 = vmatpush1.msra.mxu0 0.0
    %1261 = vmatprep.subr.mxu0 0.0
    %1262 = vmatpush1.msra.mxu0 0.0
    %1263 = vmatprep.subr.mxu0 0.0
    %1264 = vmatpush1.msra.mxu0 0.0
    %1265 = vmatprep.subr.mxu0 0.0
    %1266 = vmatpush1.msra.mxu0 0.0
    %1267 = vmatprep.subr.mxu0 0.0
    %1268 = vmatpush1.msra.mxu0 0.0
    %1269 = vmatprep.subr.mxu0 0.0
    %1270 = vmatpush1.msra.mxu0 0.0
    %1271 = vmatprep.mubr.f32.mxu0 0.0
    %1272 = vmatmul.mubr.f32.gmra.mrb[0].mxu0 %v1203
    %v1273 = vpop.f32.mrb[0].mxu0
    %v1274 = vadd.f32 0.0, %v1273
    %v1275 = vpop.f32.mrb[0].mxu0
    %1276 = vmatprep.mubr.f32.mxu0 0.0
    %1277 = vmatmul.mubr.f32.gmra.mrb[0].mxu0 %v1205
    %v1278 = vpop.f32.mrb[0].mxu0
    %v1279 = vadd.f32 0.0, %v1278
    %v1280 = vpop.f32.mrb[0].mxu0
    %1281 = vdwg.mxu0
    %v1282 = vadd.f32 %v390, %v1274
    %v1283 = vadd.f32 %v391, %v1279
    %v1284 = vmul.f32 %v48, %v1282
    %v1285 = vmul.f32 %v48, %v1283
    %v1286 = vtanh.pop %v1284
    %v1287 = vtanh.pop %v1285
    %v1288 = vmul.f32 %v48, %v1286
    %v1289 = vmul.f32 %v48, %v1287
    %v1290 = vadd.f32 %v1288, %v49
    %v1291 = vadd.f32 %v1289, %v49
    %v1292 = vmul.f32 %v1290, %v1179
    %v1293 = vmul.f32 %v1291, %v1180
    %1296 = vrot.lane.b32.xlu0 %v1290, 64
    %v1297 = vpop.permute.xlu0 %1296
    %1298 = vrot.lane.b32.xlu0 %v1291, 64
    %v1299 = vpop.permute.xlu0 %1298
    %v1302 = vmul.f32 %v1290, %v1297
    %v1303 = vmul.f32 %v1291, %v1299
    %1306 = vrot.lane.b32.xlu0 %v1302, 32
    %v1307 = vpop.permute.xlu0 %1306
    %1308 = vrot.lane.b32.xlu0 %v1303, 32
    %v1309 = vpop.permute.xlu0 %1308
    %v1312 = vadd.f32 %v1292, %v1307
    %v1313 = vadd.f32 %v1293, %v1309
    %v1314 = vtanh.pop %v1312
    %v1315 = vtanh.pop %v1313
    %1318 = vrot.lane.b32.xlu0 %v1314, 64
    %v1319 = vpop.permute.xlu0 %1318
    %1320 = vrot.lane.b32.xlu0 %v1315, 64
    %v1321 = vpop.permute.xlu0 %1320
    %v1324 = vmul.f32 %v1290, %v1319
    %v1325 = vmul.f32 %v1291, %v1321
    %1328 = vrot.lane.b32.xlu0 %v1324, 32
    %v1329 = vpop.permute.xlu0 %1328
    %1330 = vrot.lane.b32.xlu0 %v1325, 32
    %v1331 = vpop.permute.xlu0 %1330
    %1334 = vst.msk [vmem:[#allocation2 + $0x60] sm:$0xff] %vm394, %v1329
    %1335 = vst.msk [vmem:[#allocation2 + $0x68] sm:$0xff] %vm394, %v1331
    %v1336 = vsel %vm394, %v1329, 0
    %v1338 = vsel %vm394, %v1331, 0
    %1340 = vmatprep.subr.mxu0 0.0
    %1341 = vmatpush1.msra.mxu0 %v66
    %1342 = vmatprep.subr.mxu0 0.0
    %1343 = vmatpush1.msra.mxu0 %v67
    %1344 = vmatprep.subr.mxu0 0.0
    %1345 = vmatpush1.msra.mxu0 %v68
    %1346 = vmatprep.subr.mxu0 0.0
    %1347 = vmatpush1.msra.mxu0 %v69
    %1348 = vmatprep.subr.mxu0 0.0
    %1349 = vmatpush1.msra.mxu0 0.0
    %1350 = vmatprep.subr.mxu0 0.0
    %1351 = vmatpush1.msra.mxu0 0.0
    %1352 = vmatprep.subr.mxu0 0.0
    %1353 = vmatpush1.msra.mxu0 0.0
    %1354 = vmatprep.subr.mxu0 0.0
    %1355 = vmatpush1.msra.mxu0 0.0
    %1356 = vmatprep.subr.mxu0 0.0
    %1357 = vmatpush1.msra.mxu0 0.0
    %1358 = vmatprep.subr.mxu0 0.0
    %1359 = vmatpush1.msra.mxu0 0.0
    %1360 = vmatprep.subr.mxu0 0.0
    %1361 = vmatpush1.msra.mxu0 0.0
    %1362 = vmatprep.subr.mxu0 0.0
    %1363 = vmatpush1.msra.mxu0 0.0
    %1364 = vmatprep.subr.mxu0 0.0
    %1365 = vmatpush1.msra.mxu0 0.0
    %1366 = vmatprep.subr.mxu0 0.0
    %1367 = vmatpush1.msra.mxu0 0.0
    %1368 = vmatprep.subr.mxu0 0.0
    %1369 = vmatpush1.msra.mxu0 0.0
    %1370 = vmatprep.subr.mxu0 0.0
    %1371 = vmatpush1.msra.mxu0 0.0
    %1372 = vmatprep.subr.mxu0 0.0
    %1373 = vmatpush1.msra.mxu0 0.0
    %1374 = vmatprep.subr.mxu0 0.0
    %1375 = vmatpush1.msra.mxu0 0.0
    %1376 = vmatprep.subr.mxu0 0.0
    %1377 = vmatpush1.msra.mxu0 0.0
    %1378 = vmatprep.subr.mxu0 0.0
    %1379 = vmatpush1.msra.mxu0 0.0
    %1380 = vmatprep.subr.mxu0 0.0
    %1381 = vmatpush1.msra.mxu0 0.0
    %1382 = vmatprep.subr.mxu0 0.0
    %1383 = vmatpush1.msra.mxu0 0.0
    %1384 = vmatprep.subr.mxu0 0.0
    %1385 = vmatpush1.msra.mxu0 0.0
    %1386 = vmatprep.subr.mxu0 0.0
    %1387 = vmatpush1.msra.mxu0 0.0
    %1388 = vmatprep.subr.mxu0 0.0
    %1389 = vmatpush1.msra.mxu0 0.0
    %1390 = vmatprep.subr.mxu0 0.0
    %1391 = vmatpush1.msra.mxu0 0.0
    %1392 = vmatprep.subr.mxu0 0.0
    %1393 = vmatpush1.msra.mxu0 0.0
    %1394 = vmatprep.subr.mxu0 0.0
    %1395 = vmatpush1.msra.mxu0 0.0
    %1396 = vmatprep.subr.mxu0 0.0
    %1397 = vmatpush1.msra.mxu0 0.0
    %1398 = vmatprep.subr.mxu0 0.0
    %1399 = vmatpush1.msra.mxu0 0.0
    %1400 = vmatprep.subr.mxu0 0.0
    %1401 = vmatpush1.msra.mxu0 0.0
    %1402 = vmatprep.subr.mxu0 0.0
    %1403 = vmatpush1.msra.mxu0 0.0
    %1404 = vmatprep.mubr.f32.mxu0 0.0
    %1405 = vmatmul.mubr.f32.gmra.mrb[0].mxu0 %v1336
    %v1406 = vpop.f32.mrb[0].mxu0
    %v1407 = vadd.f32 0.0, %v1406
    %v1408 = vpop.f32.mrb[0].mxu0
    %1409 = vmatprep.mubr.f32.mxu0 0.0
    %1410 = vmatmul.mubr.f32.gmra.mrb[0].mxu0 %v1338
    %v1411 = vpop.f32.mrb[0].mxu0
    %v1412 = vadd.f32 0.0, %v1411
    %v1413 = vpop.f32.mrb[0].mxu0
    %1414 = vdwg.mxu0
    %v1415 = vadd.f32 %v392, %v1407
    %v1416 = vadd.f32 %v393, %v1412
    %v1417 = vmul.f32 %v48, %v1415
    %v1418 = vmul.f32 %v48, %v1416
    %v1419 = vtanh.pop %v1417
    %v1420 = vtanh.pop %v1418
    %v1421 = vmul.f32 %v48, %v1419
    %v1422 = vmul.f32 %v48, %v1420
    %v1423 = vadd.f32 %v1421, %v49
    %v1424 = vadd.f32 %v1422, %v49
    %v1425 = vmul.f32 %v1423, %v1312
    %v1426 = vmul.f32 %v1424, %v1313
    %1429 = vrot.lane.b32.xlu0 %v1423, 64
    %v1430 = vpop.permute.xlu0 %1429
    %1431 = vrot.lane.b32.xlu0 %v1424, 64
    %v1432 = vpop.permute.xlu0 %1431
    %v1435 = vmul.f32 %v1423, %v1430
    %v1436 = vmul.f32 %v1424, %v1432
    %1439 = vrot.lane.b32.xlu0 %v1435, 32
    %v1440 = vpop.permute.xlu0 %1439
    %1441 = vrot.lane.b32.xlu0 %v1436, 32
    %v1442 = vpop.permute.xlu0 %1441
    %v1445 = vadd.f32 %v1425, %v1440
    %v1446 = vadd.f32 %v1426, %v1442
    %v1447 = vtanh.pop %v1445
    %v1448 = vtanh.pop %v1446
    %1451 = vrot.lane.b32.xlu0 %v1447, 64
    %v1452 = vpop.permute.xlu0 %1451
    %1453 = vrot.lane.b32.xlu0 %v1448, 64
    %v1454 = vpop.permute.xlu0 %1453
    %v1457 = vmul.f32 %v1423, %v1452
    %v1458 = vmul.f32 %v1424, %v1454
    %1461 = vrot.lane.b32.xlu0 %v1457, 32
    %v1462 = vpop.permute.xlu0 %1461
    %1463 = vrot.lane.b32.xlu0 %v1458, 32
    %v1464 = vpop.permute.xlu0 %1463
    %1467 = vst.msk [vmem:[#allocation2 + $0x70] sm:$0xff] %vm394, %v1462
    %1468 = vst.msk [vmem:[#allocation2 + $0x78] sm:$0xff] %vm394, %v1464
    %v1469 = vld [vmem:[#allocation2] sm:$0xff]
    %v1470 = vld [vmem:[#allocation2 + $0x8] sm:$0xff]
    %v1471 = vld [vmem:[#allocation2 + $0x10] sm:$0xff]
    %v1472 = vld [vmem:[#allocation2 + $0x18] sm:$0xff]
    %v1473 = vld [vmem:[#allocation2 + $0x20] sm:$0xff]
    %v1474 = vld [vmem:[#allocation2 + $0x28] sm:$0xff]
    %v1475 = vld [vmem:[#allocation2 + $0x30] sm:$0xff]
    %v1476 = vld [vmem:[#allocation2 + $0x38] sm:$0xff]
    %v1477 = vld [vmem:[#allocation2 + $0x40] sm:$0xff]
    %v1478 = vld [vmem:[#allocation2 + $0x48] sm:$0xff]
    %v1479 = vld [vmem:[#allocation2 + $0x50] sm:$0xff]
    %v1480 = vld [vmem:[#allocation2 + $0x58] sm:$0xff]
    %v1481 = vld [vmem:[#allocation2 + $0x60] sm:$0xff]
    %v1482 = vld [vmem:[#allocation2 + $0x68] sm:$0xff]
    %v1483 = vld [vmem:[#allocation2 + $0x70] sm:$0xff]
    %v1484 = vld [vmem:[#allocation2 + $0x78] sm:$0xff]
    %vm1485 = vcmask 269312
    %v1487 = vsel %vm1485, %v70, 0
    %v1490 = vsel %vm1485, %v71, 0
    %v1493 = vsel %vm1485, %v72, 0
    %v1496 = vsel %vm1485, %v73, 0
    %v1499 = vsel %vm1485, %v74, 0
    %v1502 = vsel %vm1485, %v1469, 0
    %v1505 = vsel %vm1485, %v1470, 0
    %v1508 = vsel %vm1485, %v1471, 0
    %v1511 = vsel %vm1485, %v1472, 0
    %v1514 = vsel %vm1485, %v1473, 0
    %v1517 = vsel %vm1485, %v1474, 0
    %v1520 = vsel %vm1485, %v1475, 0
    %v1523 = vsel %vm1485, %v1476, 0
    %v1526 = vsel %vm1485, %v1477, 0
    %v1529 = vsel %vm1485, %v1478, 0
    %v1532 = vsel %vm1485, %v1479, 0
    %v1535 = vsel %vm1485, %v1480, 0
    %v1538 = vsel %vm1485, %v1481, 0
    %v1541 = vsel %vm1485, %v1482, 0
    %v1544 = vsel %vm1485, %v1483, 0
    %v1547 = vsel %vm1485, %v1484, 0
    %1549 = vmatprep.subr.mxu0 0.0
    %1550 = vmatpush1.xpose.msra.mxu0 %v1502
    %1551 = vmatprep.subr.mxu0 0.0
    %1552 = vmatpush1.xpose.msra.mxu0 %v1505
    %1553 = vmatprep.subr.mxu0 0.0
    %1554 = vmatpush1.xpose.msra.mxu0 %v1508
    %1555 = vmatprep.subr.mxu0 0.0
    %1556 = vmatpush1.xpose.msra.mxu0 %v1511
    %1557 = vmatprep.subr.mxu0 0.0
    %1558 = vmatpush1.xpose.msra.mxu0 %v1514
    %1559 = vmatprep.subr.mxu0 0.0
    %1560 = vmatpush1.xpose.msra.mxu0 %v1517
    %1561 = vmatprep.subr.mxu0 0.0
    %1562 = vmatpush1.xpose.msra.mxu0 %v1520
    %1563 = vmatprep.subr.mxu0 0.0
    %1564 = vmatpush1.xpose.msra.mxu0 %v1523
    %1565 = vmatprep.subr.mxu0 0.0
    %1566 = vmatpush1.xpose.msra.mxu0 %v1526
    %1567 = vmatprep.subr.mxu0 0.0
    %1568 = vmatpush1.xpose.msra.mxu0 %v1529
    %1569 = vmatprep.subr.mxu0 0.0
    %1570 = vmatpush1.xpose.msra.mxu0 %v1532
    %1571 = vmatprep.subr.mxu0 0.0
    %1572 = vmatpush1.xpose.msra.mxu0 %v1535
    %1573 = vmatprep.subr.mxu0 0.0
    %1574 = vmatpush1.xpose.msra.mxu0 %v1538
    %1575 = vmatprep.subr.mxu0 0.0
    %1576 = vmatpush1.xpose.msra.mxu0 %v1541
    %1577 = vmatprep.subr.mxu0 0.0
    %1578 = vmatpush1.xpose.msra.mxu0 %v1544
    %1579 = vmatprep.subr.mxu0 0.0
    %1580 = vmatpush1.xpose.msra.mxu0 %v1547
    %1581 = vmatprep.subr.mxu0 0.0
    %1582 = vmatpush1.xpose.msra.mxu0 0.0
    %1583 = vmatprep.subr.mxu0 0.0
    %1584 = vmatpush1.xpose.msra.mxu0 0.0
    %1585 = vmatprep.subr.mxu0 0.0
    %1586 = vmatpush1.xpose.msra.mxu0 0.0
    %1587 = vmatprep.subr.mxu0 0.0
    %1588 = vmatpush1.xpose.msra.mxu0 0.0
    %1589 = vmatprep.subr.mxu0 0.0
    %1590 = vmatpush1.xpose.msra.mxu0 0.0
    %1591 = vmatprep.subr.mxu0 0.0
    %1592 = vmatpush1.xpose.msra.mxu0 0.0
    %1593 = vmatprep.subr.mxu0 0.0
    %1594 = vmatpush1.xpose.msra.mxu0 0.0
    %1595 = vmatprep.subr.mxu0 0.0
    %1596 = vmatpush1.xpose.msra.mxu0 0.0
    %1597 = vmatprep.subr.mxu0 0.0
    %1598 = vmatpush1.xpose.msra.mxu0 0.0
    %1599 = vmatprep.subr.mxu0 0.0
    %1600 = vmatpush1.xpose.msra.mxu0 0.0
    %1601 = vmatprep.subr.mxu0 0.0
    %1602 = vmatpush1.xpose.msra.mxu0 0.0
    %1603 = vmatprep.subr.mxu0 0.0
    %1604 = vmatpush1.xpose.msra.mxu0 0.0
    %1605 = vmatprep.subr.mxu0 0.0
    %1606 = vmatpush1.xpose.msra.mxu0 0.0
    %1607 = vmatprep.subr.mxu0 0.0
    %1608 = vmatpush1.xpose.msra.mxu0 0.0
    %1609 = vmatprep.subr.mxu0 0.0
    %1610 = vmatpush1.xpose.msra.mxu0 0.0
    %1611 = vmatprep.subr.mxu0 0.0
    %1612 = vmatpush1.xpose.msra.mxu0 0.0
    %1613 = vmatprep.mubr.f32.mxu0 0.0
    %1614 = vmatmul.mubr.f32.gmra.mrb[0].mxu0 %v1487
    %v1615 = vpop.f32.mrb[0].mxu0
    %v1616 = vadd.f32 0.0, %v1615
    %v1617 = vpop.f32.mrb[0].mxu0
    %1618 = vmatprep.mubr.f32.mxu0 0.0
    %1619 = vmatmul.mubr.f32.gmra.mrb[0].mxu0 %v1490
    %v1620 = vpop.f32.mrb[0].mxu0
    %v1621 = vadd.f32 0.0, %v1620
    %v1622 = vpop.f32.mrb[0].mxu0
    %1623 = vmatprep.mubr.f32.mxu0 0.0
    %1624 = vmatmul.mubr.f32.gmra.mrb[0].mxu0 %v1493
    %v1625 = vpop.f32.mrb[0].mxu0
    %v1626 = vadd.f32 0.0, %v1625
    %v1627 = vpop.f32.mrb[0].mxu0
    %1628 = vmatprep.mubr.f32.mxu0 0.0
    %1629 = vmatmul.mubr.f32.gmra.mrb[0].mxu0 %v1496
    %v1630 = vpop.f32.mrb[0].mxu0
    %v1631 = vpop.f32.mrb[0].mxu0
    %1632 = vmatprep.mubr.f32.mxu0 0.0
    %1633 = vmatmul.mubr.f32.gmra.mrb[0].mxu0 %v1499
    %v1634 = vpop.f32.mrb[0].mxu0
    %v1635 = vpop.f32.mrb[0].mxu0
    %1636 = vdwg.mxu0
    %v1637 = vmul.f32 %v165, 2.0
    %v1638 = vmul.f32 %v1637, %v165
    %v1639 = vmul.f32 %v165, 16.0
    %v1640 = vmul.f32 %v165, 25.6
    %v1642 = vrot.slane %v1638, 1
    %v1645 = vrot.slane %v1639, 4
    %v1648 = vrot.slane %v1640, 6
    %v1650 = vsel %vm162, %v1642, %v1645
    %v1651 = vsel %vm156, %v1645, %v1648
    %v1652 = vmul.f32 %v1616, %v1650
    %v1653 = vmul.f32 %v1621, %v1651
    %v1654 = vmul.f32 %v1626, %v1648
    %v1655 = vadd.f32 %v1652, %v1653
    %v1656 = vsel %vm154, %v1654, 0.0
    %v1657 = vadd.f32 %v1655, %v1656
    %v1658 = vrot.slane %v1657, 4
    %v1659 = vadd.f32 %v1657, %v1658
    %v1660 = vrot.slane %v1659, 2
    %v1661 = vadd.f32 %v1659, %v1660
    %v1662 = vrot.slane %v1661, 1
    %v1663 = vadd.f32 %v1661, %v1662
    %v1664 = vmul.f32 %v1663, 0.0025
    %v1665 = vsub.f32 %v92, %v1664
    %1666 = vrot.lane.b32.xlu0 %v1665, 3
    %v1667 = vpop.permute.xlu0 %1666
    %1668 = vrot.lane.b32.xlu0 %v1665, 115
    %v1669 = vpop.permute.xlu0 %1668
    %v1670 = vsel %vm101, %v1667, %v1669
    %1671 = vrot.lane.b32.xlu0 %v1665, 2
    %v1672 = vpop.permute.xlu0 %1671
    %1673 = vrot.lane.b32.xlu0 %v1665, 114
    %v1674 = vpop.permute.xlu0 %1673
    %v1675 = vsel %vm107, %v1672, %v1674
    %1676 = vrot.lane.b32.xlu0 %v1665, 1
    %v1677 = vpop.permute.xlu0 %1676
    %1678 = vrot.lane.b32.xlu0 %v1665, 113
    %v1679 = vpop.permute.xlu0 %1678
    %v1680 = vsel %vm113, %v1677, %v1679
    %1681 = vrot.lane.b32.xlu0 %v1665, 127
    %v1682 = vpop.permute.xlu0 %1681
    %1683 = vrot.lane.b32.xlu0 %v1665, 15
    %v1684 = vpop.permute.xlu0 %1683
    %v1685 = vsel %vm119, %v1682, %v1684
    %1686 = vrot.lane.b32.xlu0 %v1665, 126
    %v1687 = vpop.permute.xlu0 %1686
    %1688 = vrot.lane.b32.xlu0 %v1665, 14
    %v1689 = vpop.permute.xlu0 %1688
    %v1690 = vsel %vm125, %v1687, %v1689
    %1691 = vrot.lane.b32.xlu0 %v1665, 125
    %v1692 = vpop.permute.xlu0 %1691
    %1693 = vrot.lane.b32.xlu0 %v1665, 13
    %v1694 = vpop.permute.xlu0 %1693
    %v1695 = vsel %vm131, %v1692, %v1694
    %v1697 = vrot.slane %v1675, 7
    %v1700 = vrot.slane %v1680, 6
    %v1703 = vlaneseq
    %v1704 = vshrl.u32 %v1703, 7
    %v1705 = vsub.s32 0, %v1704
    %v1706 = vrot.slane %v1665, %v1705
    %v1709 = vrot.slane %v1685, 4
    %v1712 = vrot.slane %v1690, 3
    %v1715 = vrot.slane %v1695, 2
    %v1717 = vsel %vm154, %v1670, %v1697
    %v1718 = vsel %vm156, %v1717, %v1700
    %v1719 = vsel %vm158, %v1718, %v1706
    %v1720 = vsel %vm160, %v1719, %v1709
    %v1721 = vsel %vm162, %v1720, %v1712
    %v1722 = vsel %vm164, %v1721, %v1715
    %v1723 = vsel %vm166, %v1722, 1.0
    %1724 = vmatprep.subr.mxu0 0.0
    %1725 = vmatpush1.msra.mxu0 %v1723
    %1726 = vmatprep.subr.mxu0 0.0
    %1727 = vmatpush1.msra.mxu0 0.0
    %1728 = vmatprep.subr.mxu0 0.0
    %1729 = vmatpush1.msra.mxu0 0.0
    %1730 = vmatprep.subr.mxu0 0.0
    %1731 = vmatpush1.msra.mxu0 0.0
    %1732 = vmatprep.subr.mxu0 0.0
    %1733 = vmatpush1.msra.mxu0 0.0
    %1734 = vmatprep.subr.mxu0 0.0
    %1735 = vmatpush1.msra.mxu0 0.0
    %1736 = vmatprep.subr.mxu0 0.0
    %1737 = vmatpush1.msra.mxu0 0.0
    %1738 = vmatprep.subr.mxu0 0.0
    %1739 = vmatpush1.msra.mxu0 0.0
    %1740 = vmatprep.subr.mxu0 0.0
    %1741 = vmatpush1.msra.mxu0 0.0
    %1742 = vmatprep.subr.mxu0 0.0
    %1743 = vmatpush1.msra.mxu0 0.0
    %1744 = vmatprep.subr.mxu0 0.0
    %1745 = vmatpush1.msra.mxu0 0.0
    %1746 = vmatprep.subr.mxu0 0.0
    %1747 = vmatpush1.msra.mxu0 0.0
    %1748 = vmatprep.subr.mxu0 0.0
    %1749 = vmatpush1.msra.mxu0 0.0
    %1750 = vmatprep.subr.mxu0 0.0
    %1751 = vmatpush1.msra.mxu0 0.0
    %1752 = vmatprep.subr.mxu0 0.0
    %1753 = vmatpush1.msra.mxu0 0.0
    %1754 = vmatprep.subr.mxu0 0.0
    %1755 = vmatpush1.msra.mxu0 0.0
    %1756 = vmatprep.subr.mxu0 0.0
    %1757 = vmatpush1.msra.mxu0 0.0
    %1758 = vmatprep.subr.mxu0 0.0
    %1759 = vmatpush1.msra.mxu0 0.0
    %1760 = vmatprep.subr.mxu0 0.0
    %1761 = vmatpush1.msra.mxu0 0.0
    %1762 = vmatprep.subr.mxu0 0.0
    %1763 = vmatpush1.msra.mxu0 0.0
    %1764 = vmatprep.subr.mxu0 0.0
    %1765 = vmatpush1.msra.mxu0 0.0
    %1766 = vmatprep.subr.mxu0 0.0
    %1767 = vmatpush1.msra.mxu0 0.0
    %1768 = vmatprep.subr.mxu0 0.0
    %1769 = vmatpush1.msra.mxu0 0.0
    %1770 = vmatprep.subr.mxu0 0.0
    %1771 = vmatpush1.msra.mxu0 0.0
    %1772 = vmatprep.subr.mxu0 0.0
    %1773 = vmatpush1.msra.mxu0 0.0
    %1774 = vmatprep.subr.mxu0 0.0
    %1775 = vmatpush1.msra.mxu0 0.0
    %1776 = vmatprep.subr.mxu0 0.0
    %1777 = vmatpush1.msra.mxu0 0.0
    %1778 = vmatprep.subr.mxu0 0.0
    %1779 = vmatpush1.msra.mxu0 0.0
    %1780 = vmatprep.subr.mxu0 0.0
    %1781 = vmatpush1.msra.mxu0 0.0
    %1782 = vmatprep.subr.mxu0 0.0
    %1783 = vmatpush1.msra.mxu0 0.0
    %1784 = vmatprep.subr.mxu0 0.0
    %1785 = vmatpush1.msra.mxu0 0.0
    %1786 = vmatprep.subr.mxu0 0.0
    %1787 = vmatpush1.msra.mxu0 0.0
    %1788 = vmatprep.mubr.f32.mxu0 0.0
    %1789 = vmatmul.mubr.f32.gmra.mrb[0].mxu0 %v170
    %v1790 = vpop.f32.mrb[0].mxu0
    %v1791 = vadd.f32 0.0, %v1790
    %v1792 = vpop.f32.mrb[0].mxu0
    %1793 = vmatprep.mubr.f32.mxu0 0.0
    %1794 = vmatmul.mubr.f32.gmra.mrb[0].mxu0 %v173
    %v1795 = vpop.f32.mrb[0].mxu0
    %v1796 = vadd.f32 0.0, %v1795
    %v1797 = vpop.f32.mrb[0].mxu0
    %1798 = vmatprep.mubr.f32.mxu0 0.0
    %1799 = vmatmul.mubr.f32.gmra.mrb[0].mxu0 %v176
    %v1800 = vpop.f32.mrb[0].mxu0
    %v1801 = vadd.f32 0.0, %v1800
    %v1802 = vpop.f32.mrb[0].mxu0
    %1803 = vmatprep.mubr.f32.mxu0 0.0
    %1804 = vmatmul.mubr.f32.gmra.mrb[0].mxu0 %v179
    %v1805 = vpop.f32.mrb[0].mxu0
    %v1806 = vadd.f32 0.0, %v1805
    %v1807 = vpop.f32.mrb[0].mxu0
    %1808 = vmatprep.mubr.f32.mxu0 0.0
    %1809 = vmatmul.mubr.f32.gmra.mrb[0].mxu0 %v182
    %v1810 = vpop.f32.mrb[0].mxu0
    %v1811 = vadd.f32 0.0, %v1810
    %v1812 = vpop.f32.mrb[0].mxu0
    %1813 = vmatprep.mubr.f32.mxu0 0.0
    %1814 = vmatmul.mubr.f32.gmra.mrb[0].mxu0 %v185
    %v1815 = vpop.f32.mrb[0].mxu0
    %v1816 = vadd.f32 0.0, %v1815
    %v1817 = vpop.f32.mrb[0].mxu0
    %1818 = vmatprep.mubr.f32.mxu0 0.0
    %1819 = vmatmul.mubr.f32.gmra.mrb[0].mxu0 %v188
    %v1820 = vpop.f32.mrb[0].mxu0
    %v1821 = vadd.f32 0.0, %v1820
    %v1822 = vpop.f32.mrb[0].mxu0
    %1823 = vmatprep.mubr.f32.mxu0 0.0
    %1824 = vmatmul.mubr.f32.gmra.mrb[0].mxu0 %v191
    %v1825 = vpop.f32.mrb[0].mxu0
    %v1826 = vadd.f32 0.0, %v1825
    %v1827 = vpop.f32.mrb[0].mxu0
    %1828 = vmatprep.mubr.f32.mxu0 0.0
    %1829 = vmatmul.mubr.f32.gmra.mrb[0].mxu0 %v194
    %v1830 = vpop.f32.mrb[0].mxu0
    %v1831 = vadd.f32 0.0, %v1830
    %v1832 = vpop.f32.mrb[0].mxu0
    %1833 = vmatprep.mubr.f32.mxu0 0.0
    %1834 = vmatmul.mubr.f32.gmra.mrb[0].mxu0 %v197
    %v1835 = vpop.f32.mrb[0].mxu0
    %v1836 = vadd.f32 0.0, %v1835
    %v1837 = vpop.f32.mrb[0].mxu0
    %1838 = vmatprep.mubr.f32.mxu0 0.0
    %1839 = vmatmul.mubr.f32.gmra.mrb[0].mxu0 %v200
    %v1840 = vpop.f32.mrb[0].mxu0
    %v1841 = vadd.f32 0.0, %v1840
    %v1842 = vpop.f32.mrb[0].mxu0
    %1843 = vmatprep.mubr.f32.mxu0 0.0
    %1844 = vmatmul.mubr.f32.gmra.mrb[0].mxu0 %v203
    %v1845 = vpop.f32.mrb[0].mxu0
    %v1846 = vadd.f32 0.0, %v1845
    %v1847 = vpop.f32.mrb[0].mxu0
    %1848 = vmatprep.mubr.f32.mxu0 0.0
    %1849 = vmatmul.mubr.f32.gmra.mrb[0].mxu0 %v206
    %v1850 = vpop.f32.mrb[0].mxu0
    %v1851 = vadd.f32 0.0, %v1850
    %v1852 = vpop.f32.mrb[0].mxu0
    %1853 = vmatprep.mubr.f32.mxu0 0.0
    %1854 = vmatmul.mubr.f32.gmra.mrb[0].mxu0 %v209
    %v1855 = vpop.f32.mrb[0].mxu0
    %v1856 = vadd.f32 0.0, %v1855
    %v1857 = vpop.f32.mrb[0].mxu0
    %1858 = vmatprep.mubr.f32.mxu0 0.0
    %1859 = vmatmul.mubr.f32.gmra.mrb[0].mxu0 %v212
    %v1860 = vpop.f32.mrb[0].mxu0
    %v1861 = vadd.f32 0.0, %v1860
    %v1862 = vpop.f32.mrb[0].mxu0
    %1863 = vmatprep.mubr.f32.mxu0 0.0
    %1864 = vmatmul.mubr.f32.gmra.mrb[0].mxu0 %v215
    %v1865 = vpop.f32.mrb[0].mxu0
    %v1866 = vadd.f32 0.0, %v1865
    %v1867 = vpop.f32.mrb[0].mxu0
    %1868 = vdwg.mxu0
    %1869 = vxpose.xlu0.b32.start [1/16] %v1791, 128
    %1870 = vxpose.xlu0.b32.cont [2/16] %v1796, 128
    %1871 = vxpose.xlu0.b32.cont [3/16] %v1801, 128
    %1872 = vxpose.xlu0.b32.cont [4/16] %v1806, 128
    %1873 = vxpose.xlu0.b32.cont [5/16] %v1811, 128
    %1874 = vxpose.xlu0.b32.cont [6/16] %v1816, 128
    %1875 = vxpose.xlu0.b32.cont [7/16] %v1821, 128
    %1876 = vxpose.xlu0.b32.cont [8/16] %v1826, 128
    %1877 = vxpose.xlu0.b32.cont [9/16] %v1831, 128
    %1878 = vxpose.xlu0.b32.cont [10/16] %v1836, 128
    %1879 = vxpose.xlu0.b32.cont [11/16] %v1841, 128
    %1880 = vxpose.xlu0.b32.cont [12/16] %v1846, 128
    %1881 = vxpose.xlu0.b32.cont [13/16] %v1851, 128
    %1882 = vxpose.xlu0.b32.cont [14/16] %v1856, 128
    %1883 = vxpose.xlu0.b32.cont [15/16] %v1861, 128
    %1884 = vxpose.xlu0.b32.end [16/16] %v1866, 128
    %v1885 = vpop.trf.xlu0
    %v1886 = vpop.trf.xlu0
    %v1887 = vpop.trf.xlu0
    %v1888 = vpop.trf.xlu0
    %v1889 = vpop.trf.xlu0
    %v1890 = vpop.trf.xlu0
    %v1891 = vpop.trf.xlu0
    %v1892 = vpop.trf.xlu0
    %v1893 = vpop.trf.xlu0
    %v1894 = vpop.trf.xlu0
    %v1895 = vpop.trf.xlu0
    %v1896 = vpop.trf.xlu0
    %v1897 = vpop.trf.xlu0
    %v1898 = vpop.trf.xlu0
    %v1899 = vpop.trf.xlu0
    %v1900 = vpop.trf.xlu0
    %v1901 = vsel %vm394, %v1462, 0
    %v1903 = vsel %vm394, %v1464, 0
    %1905 = vmatprep.subr.mxu0 0.0
    %1906 = vmatpush1.msra.mxu0 %v66
    %1907 = vmatprep.subr.mxu0 0.0
    %1908 = vmatpush1.msra.mxu0 %v67
    %1909 = vmatprep.subr.mxu0 0.0
    %1910 = vmatpush1.msra.mxu0 %v68
    %1911 = vmatprep.subr.mxu0 0.0
    %1912 = vmatpush1.msra.mxu0 %v69
    %1913 = vmatprep.subr.mxu0 0.0
    %1914 = vmatpush1.msra.mxu0 0.0
    %1915 = vmatprep.subr.mxu0 0.0
    %1916 = vmatpush1.msra.mxu0 0.0
    %1917 = vmatprep.subr.mxu0 0.0
    %1918 = vmatpush1.msra.mxu0 0.0
    %1919 = vmatprep.subr.mxu0 0.0
    %1920 = vmatpush1.msra.mxu0 0.0
    %1921 = vmatprep.subr.mxu0 0.0
    %1922 = vmatpush1.msra.mxu0 0.0
    %1923 = vmatprep.subr.mxu0 0.0
    %1924 = vmatpush1.msra.mxu0 0.0
    %1925 = vmatprep.subr.mxu0 0.0
    %1926 = vmatpush1.msra.mxu0 0.0
    %1927 = vmatprep.subr.mxu0 0.0
    %1928 = vmatpush1.msra.mxu0 0.0
    %1929 = vmatprep.subr.mxu0 0.0
    %1930 = vmatpush1.msra.mxu0 0.0
    %1931 = vmatprep.subr.mxu0 0.0
    %1932 = vmatpush1.msra.mxu0 0.0
    %1933 = vmatprep.subr.mxu0 0.0
    %1934 = vmatpush1.msra.mxu0 0.0
    %1935 = vmatprep.subr.mxu0 0.0
    %1936 = vmatpush1.msra.mxu0 0.0
    %1937 = vmatprep.subr.mxu0 0.0
    %1938 = vmatpush1.msra.mxu0 0.0
    %1939 = vmatprep.subr.mxu0 0.0
    %1940 = vmatpush1.msra.mxu0 0.0
    %1941 = vmatprep.subr.mxu0 0.0
    %1942 = vmatpush1.msra.mxu0 0.0
    %1943 = vmatprep.subr.mxu0 0.0
    %1944 = vmatpush1.msra.mxu0 0.0
    %1945 = vmatprep.subr.mxu0 0.0
    %1946 = vmatpush1.msra.mxu0 0.0
    %1947 = vmatprep.subr.mxu0 0.0
    %1948 = vmatpush1.msra.mxu0 0.0
    %1949 = vmatprep.subr.mxu0 0.0
    %1950 = vmatpush1.msra.mxu0 0.0
    %1951 = vmatprep.subr.mxu0 0.0
    %1952 = vmatpush1.msra.mxu0 0.0
    %1953 = vmatprep.subr.mxu0 0.0
    %1954 = vmatpush1.msra.mxu0 0.0
    %1955 = vmatprep.subr.mxu0 0.0
    %1956 = vmatpush1.msra.mxu0 0.0
    %1957 = vmatprep.subr.mxu0 0.0
    %1958 = vmatpush1.msra.mxu0 0.0
    %1959 = vmatprep.subr.mxu0 0.0
    %1960 = vmatpush1.msra.mxu0 0.0
    %1961 = vmatprep.subr.mxu0 0.0
    %1962 = vmatpush1.msra.mxu0 0.0
    %1963 = vmatprep.subr.mxu0 0.0
    %1964 = vmatpush1.msra.mxu0 0.0
    %1965 = vmatprep.subr.mxu0 0.0
    %1966 = vmatpush1.msra.mxu0 0.0
    %1967 = vmatprep.subr.mxu0 0.0
    %1968 = vmatpush1.msra.mxu0 0.0
    %1969 = vmatprep.mubr.f32.mxu0 0.0
    %1970 = vmatmul.mubr.f32.gmra.mrb[0].mxu0 %v1901
    %v1971 = vpop.f32.mrb[0].mxu0
    %v1972 = vadd.f32 0.0, %v1971
    %v1973 = vpop.f32.mrb[0].mxu0
    %1974 = vmatprep.mubr.f32.mxu0 0.0
    %1975 = vmatmul.mubr.f32.gmra.mrb[0].mxu0 %v1903
    %v1976 = vpop.f32.mrb[0].mxu0
    %v1977 = vadd.f32 0.0, %v1976
    %v1978 = vpop.f32.mrb[0].mxu0
    %1979 = vdwg.mxu0
    %v1980 = vadd.f32 %v1885, %v1972
    %v1981 = vadd.f32 %v1886, %v1977
    %v1982 = vmul.f32 %v48, %v1980
    %v1983 = vmul.f32 %v48, %v1981
    %v1984 = vtanh.pop %v1982
    %v1985 = vtanh.pop %v1983
    %v1986 = vmul.f32 %v48, %v1984
    %v1987 = vmul.f32 %v48, %v1985
    %v1988 = vadd.f32 %v1986, %v49
    %v1989 = vadd.f32 %v1987, %v49
    %v1990 = vmul.f32 %v1988, %v1445
    %v1991 = vmul.f32 %v1989, %v1446
    %1994 = vrot.lane.b32.xlu0 %v1988, 64
    %v1995 = vpop.permute.xlu0 %1994
    %1996 = vrot.lane.b32.xlu0 %v1989, 64
    %v1997 = vpop.permute.xlu0 %1996
    %v2000 = vmul.f32 %v1988, %v1995
    %v2001 = vmul.f32 %v1989, %v1997
    %2004 = vrot.lane.b32.xlu0 %v2000, 32
    %v2005 = vpop.permute.xlu0 %2004
    %2006 = vrot.lane.b32.xlu0 %v2001, 32
    %v2007 = vpop.permute.xlu0 %2006
    %v2010 = vadd.f32 %v1990, %v2005
    %v2011 = vadd.f32 %v1991, %v2007
    %v2012 = vtanh.pop %v2010
    %v2013 = vtanh.pop %v2011
    %2016 = vrot.lane.b32.xlu0 %v2012, 64
    %v2017 = vpop.permute.xlu0 %2016
    %2018 = vrot.lane.b32.xlu0 %v2013, 64
    %v2019 = vpop.permute.xlu0 %2018
    %v2022 = vmul.f32 %v1988, %v2017
    %v2023 = vmul.f32 %v1989, %v2019
    %2026 = vrot.lane.b32.xlu0 %v2022, 32
    %v2027 = vpop.permute.xlu0 %2026
    %2028 = vrot.lane.b32.xlu0 %v2023, 32
    %v2029 = vpop.permute.xlu0 %2028
    %2032 = vst.msk [vmem:[#allocation2] sm:$0xff] %vm394, %v2027
    %2033 = vst.msk [vmem:[#allocation2 + $0x8] sm:$0xff] %vm394, %v2029
    %v2034 = vsel %vm394, %v2027, 0
    %v2036 = vsel %vm394, %v2029, 0
    %2038 = vmatprep.subr.mxu0 0.0
    %2039 = vmatpush1.msra.mxu0 %v66
    %2040 = vmatprep.subr.mxu0 0.0
    %2041 = vmatpush1.msra.mxu0 %v67
    %2042 = vmatprep.subr.mxu0 0.0
    %2043 = vmatpush1.msra.mxu0 %v68
    %2044 = vmatprep.subr.mxu0 0.0
    %2045 = vmatpush1.msra.mxu0 %v69
    %2046 = vmatprep.subr.mxu0 0.0
    %2047 = vmatpush1.msra.mxu0 0.0
    %2048 = vmatprep.subr.mxu0 0.0
    %2049 = vmatpush1.msra.mxu0 0.0
    %2050 = vmatprep.subr.mxu0 0.0
    %2051 = vmatpush1.msra.mxu0 0.0
    %2052 = vmatprep.subr.mxu0 0.0
    %2053 = vmatpush1.msra.mxu0 0.0
    %2054 = vmatprep.subr.mxu0 0.0
    %2055 = vmatpush1.msra.mxu0 0.0
    %2056 = vmatprep.subr.mxu0 0.0
    %2057 = vmatpush1.msra.mxu0 0.0
    %2058 = vmatprep.subr.mxu0 0.0
    %2059 = vmatpush1.msra.mxu0 0.0
    %2060 = vmatprep.subr.mxu0 0.0
    %2061 = vmatpush1.msra.mxu0 0.0
    %2062 = vmatprep.subr.mxu0 0.0
    %2063 = vmatpush1.msra.mxu0 0.0
    %2064 = vmatprep.subr.mxu0 0.0
    %2065 = vmatpush1.msra.mxu0 0.0
    %2066 = vmatprep.subr.mxu0 0.0
    %2067 = vmatpush1.msra.mxu0 0.0
    %2068 = vmatprep.subr.mxu0 0.0
    %2069 = vmatpush1.msra.mxu0 0.0
    %2070 = vmatprep.subr.mxu0 0.0
    %2071 = vmatpush1.msra.mxu0 0.0
    %2072 = vmatprep.subr.mxu0 0.0
    %2073 = vmatpush1.msra.mxu0 0.0
    %2074 = vmatprep.subr.mxu0 0.0
    %2075 = vmatpush1.msra.mxu0 0.0
    %2076 = vmatprep.subr.mxu0 0.0
    %2077 = vmatpush1.msra.mxu0 0.0
    %2078 = vmatprep.subr.mxu0 0.0
    %2079 = vmatpush1.msra.mxu0 0.0
    %2080 = vmatprep.subr.mxu0 0.0
    %2081 = vmatpush1.msra.mxu0 0.0
    %2082 = vmatprep.subr.mxu0 0.0
    %2083 = vmatpush1.msra.mxu0 0.0
    %2084 = vmatprep.subr.mxu0 0.0
    %2085 = vmatpush1.msra.mxu0 0.0
    %2086 = vmatprep.subr.mxu0 0.0
    %2087 = vmatpush1.msra.mxu0 0.0
    %2088 = vmatprep.subr.mxu0 0.0
    %2089 = vmatpush1.msra.mxu0 0.0
    %2090 = vmatprep.subr.mxu0 0.0
    %2091 = vmatpush1.msra.mxu0 0.0
    %2092 = vmatprep.subr.mxu0 0.0
    %2093 = vmatpush1.msra.mxu0 0.0
    %2094 = vmatprep.subr.mxu0 0.0
    %2095 = vmatpush1.msra.mxu0 0.0
    %2096 = vmatprep.subr.mxu0 0.0
    %2097 = vmatpush1.msra.mxu0 0.0
    %2098 = vmatprep.subr.mxu0 0.0
    %2099 = vmatpush1.msra.mxu0 0.0
    %2100 = vmatprep.subr.mxu0 0.0
    %2101 = vmatpush1.msra.mxu0 0.0
    %2102 = vmatprep.mubr.f32.mxu0 0.0
    %2103 = vmatmul.mubr.f32.gmra.mrb[0].mxu0 %v2034
    %v2104 = vpop.f32.mrb[0].mxu0
    %v2105 = vadd.f32 0.0, %v2104
    %v2106 = vpop.f32.mrb[0].mxu0
    %2107 = vmatprep.mubr.f32.mxu0 0.0
    %2108 = vmatmul.mubr.f32.gmra.mrb[0].mxu0 %v2036
    %v2109 = vpop.f32.mrb[0].mxu0
    %v2110 = vadd.f32 0.0, %v2109
    %v2111 = vpop.f32.mrb[0].mxu0
    %2112 = vdwg.mxu0
    %v2113 = vadd.f32 %v1887, %v2105
    %v2114 = vadd.f32 %v1888, %v2110
    %v2115 = vmul.f32 %v48, %v2113
    %v2116 = vmul.f32 %v48, %v2114
    %v2117 = vtanh.pop %v2115
    %v2118 = vtanh.pop %v2116
    %v2119 = vmul.f32 %v48, %v2117
    %v2120 = vmul.f32 %v48, %v2118
    %v2121 = vadd.f32 %v2119, %v49
    %v2122 = vadd.f32 %v2120, %v49
    %v2123 = vmul.f32 %v2121, %v2010
    %v2124 = vmul.f32 %v2122, %v2011
    %2127 = vrot.lane.b32.xlu0 %v2121, 64
    %v2128 = vpop.permute.xlu0 %2127
    %2129 = vrot.lane.b32.xlu0 %v2122, 64
    %v2130 = vpop.permute.xlu0 %2129
    %v2133 = vmul.f32 %v2121, %v2128
    %v2134 = vmul.f32 %v2122, %v2130
    %2137 = vrot.lane.b32.xlu0 %v2133, 32
    %v2138 = vpop.permute.xlu0 %2137
    %2139 = vrot.lane.b32.xlu0 %v2134, 32
    %v2140 = vpop.permute.xlu0 %2139
    %v2143 = vadd.f32 %v2123, %v2138
    %v2144 = vadd.f32 %v2124, %v2140
    %v2145 = vtanh.pop %v2143
    %v2146 = vtanh.pop %v2144
    %2149 = vrot.lane.b32.xlu0 %v2145, 64
    %v2150 = vpop.permute.xlu0 %2149
    %2151 = vrot.lane.b32.xlu0 %v2146, 64
    %v2152 = vpop.permute.xlu0 %2151
    %v2155 = vmul.f32 %v2121, %v2150
    %v2156 = vmul.f32 %v2122, %v2152
    %2159 = vrot.lane.b32.xlu0 %v2155, 32
    %v2160 = vpop.permute.xlu0 %2159
    %2161 = vrot.lane.b32.xlu0 %v2156, 32
    %v2162 = vpop.permute.xlu0 %2161
    %2165 = vst.msk [vmem:[#allocation2 + $0x10] sm:$0xff] %vm394, %v2160
    %2166 = vst.msk [vmem:[#allocation2 + $0x18] sm:$0xff] %vm394, %v2162
    %v2167 = vsel %vm394, %v2160, 0
    %v2169 = vsel %vm394, %v2162, 0
    %2171 = vmatprep.subr.mxu0 0.0
    %2172 = vmatpush1.msra.mxu0 %v66
    %2173 = vmatprep.subr.mxu0 0.0
    %2174 = vmatpush1.msra.mxu0 %v67
    %2175 = vmatprep.subr.mxu0 0.0
    %2176 = vmatpush1.msra.mxu0 %v68
    %2177 = vmatprep.subr.mxu0 0.0
    %2178 = vmatpush1.msra.mxu0 %v69
    %2179 = vmatprep.subr.mxu0 0.0
    %2180 = vmatpush1.msra.mxu0 0.0
    %2181 = vmatprep.subr.mxu0 0.0
    %2182 = vmatpush1.msra.mxu0 0.0
    %2183 = vmatprep.subr.mxu0 0.0
    %2184 = vmatpush1.msra.mxu0 0.0
    %2185 = vmatprep.subr.mxu0 0.0
    %2186 = vmatpush1.msra.mxu0 0.0
    %2187 = vmatprep.subr.mxu0 0.0
    %2188 = vmatpush1.msra.mxu0 0.0
    %2189 = vmatprep.subr.mxu0 0.0
    %2190 = vmatpush1.msra.mxu0 0.0
    %2191 = vmatprep.subr.mxu0 0.0
    %2192 = vmatpush1.msra.mxu0 0.0
    %2193 = vmatprep.subr.mxu0 0.0
    %2194 = vmatpush1.msra.mxu0 0.0
    %2195 = vmatprep.subr.mxu0 0.0
    %2196 = vmatpush1.msra.mxu0 0.0
    %2197 = vmatprep.subr.mxu0 0.0
    %2198 = vmatpush1.msra.mxu0 0.0
    %2199 = vmatprep.subr.mxu0 0.0
    %2200 = vmatpush1.msra.mxu0 0.0
    %2201 = vmatprep.subr.mxu0 0.0
    %2202 = vmatpush1.msra.mxu0 0.0
    %2203 = vmatprep.subr.mxu0 0.0
    %2204 = vmatpush1.msra.mxu0 0.0
    %2205 = vmatprep.subr.mxu0 0.0
    %2206 = vmatpush1.msra.mxu0 0.0
    %2207 = vmatprep.subr.mxu0 0.0
    %2208 = vmatpush1.msra.mxu0 0.0
    %2209 = vmatprep.subr.mxu0 0.0
    %2210 = vmatpush1.msra.mxu0 0.0
    %2211 = vmatprep.subr.mxu0 0.0
    %2212 = vmatpush1.msra.mxu0 0.0
    %2213 = vmatprep.subr.mxu0 0.0
    %2214 = vmatpush1.msra.mxu0 0.0
    %2215 = vmatprep.subr.mxu0 0.0
    %2216 = vmatpush1.msra.mxu0 0.0
    %2217 = vmatprep.subr.mxu0 0.0
    %2218 = vmatpush1.msra.mxu0 0.0
    %2219 = vmatprep.subr.mxu0 0.0
    %2220 = vmatpush1.msra.mxu0 0.0
    %2221 = vmatprep.subr.mxu0 0.0
    %2222 = vmatpush1.msra.mxu0 0.0
    %2223 = vmatprep.subr.mxu0 0.0
    %2224 = vmatpush1.msra.mxu0 0.0
    %2225 = vmatprep.subr.mxu0 0.0
    %2226 = vmatpush1.msra.mxu0 0.0
    %2227 = vmatprep.subr.mxu0 0.0
    %2228 = vmatpush1.msra.mxu0 0.0
    %2229 = vmatprep.subr.mxu0 0.0
    %2230 = vmatpush1.msra.mxu0 0.0
    %2231 = vmatprep.subr.mxu0 0.0
    %2232 = vmatpush1.msra.mxu0 0.0
    %2233 = vmatprep.subr.mxu0 0.0
    %2234 = vmatpush1.msra.mxu0 0.0
    %2235 = vmatprep.mubr.f32.mxu0 0.0
    %2236 = vmatmul.mubr.f32.gmra.mrb[0].mxu0 %v2167
    %v2237 = vpop.f32.mrb[0].mxu0
    %v2238 = vadd.f32 0.0, %v2237
    %v2239 = vpop.f32.mrb[0].mxu0
    %2240 = vmatprep.mubr.f32.mxu0 0.0
    %2241 = vmatmul.mubr.f32.gmra.mrb[0].mxu0 %v2169
    %v2242 = vpop.f32.mrb[0].mxu0
    %v2243 = vadd.f32 0.0, %v2242
    %v2244 = vpop.f32.mrb[0].mxu0
    %2245 = vdwg.mxu0
    %v2246 = vadd.f32 %v1889, %v2238
    %v2247 = vadd.f32 %v1890, %v2243
    %v2248 = vmul.f32 %v48, %v2246
    %v2249 = vmul.f32 %v48, %v2247
    %v2250 = vtanh.pop %v2248
    %v2251 = vtanh.pop %v2249
    %v2252 = vmul.f32 %v48, %v2250
    %v2253 = vmul.f32 %v48, %v2251
    %v2254 = vadd.f32 %v2252, %v49
    %v2255 = vadd.f32 %v2253, %v49
    %v2256 = vmul.f32 %v2254, %v2143
    %v2257 = vmul.f32 %v2255, %v2144
    %2260 = vrot.lane.b32.xlu0 %v2254, 64
    %v2261 = vpop.permute.xlu0 %2260
    %2262 = vrot.lane.b32.xlu0 %v2255, 64
    %v2263 = vpop.permute.xlu0 %2262
    %v2266 = vmul.f32 %v2254, %v2261
    %v2267 = vmul.f32 %v2255, %v2263
    %2270 = vrot.lane.b32.xlu0 %v2266, 32
    %v2271 = vpop.permute.xlu0 %2270
    %2272 = vrot.lane.b32.xlu0 %v2267, 32
    %v2273 = vpop.permute.xlu0 %2272
    %v2276 = vadd.f32 %v2256, %v2271
    %v2277 = vadd.f32 %v2257, %v2273
    %v2278 = vtanh.pop %v2276
    %v2279 = vtanh.pop %v2277
    %2282 = vrot.lane.b32.xlu0 %v2278, 64
    %v2283 = vpop.permute.xlu0 %2282
    %2284 = vrot.lane.b32.xlu0 %v2279, 64
    %v2285 = vpop.permute.xlu0 %2284
    %v2288 = vmul.f32 %v2254, %v2283
    %v2289 = vmul.f32 %v2255, %v2285
    %2292 = vrot.lane.b32.xlu0 %v2288, 32
    %v2293 = vpop.permute.xlu0 %2292
    %2294 = vrot.lane.b32.xlu0 %v2289, 32
    %v2295 = vpop.permute.xlu0 %2294
    %2298 = vst.msk [vmem:[#allocation2 + $0x20] sm:$0xff] %vm394, %v2293
    %2299 = vst.msk [vmem:[#allocation2 + $0x28] sm:$0xff] %vm394, %v2295
    %v2300 = vsel %vm394, %v2293, 0
    %v2302 = vsel %vm394, %v2295, 0
    %2304 = vmatprep.subr.mxu0 0.0
    %2305 = vmatpush1.msra.mxu0 %v66
    %2306 = vmatprep.subr.mxu0 0.0
    %2307 = vmatpush1.msra.mxu0 %v67
    %2308 = vmatprep.subr.mxu0 0.0
    %2309 = vmatpush1.msra.mxu0 %v68
    %2310 = vmatprep.subr.mxu0 0.0
    %2311 = vmatpush1.msra.mxu0 %v69
    %2312 = vmatprep.subr.mxu0 0.0
    %2313 = vmatpush1.msra.mxu0 0.0
    %2314 = vmatprep.subr.mxu0 0.0
    %2315 = vmatpush1.msra.mxu0 0.0
    %2316 = vmatprep.subr.mxu0 0.0
    %2317 = vmatpush1.msra.mxu0 0.0
    %2318 = vmatprep.subr.mxu0 0.0
    %2319 = vmatpush1.msra.mxu0 0.0
    %2320 = vmatprep.subr.mxu0 0.0
    %2321 = vmatpush1.msra.mxu0 0.0
    %2322 = vmatprep.subr.mxu0 0.0
    %2323 = vmatpush1.msra.mxu0 0.0
    %2324 = vmatprep.subr.mxu0 0.0
    %2325 = vmatpush1.msra.mxu0 0.0
    %2326 = vmatprep.subr.mxu0 0.0
    %2327 = vmatpush1.msra.mxu0 0.0
    %2328 = vmatprep.subr.mxu0 0.0
    %2329 = vmatpush1.msra.mxu0 0.0
    %2330 = vmatprep.subr.mxu0 0.0
    %2331 = vmatpush1.msra.mxu0 0.0
    %2332 = vmatprep.subr.mxu0 0.0
    %2333 = vmatpush1.msra.mxu0 0.0
    %2334 = vmatprep.subr.mxu0 0.0
    %2335 = vmatpush1.msra.mxu0 0.0
    %2336 = vmatprep.subr.mxu0 0.0
    %2337 = vmatpush1.msra.mxu0 0.0
    %2338 = vmatprep.subr.mxu0 0.0
    %2339 = vmatpush1.msra.mxu0 0.0
    %2340 = vmatprep.subr.mxu0 0.0
    %2341 = vmatpush1.msra.mxu0 0.0
    %2342 = vmatprep.subr.mxu0 0.0
    %2343 = vmatpush1.msra.mxu0 0.0
    %2344 = vmatprep.subr.mxu0 0.0
    %2345 = vmatpush1.msra.mxu0 0.0
    %2346 = vmatprep.subr.mxu0 0.0
    %2347 = vmatpush1.msra.mxu0 0.0
    %2348 = vmatprep.subr.mxu0 0.0
    %2349 = vmatpush1.msra.mxu0 0.0
    %2350 = vmatprep.subr.mxu0 0.0
    %2351 = vmatpush1.msra.mxu0 0.0
    %2352 = vmatprep.subr.mxu0 0.0
    %2353 = vmatpush1.msra.mxu0 0.0
    %2354 = vmatprep.subr.mxu0 0.0
    %2355 = vmatpush1.msra.mxu0 0.0
    %2356 = vmatprep.subr.mxu0 0.0
    %2357 = vmatpush1.msra.mxu0 0.0
    %2358 = vmatprep.subr.mxu0 0.0
    %2359 = vmatpush1.msra.mxu0 0.0
    %2360 = vmatprep.subr.mxu0 0.0
    %2361 = vmatpush1.msra.mxu0 0.0
    %2362 = vmatprep.subr.mxu0 0.0
    %2363 = vmatpush1.msra.mxu0 0.0
    %2364 = vmatprep.subr.mxu0 0.0
    %2365 = vmatpush1.msra.mxu0 0.0
    %2366 = vmatprep.subr.mxu0 0.0
    %2367 = vmatpush1.msra.mxu0 0.0
    %2368 = vmatprep.mubr.f32.mxu0 0.0
    %2369 = vmatmul.mubr.f32.gmra.mrb[0].mxu0 %v2300
    %v2370 = vpop.f32.mrb[0].mxu0
    %v2371 = vadd.f32 0.0, %v2370
    %v2372 = vpop.f32.mrb[0].mxu0
    %2373 = vmatprep.mubr.f32.mxu0 0.0
    %2374 = vmatmul.mubr.f32.gmra.mrb[0].mxu0 %v2302
    %v2375 = vpop.f32.mrb[0].mxu0
    %v2376 = vadd.f32 0.0, %v2375
    %v2377 = vpop.f32.mrb[0].mxu0
    %2378 = vdwg.mxu0
    %v2379 = vadd.f32 %v1891, %v2371
    %v2380 = vadd.f32 %v1892, %v2376
    %v2381 = vmul.f32 %v48, %v2379
    %v2382 = vmul.f32 %v48, %v2380
    %v2383 = vtanh.pop %v2381
    %v2384 = vtanh.pop %v2382
    %v2385 = vmul.f32 %v48, %v2383
    %v2386 = vmul.f32 %v48, %v2384
    %v2387 = vadd.f32 %v2385, %v49
    %v2388 = vadd.f32 %v2386, %v49
    %v2389 = vmul.f32 %v2387, %v2276
    %v2390 = vmul.f32 %v2388, %v2277
    %2393 = vrot.lane.b32.xlu0 %v2387, 64
    %v2394 = vpop.permute.xlu0 %2393
    %2395 = vrot.lane.b32.xlu0 %v2388, 64
    %v2396 = vpop.permute.xlu0 %2395
    %v2399 = vmul.f32 %v2387, %v2394
    %v2400 = vmul.f32 %v2388, %v2396
    %2403 = vrot.lane.b32.xlu0 %v2399, 32
    %v2404 = vpop.permute.xlu0 %2403
    %2405 = vrot.lane.b32.xlu0 %v2400, 32
    %v2406 = vpop.permute.xlu0 %2405
    %v2409 = vadd.f32 %v2389, %v2404
    %v2410 = vadd.f32 %v2390, %v2406
    %v2411 = vtanh.pop %v2409
    %v2412 = vtanh.pop %v2410
    %2415 = vrot.lane.b32.xlu0 %v2411, 64
    %v2416 = vpop.permute.xlu0 %2415
    %2417 = vrot.lane.b32.xlu0 %v2412, 64
    %v2418 = vpop.permute.xlu0 %2417
    %v2421 = vmul.f32 %v2387, %v2416
    %v2422 = vmul.f32 %v2388, %v2418
    %2425 = vrot.lane.b32.xlu0 %v2421, 32
    %v2426 = vpop.permute.xlu0 %2425
    %2427 = vrot.lane.b32.xlu0 %v2422, 32
    %v2428 = vpop.permute.xlu0 %2427
    %2431 = vst.msk [vmem:[#allocation2 + $0x30] sm:$0xff] %vm394, %v2426
    %2432 = vst.msk [vmem:[#allocation2 + $0x38] sm:$0xff] %vm394, %v2428
    %v2433 = vsel %vm394, %v2426, 0
    %v2435 = vsel %vm394, %v2428, 0
    %2437 = vmatprep.subr.mxu0 0.0
    %2438 = vmatpush1.msra.mxu0 %v66
    %2439 = vmatprep.subr.mxu0 0.0
    %2440 = vmatpush1.msra.mxu0 %v67
    %2441 = vmatprep.subr.mxu0 0.0
    %2442 = vmatpush1.msra.mxu0 %v68
    %2443 = vmatprep.subr.mxu0 0.0
    %2444 = vmatpush1.msra.mxu0 %v69
    %2445 = vmatprep.subr.mxu0 0.0
    %2446 = vmatpush1.msra.mxu0 0.0
    %2447 = vmatprep.subr.mxu0 0.0
    %2448 = vmatpush1.msra.mxu0 0.0
    %2449 = vmatprep.subr.mxu0 0.0
    %2450 = vmatpush1.msra.mxu0 0.0
    %2451 = vmatprep.subr.mxu0 0.0
    %2452 = vmatpush1.msra.mxu0 0.0
    %2453 = vmatprep.subr.mxu0 0.0
    %2454 = vmatpush1.msra.mxu0 0.0
    %2455 = vmatprep.subr.mxu0 0.0
    %2456 = vmatpush1.msra.mxu0 0.0
    %2457 = vmatprep.subr.mxu0 0.0
    %2458 = vmatpush1.msra.mxu0 0.0
    %2459 = vmatprep.subr.mxu0 0.0
    %2460 = vmatpush1.msra.mxu0 0.0
    %2461 = vmatprep.subr.mxu0 0.0
    %2462 = vmatpush1.msra.mxu0 0.0
    %2463 = vmatprep.subr.mxu0 0.0
    %2464 = vmatpush1.msra.mxu0 0.0
    %2465 = vmatprep.subr.mxu0 0.0
    %2466 = vmatpush1.msra.mxu0 0.0
    %2467 = vmatprep.subr.mxu0 0.0
    %2468 = vmatpush1.msra.mxu0 0.0
    %2469 = vmatprep.subr.mxu0 0.0
    %2470 = vmatpush1.msra.mxu0 0.0
    %2471 = vmatprep.subr.mxu0 0.0
    %2472 = vmatpush1.msra.mxu0 0.0
    %2473 = vmatprep.subr.mxu0 0.0
    %2474 = vmatpush1.msra.mxu0 0.0
    %2475 = vmatprep.subr.mxu0 0.0
    %2476 = vmatpush1.msra.mxu0 0.0
    %2477 = vmatprep.subr.mxu0 0.0
    %2478 = vmatpush1.msra.mxu0 0.0
    %2479 = vmatprep.subr.mxu0 0.0
    %2480 = vmatpush1.msra.mxu0 0.0
    %2481 = vmatprep.subr.mxu0 0.0
    %2482 = vmatpush1.msra.mxu0 0.0
    %2483 = vmatprep.subr.mxu0 0.0
    %2484 = vmatpush1.msra.mxu0 0.0
    %2485 = vmatprep.subr.mxu0 0.0
    %2486 = vmatpush1.msra.mxu0 0.0
    %2487 = vmatprep.subr.mxu0 0.0
    %2488 = vmatpush1.msra.mxu0 0.0
    %2489 = vmatprep.subr.mxu0 0.0
    %2490 = vmatpush1.msra.mxu0 0.0
    %2491 = vmatprep.subr.mxu0 0.0
    %2492 = vmatpush1.msra.mxu0 0.0
    %2493 = vmatprep.subr.mxu0 0.0
    %2494 = vmatpush1.msra.mxu0 0.0
    %2495 = vmatprep.subr.mxu0 0.0
    %2496 = vmatpush1.msra.mxu0 0.0
    %2497 = vmatprep.subr.mxu0 0.0
    %2498 = vmatpush1.msra.mxu0 0.0
    %2499 = vmatprep.subr.mxu0 0.0
    %2500 = vmatpush1.msra.mxu0 0.0
    %2501 = vmatprep.mubr.f32.mxu0 0.0
    %2502 = vmatmul.mubr.f32.gmra.mrb[0].mxu0 %v2433
    %v2503 = vpop.f32.mrb[0].mxu0
    %v2504 = vadd.f32 0.0, %v2503
    %v2505 = vpop.f32.mrb[0].mxu0
    %2506 = vmatprep.mubr.f32.mxu0 0.0
    %2507 = vmatmul.mubr.f32.gmra.mrb[0].mxu0 %v2435
    %v2508 = vpop.f32.mrb[0].mxu0
    %v2509 = vadd.f32 0.0, %v2508
    %v2510 = vpop.f32.mrb[0].mxu0
    %2511 = vdwg.mxu0
    %v2512 = vadd.f32 %v1893, %v2504
    %v2513 = vadd.f32 %v1894, %v2509
    %v2514 = vmul.f32 %v48, %v2512
    %v2515 = vmul.f32 %v48, %v2513
    %v2516 = vtanh.pop %v2514
    %v2517 = vtanh.pop %v2515
    %v2518 = vmul.f32 %v48, %v2516
    %v2519 = vmul.f32 %v48, %v2517
    %v2520 = vadd.f32 %v2518, %v49
    %v2521 = vadd.f32 %v2519, %v49
    %v2522 = vmul.f32 %v2520, %v2409
    %v2523 = vmul.f32 %v2521, %v2410
    %2526 = vrot.lane.b32.xlu0 %v2520, 64
    %v2527 = vpop.permute.xlu0 %2526
    %2528 = vrot.lane.b32.xlu0 %v2521, 64
    %v2529 = vpop.permute.xlu0 %2528
    %v2532 = vmul.f32 %v2520, %v2527
    %v2533 = vmul.f32 %v2521, %v2529
    %2536 = vrot.lane.b32.xlu0 %v2532, 32
    %v2537 = vpop.permute.xlu0 %2536
    %2538 = vrot.lane.b32.xlu0 %v2533, 32
    %v2539 = vpop.permute.xlu0 %2538
    %v2542 = vadd.f32 %v2522, %v2537
    %v2543 = vadd.f32 %v2523, %v2539
    %v2544 = vtanh.pop %v2542
    %v2545 = vtanh.pop %v2543
    %2548 = vrot.lane.b32.xlu0 %v2544, 64
    %v2549 = vpop.permute.xlu0 %2548
    %2550 = vrot.lane.b32.xlu0 %v2545, 64
    %v2551 = vpop.permute.xlu0 %2550
    %v2554 = vmul.f32 %v2520, %v2549
    %v2555 = vmul.f32 %v2521, %v2551
    %2558 = vrot.lane.b32.xlu0 %v2554, 32
    %v2559 = vpop.permute.xlu0 %2558
    %2560 = vrot.lane.b32.xlu0 %v2555, 32
    %v2561 = vpop.permute.xlu0 %2560
    %2564 = vst.msk [vmem:[#allocation2 + $0x40] sm:$0xff] %vm394, %v2559
    %2565 = vst.msk [vmem:[#allocation2 + $0x48] sm:$0xff] %vm394, %v2561
    %v2566 = vsel %vm394, %v2559, 0
    %v2568 = vsel %vm394, %v2561, 0
    %2570 = vmatprep.subr.mxu0 0.0
    %2571 = vmatpush1.msra.mxu0 %v66
    %2572 = vmatprep.subr.mxu0 0.0
    %2573 = vmatpush1.msra.mxu0 %v67
    %2574 = vmatprep.subr.mxu0 0.0
    %2575 = vmatpush1.msra.mxu0 %v68
    %2576 = vmatprep.subr.mxu0 0.0
    %2577 = vmatpush1.msra.mxu0 %v69
    %2578 = vmatprep.subr.mxu0 0.0
    %2579 = vmatpush1.msra.mxu0 0.0
    %2580 = vmatprep.subr.mxu0 0.0
    %2581 = vmatpush1.msra.mxu0 0.0
    %2582 = vmatprep.subr.mxu0 0.0
    %2583 = vmatpush1.msra.mxu0 0.0
    %2584 = vmatprep.subr.mxu0 0.0
    %2585 = vmatpush1.msra.mxu0 0.0
    %2586 = vmatprep.subr.mxu0 0.0
    %2587 = vmatpush1.msra.mxu0 0.0
    %2588 = vmatprep.subr.mxu0 0.0
    %2589 = vmatpush1.msra.mxu0 0.0
    %2590 = vmatprep.subr.mxu0 0.0
    %2591 = vmatpush1.msra.mxu0 0.0
    %2592 = vmatprep.subr.mxu0 0.0
    %2593 = vmatpush1.msra.mxu0 0.0
    %2594 = vmatprep.subr.mxu0 0.0
    %2595 = vmatpush1.msra.mxu0 0.0
    %2596 = vmatprep.subr.mxu0 0.0
    %2597 = vmatpush1.msra.mxu0 0.0
    %2598 = vmatprep.subr.mxu0 0.0
    %2599 = vmatpush1.msra.mxu0 0.0
    %2600 = vmatprep.subr.mxu0 0.0
    %2601 = vmatpush1.msra.mxu0 0.0
    %2602 = vmatprep.subr.mxu0 0.0
    %2603 = vmatpush1.msra.mxu0 0.0
    %2604 = vmatprep.subr.mxu0 0.0
    %2605 = vmatpush1.msra.mxu0 0.0
    %2606 = vmatprep.subr.mxu0 0.0
    %2607 = vmatpush1.msra.mxu0 0.0
    %2608 = vmatprep.subr.mxu0 0.0
    %2609 = vmatpush1.msra.mxu0 0.0
    %2610 = vmatprep.subr.mxu0 0.0
    %2611 = vmatpush1.msra.mxu0 0.0
    %2612 = vmatprep.subr.mxu0 0.0
    %2613 = vmatpush1.msra.mxu0 0.0
    %2614 = vmatprep.subr.mxu0 0.0
    %2615 = vmatpush1.msra.mxu0 0.0
    %2616 = vmatprep.subr.mxu0 0.0
    %2617 = vmatpush1.msra.mxu0 0.0
    %2618 = vmatprep.subr.mxu0 0.0
    %2619 = vmatpush1.msra.mxu0 0.0
    %2620 = vmatprep.subr.mxu0 0.0
    %2621 = vmatpush1.msra.mxu0 0.0
    %2622 = vmatprep.subr.mxu0 0.0
    %2623 = vmatpush1.msra.mxu0 0.0
    %2624 = vmatprep.subr.mxu0 0.0
    %2625 = vmatpush1.msra.mxu0 0.0
    %2626 = vmatprep.subr.mxu0 0.0
    %2627 = vmatpush1.msra.mxu0 0.0
    %2628 = vmatprep.subr.mxu0 0.0
    %2629 = vmatpush1.msra.mxu0 0.0
    %2630 = vmatprep.subr.mxu0 0.0
    %2631 = vmatpush1.msra.mxu0 0.0
    %2632 = vmatprep.subr.mxu0 0.0
    %2633 = vmatpush1.msra.mxu0 0.0
    %2634 = vmatprep.mubr.f32.mxu0 0.0
    %2635 = vmatmul.mubr.f32.gmra.mrb[0].mxu0 %v2566
    %v2636 = vpop.f32.mrb[0].mxu0
    %v2637 = vadd.f32 0.0, %v2636
    %v2638 = vpop.f32.mrb[0].mxu0
    %2639 = vmatprep.mubr.f32.mxu0 0.0
    %2640 = vmatmul.mubr.f32.gmra.mrb[0].mxu0 %v2568
    %v2641 = vpop.f32.mrb[0].mxu0
    %v2642 = vadd.f32 0.0, %v2641
    %v2643 = vpop.f32.mrb[0].mxu0
    %2644 = vdwg.mxu0
    %v2645 = vadd.f32 %v1895, %v2637
    %v2646 = vadd.f32 %v1896, %v2642
    %v2647 = vmul.f32 %v48, %v2645
    %v2648 = vmul.f32 %v48, %v2646
    %v2649 = vtanh.pop %v2647
    %v2650 = vtanh.pop %v2648
    %v2651 = vmul.f32 %v48, %v2649
    %v2652 = vmul.f32 %v48, %v2650
    %v2653 = vadd.f32 %v2651, %v49
    %v2654 = vadd.f32 %v2652, %v49
    %v2655 = vmul.f32 %v2653, %v2542
    %v2656 = vmul.f32 %v2654, %v2543
    %2659 = vrot.lane.b32.xlu0 %v2653, 64
    %v2660 = vpop.permute.xlu0 %2659
    %2661 = vrot.lane.b32.xlu0 %v2654, 64
    %v2662 = vpop.permute.xlu0 %2661
    %v2665 = vmul.f32 %v2653, %v2660
    %v2666 = vmul.f32 %v2654, %v2662
    %2669 = vrot.lane.b32.xlu0 %v2665, 32
    %v2670 = vpop.permute.xlu0 %2669
    %2671 = vrot.lane.b32.xlu0 %v2666, 32
    %v2672 = vpop.permute.xlu0 %2671
    %v2675 = vadd.f32 %v2655, %v2670
    %v2676 = vadd.f32 %v2656, %v2672
    %v2677 = vtanh.pop %v2675
    %v2678 = vtanh.pop %v2676
    %2681 = vrot.lane.b32.xlu0 %v2677, 64
    %v2682 = vpop.permute.xlu0 %2681
    %2683 = vrot.lane.b32.xlu0 %v2678, 64
    %v2684 = vpop.permute.xlu0 %2683
    %v2687 = vmul.f32 %v2653, %v2682
    %v2688 = vmul.f32 %v2654, %v2684
    %2691 = vrot.lane.b32.xlu0 %v2687, 32
    %v2692 = vpop.permute.xlu0 %2691
    %2693 = vrot.lane.b32.xlu0 %v2688, 32
    %v2694 = vpop.permute.xlu0 %2693
    %2697 = vst.msk [vmem:[#allocation2 + $0x50] sm:$0xff] %vm394, %v2692
    %2698 = vst.msk [vmem:[#allocation2 + $0x58] sm:$0xff] %vm394, %v2694
    %v2699 = vsel %vm394, %v2692, 0
    %v2701 = vsel %vm394, %v2694, 0
    %2703 = vmatprep.subr.mxu0 0.0
    %2704 = vmatpush1.msra.mxu0 %v66
    %2705 = vmatprep.subr.mxu0 0.0
    %2706 = vmatpush1.msra.mxu0 %v67
    %2707 = vmatprep.subr.mxu0 0.0
    %2708 = vmatpush1.msra.mxu0 %v68
    %2709 = vmatprep.subr.mxu0 0.0
    %2710 = vmatpush1.msra.mxu0 %v69
    %2711 = vmatprep.subr.mxu0 0.0
    %2712 = vmatpush1.msra.mxu0 0.0
    %2713 = vmatprep.subr.mxu0 0.0
    %2714 = vmatpush1.msra.mxu0 0.0
    %2715 = vmatprep.subr.mxu0 0.0
    %2716 = vmatpush1.msra.mxu0 0.0
    %2717 = vmatprep.subr.mxu0 0.0
    %2718 = vmatpush1.msra.mxu0 0.0
    %2719 = vmatprep.subr.mxu0 0.0
    %2720 = vmatpush1.msra.mxu0 0.0
    %2721 = vmatprep.subr.mxu0 0.0
    %2722 = vmatpush1.msra.mxu0 0.0
    %2723 = vmatprep.subr.mxu0 0.0
    %2724 = vmatpush1.msra.mxu0 0.0
    %2725 = vmatprep.subr.mxu0 0.0
    %2726 = vmatpush1.msra.mxu0 0.0
    %2727 = vmatprep.subr.mxu0 0.0
    %2728 = vmatpush1.msra.mxu0 0.0
    %2729 = vmatprep.subr.mxu0 0.0
    %2730 = vmatpush1.msra.mxu0 0.0
    %2731 = vmatprep.subr.mxu0 0.0
    %2732 = vmatpush1.msra.mxu0 0.0
    %2733 = vmatprep.subr.mxu0 0.0
    %2734 = vmatpush1.msra.mxu0 0.0
    %2735 = vmatprep.subr.mxu0 0.0
    %2736 = vmatpush1.msra.mxu0 0.0
    %2737 = vmatprep.subr.mxu0 0.0
    %2738 = vmatpush1.msra.mxu0 0.0
    %2739 = vmatprep.subr.mxu0 0.0
    %2740 = vmatpush1.msra.mxu0 0.0
    %2741 = vmatprep.subr.mxu0 0.0
    %2742 = vmatpush1.msra.mxu0 0.0
    %2743 = vmatprep.subr.mxu0 0.0
    %2744 = vmatpush1.msra.mxu0 0.0
    %2745 = vmatprep.subr.mxu0 0.0
    %2746 = vmatpush1.msra.mxu0 0.0
    %2747 = vmatprep.subr.mxu0 0.0
    %2748 = vmatpush1.msra.mxu0 0.0
    %2749 = vmatprep.subr.mxu0 0.0
    %2750 = vmatpush1.msra.mxu0 0.0
    %2751 = vmatprep.subr.mxu0 0.0
    %2752 = vmatpush1.msra.mxu0 0.0
    %2753 = vmatprep.subr.mxu0 0.0
    %2754 = vmatpush1.msra.mxu0 0.0
    %2755 = vmatprep.subr.mxu0 0.0
    %2756 = vmatpush1.msra.mxu0 0.0
    %2757 = vmatprep.subr.mxu0 0.0
    %2758 = vmatpush1.msra.mxu0 0.0
    %2759 = vmatprep.subr.mxu0 0.0
    %2760 = vmatpush1.msra.mxu0 0.0
    %2761 = vmatprep.subr.mxu0 0.0
    %2762 = vmatpush1.msra.mxu0 0.0
    %2763 = vmatprep.subr.mxu0 0.0
    %2764 = vmatpush1.msra.mxu0 0.0
    %2765 = vmatprep.subr.mxu0 0.0
    %2766 = vmatpush1.msra.mxu0 0.0
    %2767 = vmatprep.mubr.f32.mxu0 0.0
    %2768 = vmatmul.mubr.f32.gmra.mrb[0].mxu0 %v2699
    %v2769 = vpop.f32.mrb[0].mxu0
    %v2770 = vadd.f32 0.0, %v2769
    %v2771 = vpop.f32.mrb[0].mxu0
    %2772 = vmatprep.mubr.f32.mxu0 0.0
    %2773 = vmatmul.mubr.f32.gmra.mrb[0].mxu0 %v2701
    %v2774 = vpop.f32.mrb[0].mxu0
    %v2775 = vadd.f32 0.0, %v2774
    %v2776 = vpop.f32.mrb[0].mxu0
    %2777 = vdwg.mxu0
    %v2778 = vadd.f32 %v1897, %v2770
    %v2779 = vadd.f32 %v1898, %v2775
    %v2780 = vmul.f32 %v48, %v2778
    %v2781 = vmul.f32 %v48, %v2779
    %v2782 = vtanh.pop %v2780
    %v2783 = vtanh.pop %v2781
    %v2784 = vmul.f32 %v48, %v2782
    %v2785 = vmul.f32 %v48, %v2783
    %v2786 = vadd.f32 %v2784, %v49
    %v2787 = vadd.f32 %v2785, %v49
    %v2788 = vmul.f32 %v2786, %v2675
    %v2789 = vmul.f32 %v2787, %v2676
    %2792 = vrot.lane.b32.xlu0 %v2786, 64
    %v2793 = vpop.permute.xlu0 %2792
    %2794 = vrot.lane.b32.xlu0 %v2787, 64
    %v2795 = vpop.permute.xlu0 %2794
    %v2798 = vmul.f32 %v2786, %v2793
    %v2799 = vmul.f32 %v2787, %v2795
    %2802 = vrot.lane.b32.xlu0 %v2798, 32
    %v2803 = vpop.permute.xlu0 %2802
    %2804 = vrot.lane.b32.xlu0 %v2799, 32
    %v2805 = vpop.permute.xlu0 %2804
    %v2808 = vadd.f32 %v2788, %v2803
    %v2809 = vadd.f32 %v2789, %v2805
    %v2810 = vtanh.pop %v2808
    %v2811 = vtanh.pop %v2809
    %2814 = vrot.lane.b32.xlu0 %v2810, 64
    %v2815 = vpop.permute.xlu0 %2814
    %2816 = vrot.lane.b32.xlu0 %v2811, 64
    %v2817 = vpop.permute.xlu0 %2816
    %v2820 = vmul.f32 %v2786, %v2815
    %v2821 = vmul.f32 %v2787, %v2817
    %2824 = vrot.lane.b32.xlu0 %v2820, 32
    %v2825 = vpop.permute.xlu0 %2824
    %2826 = vrot.lane.b32.xlu0 %v2821, 32
    %v2827 = vpop.permute.xlu0 %2826
    %2830 = vst.msk [vmem:[#allocation2 + $0x60] sm:$0xff] %vm394, %v2825
    %2831 = vst.msk [vmem:[#allocation2 + $0x68] sm:$0xff] %vm394, %v2827
    %v2832 = vsel %vm394, %v2825, 0
    %v2834 = vsel %vm394, %v2827, 0
    %2836 = vmatprep.subr.mxu0 0.0
    %2837 = vmatpush1.msra.mxu0 %v66
    %2838 = vmatprep.subr.mxu0 0.0
    %2839 = vmatpush1.msra.mxu0 %v67
    %2840 = vmatprep.subr.mxu0 0.0
    %2841 = vmatpush1.msra.mxu0 %v68
    %2842 = vmatprep.subr.mxu0 0.0
    %2843 = vmatpush1.msra.mxu0 %v69
    %2844 = vmatprep.subr.mxu0 0.0
    %2845 = vmatpush1.msra.mxu0 0.0
    %2846 = vmatprep.subr.mxu0 0.0
    %2847 = vmatpush1.msra.mxu0 0.0
    %2848 = vmatprep.subr.mxu0 0.0
    %2849 = vmatpush1.msra.mxu0 0.0
    %2850 = vmatprep.subr.mxu0 0.0
    %2851 = vmatpush1.msra.mxu0 0.0
    %2852 = vmatprep.subr.mxu0 0.0
    %2853 = vmatpush1.msra.mxu0 0.0
    %2854 = vmatprep.subr.mxu0 0.0
    %2855 = vmatpush1.msra.mxu0 0.0
    %2856 = vmatprep.subr.mxu0 0.0
    %2857 = vmatpush1.msra.mxu0 0.0
    %2858 = vmatprep.subr.mxu0 0.0
    %2859 = vmatpush1.msra.mxu0 0.0
    %2860 = vmatprep.subr.mxu0 0.0
    %2861 = vmatpush1.msra.mxu0 0.0
    %2862 = vmatprep.subr.mxu0 0.0
    %2863 = vmatpush1.msra.mxu0 0.0
    %2864 = vmatprep.subr.mxu0 0.0
    %2865 = vmatpush1.msra.mxu0 0.0
    %2866 = vmatprep.subr.mxu0 0.0
    %2867 = vmatpush1.msra.mxu0 0.0
    %2868 = vmatprep.subr.mxu0 0.0
    %2869 = vmatpush1.msra.mxu0 0.0
    %2870 = vmatprep.subr.mxu0 0.0
    %2871 = vmatpush1.msra.mxu0 0.0
    %2872 = vmatprep.subr.mxu0 0.0
    %2873 = vmatpush1.msra.mxu0 0.0
    %2874 = vmatprep.subr.mxu0 0.0
    %2875 = vmatpush1.msra.mxu0 0.0
    %2876 = vmatprep.subr.mxu0 0.0
    %2877 = vmatpush1.msra.mxu0 0.0
    %2878 = vmatprep.subr.mxu0 0.0
    %2879 = vmatpush1.msra.mxu0 0.0
    %2880 = vmatprep.subr.mxu0 0.0
    %2881 = vmatpush1.msra.mxu0 0.0
    %2882 = vmatprep.subr.mxu0 0.0
    %2883 = vmatpush1.msra.mxu0 0.0
    %2884 = vmatprep.subr.mxu0 0.0
    %2885 = vmatpush1.msra.mxu0 0.0
    %2886 = vmatprep.subr.mxu0 0.0
    %2887 = vmatpush1.msra.mxu0 0.0
    %2888 = vmatprep.subr.mxu0 0.0
    %2889 = vmatpush1.msra.mxu0 0.0
    %2890 = vmatprep.subr.mxu0 0.0
    %2891 = vmatpush1.msra.mxu0 0.0
    %2892 = vmatprep.subr.mxu0 0.0
    %2893 = vmatpush1.msra.mxu0 0.0
    %2894 = vmatprep.subr.mxu0 0.0
    %2895 = vmatpush1.msra.mxu0 0.0
    %2896 = vmatprep.subr.mxu0 0.0
    %2897 = vmatpush1.msra.mxu0 0.0
    %2898 = vmatprep.subr.mxu0 0.0
    %2899 = vmatpush1.msra.mxu0 0.0
    %2900 = vmatprep.mubr.f32.mxu0 0.0
    %2901 = vmatmul.mubr.f32.gmra.mrb[0].mxu0 %v2832
    %v2902 = vpop.f32.mrb[0].mxu0
    %v2903 = vadd.f32 0.0, %v2902
    %v2904 = vpop.f32.mrb[0].mxu0
    %2905 = vmatprep.mubr.f32.mxu0 0.0
    %2906 = vmatmul.mubr.f32.gmra.mrb[0].mxu0 %v2834
    %v2907 = vpop.f32.mrb[0].mxu0
    %v2908 = vadd.f32 0.0, %v2907
    %v2909 = vpop.f32.mrb[0].mxu0
    %2910 = vdwg.mxu0
    %v2911 = vadd.f32 %v1899, %v2903
    %v2912 = vadd.f32 %v1900, %v2908
    %v2913 = vmul.f32 %v48, %v2911
    %v2914 = vmul.f32 %v48, %v2912
    %v2915 = vtanh.pop %v2913
    %v2916 = vtanh.pop %v2914
    %v2917 = vmul.f32 %v48, %v2915
    %v2918 = vmul.f32 %v48, %v2916
    %v2919 = vadd.f32 %v2917, %v49
    %v2920 = vadd.f32 %v2918, %v49
    %v2921 = vmul.f32 %v2919, %v2808
    %v2922 = vmul.f32 %v2920, %v2809
    %2925 = vrot.lane.b32.xlu0 %v2919, 64
    %v2926 = vpop.permute.xlu0 %2925
    %2927 = vrot.lane.b32.xlu0 %v2920, 64
    %v2928 = vpop.permute.xlu0 %2927
    %v2931 = vmul.f32 %v2919, %v2926
    %v2932 = vmul.f32 %v2920, %v2928
    %2935 = vrot.lane.b32.xlu0 %v2931, 32
    %v2936 = vpop.permute.xlu0 %2935
    %2937 = vrot.lane.b32.xlu0 %v2932, 32
    %v2938 = vpop.permute.xlu0 %2937
    %v2941 = vadd.f32 %v2921, %v2936
    %v2942 = vadd.f32 %v2922, %v2938
    %v2943 = vtanh.pop %v2941
    %v2944 = vtanh.pop %v2942
    %2947 = vrot.lane.b32.xlu0 %v2943, 64
    %v2948 = vpop.permute.xlu0 %2947
    %2949 = vrot.lane.b32.xlu0 %v2944, 64
    %v2950 = vpop.permute.xlu0 %2949
    %v2953 = vmul.f32 %v2919, %v2948
    %v2954 = vmul.f32 %v2920, %v2950
    %2957 = vrot.lane.b32.xlu0 %v2953, 32
    %v2958 = vpop.permute.xlu0 %2957
    %2959 = vrot.lane.b32.xlu0 %v2954, 32
    %v2960 = vpop.permute.xlu0 %2959
    %2963 = vst.msk [vmem:[#allocation2 + $0x70] sm:$0xff] %vm394, %v2958
    %2964 = vst.msk [vmem:[#allocation2 + $0x78] sm:$0xff] %vm394, %v2960
    %v2965 = vld [vmem:[#allocation2] sm:$0xff]
    %v2966 = vld [vmem:[#allocation2 + $0x8] sm:$0xff]
    %v2967 = vld [vmem:[#allocation2 + $0x10] sm:$0xff]
    %v2968 = vld [vmem:[#allocation2 + $0x18] sm:$0xff]
    %v2969 = vld [vmem:[#allocation2 + $0x20] sm:$0xff]
    %v2970 = vld [vmem:[#allocation2 + $0x28] sm:$0xff]
    %v2971 = vld [vmem:[#allocation2 + $0x30] sm:$0xff]
    %v2972 = vld [vmem:[#allocation2 + $0x38] sm:$0xff]
    %v2973 = vld [vmem:[#allocation2 + $0x40] sm:$0xff]
    %v2974 = vld [vmem:[#allocation2 + $0x48] sm:$0xff]
    %v2975 = vld [vmem:[#allocation2 + $0x50] sm:$0xff]
    %v2976 = vld [vmem:[#allocation2 + $0x58] sm:$0xff]
    %v2977 = vld [vmem:[#allocation2 + $0x60] sm:$0xff]
    %v2978 = vld [vmem:[#allocation2 + $0x68] sm:$0xff]
    %v2979 = vld [vmem:[#allocation2 + $0x70] sm:$0xff]
    %v2980 = vld [vmem:[#allocation2 + $0x78] sm:$0xff]
    %v2982 = vsel %vm1485, %v2965, 0
    %v2985 = vsel %vm1485, %v2966, 0
    %v2988 = vsel %vm1485, %v2967, 0
    %v2991 = vsel %vm1485, %v2968, 0
    %v2994 = vsel %vm1485, %v2969, 0
    %v2997 = vsel %vm1485, %v2970, 0
    %v3000 = vsel %vm1485, %v2971, 0
    %v3003 = vsel %vm1485, %v2972, 0
    %v3006 = vsel %vm1485, %v2973, 0
    %v3009 = vsel %vm1485, %v2974, 0
    %v3012 = vsel %vm1485, %v2975, 0
    %v3015 = vsel %vm1485, %v2976, 0
    %v3018 = vsel %vm1485, %v2977, 0
    %v3021 = vsel %vm1485, %v2978, 0
    %v3024 = vsel %vm1485, %v2979, 0
    %v3027 = vsel %vm1485, %v2980, 0
    %3029 = vmatprep.subr.mxu0 0.0
    %3030 = vmatpush1.xpose.msra.mxu0 %v2982
    %3031 = vmatprep.subr.mxu0 0.0
    %3032 = vmatpush1.xpose.msra.mxu0 %v2985
    %3033 = vmatprep.subr.mxu0 0.0
    %3034 = vmatpush1.xpose.msra.mxu0 %v2988
    %3035 = vmatprep.subr.mxu0 0.0
    %3036 = vmatpush1.xpose.msra.mxu0 %v2991
    %3037 = vmatprep.subr.mxu0 0.0
    %3038 = vmatpush1.xpose.msra.mxu0 %v2994
    %3039 = vmatprep.subr.mxu0 0.0
    %3040 = vmatpush1.xpose.msra.mxu0 %v2997
    %3041 = vmatprep.subr.mxu0 0.0
    %3042 = vmatpush1.xpose.msra.mxu0 %v3000
    %3043 = vmatprep.subr.mxu0 0.0
    %3044 = vmatpush1.xpose.msra.mxu0 %v3003
    %3045 = vmatprep.subr.mxu0 0.0
    %3046 = vmatpush1.xpose.msra.mxu0 %v3006
    %3047 = vmatprep.subr.mxu0 0.0
    %3048 = vmatpush1.xpose.msra.mxu0 %v3009
    %3049 = vmatprep.subr.mxu0 0.0
    %3050 = vmatpush1.xpose.msra.mxu0 %v3012
    %3051 = vmatprep.subr.mxu0 0.0
    %3052 = vmatpush1.xpose.msra.mxu0 %v3015
    %3053 = vmatprep.subr.mxu0 0.0
    %3054 = vmatpush1.xpose.msra.mxu0 %v3018
    %3055 = vmatprep.subr.mxu0 0.0
    %3056 = vmatpush1.xpose.msra.mxu0 %v3021
    %3057 = vmatprep.subr.mxu0 0.0
    %3058 = vmatpush1.xpose.msra.mxu0 %v3024
    %3059 = vmatprep.subr.mxu0 0.0
    %3060 = vmatpush1.xpose.msra.mxu0 %v3027
    %3061 = vmatprep.subr.mxu0 0.0
    %3062 = vmatpush1.xpose.msra.mxu0 0.0
    %3063 = vmatprep.subr.mxu0 0.0
    %3064 = vmatpush1.xpose.msra.mxu0 0.0
    %3065 = vmatprep.subr.mxu0 0.0
    %3066 = vmatpush1.xpose.msra.mxu0 0.0
    %3067 = vmatprep.subr.mxu0 0.0
    %3068 = vmatpush1.xpose.msra.mxu0 0.0
    %3069 = vmatprep.subr.mxu0 0.0
    %3070 = vmatpush1.xpose.msra.mxu0 0.0
    %3071 = vmatprep.subr.mxu0 0.0
    %3072 = vmatpush1.xpose.msra.mxu0 0.0
    %3073 = vmatprep.subr.mxu0 0.0
    %3074 = vmatpush1.xpose.msra.mxu0 0.0
    %3075 = vmatprep.subr.mxu0 0.0
    %3076 = vmatpush1.xpose.msra.mxu0 0.0
    %3077 = vmatprep.subr.mxu0 0.0
    %3078 = vmatpush1.xpose.msra.mxu0 0.0
    %3079 = vmatprep.subr.mxu0 0.0
    %3080 = vmatpush1.xpose.msra.mxu0 0.0
    %3081 = vmatprep.subr.mxu0 0.0
    %3082 = vmatpush1.xpose.msra.mxu0 0.0
    %3083 = vmatprep.subr.mxu0 0.0
    %3084 = vmatpush1.xpose.msra.mxu0 0.0
    %3085 = vmatprep.subr.mxu0 0.0
    %3086 = vmatpush1.xpose.msra.mxu0 0.0
    %3087 = vmatprep.subr.mxu0 0.0
    %3088 = vmatpush1.xpose.msra.mxu0 0.0
    %3089 = vmatprep.subr.mxu0 0.0
    %3090 = vmatpush1.xpose.msra.mxu0 0.0
    %3091 = vmatprep.subr.mxu0 0.0
    %3092 = vmatpush1.xpose.msra.mxu0 0.0
    %3093 = vmatprep.mubr.f32.mxu0 0.0
    %3094 = vmatmul.mubr.f32.gmra.mrb[0].mxu0 %v1487
    %v3095 = vpop.f32.mrb[0].mxu0
    %v3096 = vadd.f32 0.0, %v3095
    %v3097 = vpop.f32.mrb[0].mxu0
    %3098 = vmatprep.mubr.f32.mxu0 0.0
    %3099 = vmatmul.mubr.f32.gmra.mrb[0].mxu0 %v1490
    %v3100 = vpop.f32.mrb[0].mxu0
    %v3101 = vadd.f32 0.0, %v3100
    %v3102 = vpop.f32.mrb[0].mxu0
    %3103 = vmatprep.mubr.f32.mxu0 0.0
    %3104 = vmatmul.mubr.f32.gmra.mrb[0].mxu0 %v1493
    %v3105 = vpop.f32.mrb[0].mxu0
    %v3106 = vadd.f32 0.0, %v3105
    %v3107 = vpop.f32.mrb[0].mxu0
    %3108 = vmatprep.mubr.f32.mxu0 0.0
    %3109 = vmatmul.mubr.f32.gmra.mrb[0].mxu0 %v1496
    %v3110 = vpop.f32.mrb[0].mxu0
    %v3111 = vpop.f32.mrb[0].mxu0
    %3112 = vmatprep.mubr.f32.mxu0 0.0
    %3113 = vmatmul.mubr.f32.gmra.mrb[0].mxu0 %v1499
    %v3114 = vpop.f32.mrb[0].mxu0
    %v3115 = vpop.f32.mrb[0].mxu0
    %3116 = vdwg.mxu0
    %v3117 = vmul.f32 %v1722, 2.0
    %v3118 = vmul.f32 %v3117, %v1722
    %v3119 = vmul.f32 %v1722, 16.0
    %v3120 = vmul.f32 %v1722, 25.6
    %v3122 = vrot.slane %v3118, 1
    %v3125 = vrot.slane %v3119, 4
    %v3128 = vrot.slane %v3120, 6
    %v3130 = vsel %vm162, %v3122, %v3125
    %v3131 = vsel %vm156, %v3125, %v3128
    %v3132 = vmul.f32 %v3096, %v3130
    %v3133 = vmul.f32 %v3101, %v3131
    %v3134 = vmul.f32 %v3106, %v3128
    %v3135 = vadd.f32 %v3132, %v3133
    %v3136 = vsel %vm154, %v3134, 0.0
    %v3137 = vadd.f32 %v3135, %v3136
    %v3138 = vrot.slane %v3137, 4
    %v3139 = vadd.f32 %v3137, %v3138
    %v3140 = vrot.slane %v3139, 2
    %v3141 = vadd.f32 %v3139, %v3140
    %v3142 = vrot.slane %v3141, 1
    %v3143 = vadd.f32 %v3141, %v3142
    %v3144 = vmul.f32 %v92, 0.75
    %v3145 = vmul.f32 %v1665, 0.25
    %v3146 = vadd.f32 %v3144, %v3145
    %v3147 = vmul.f32 %v3143, 0.000625
    %v3148 = vsub.f32 %v3146, %v3147
    %3149 = vrot.lane.b32.xlu0 %v3148, 3
    %v3150 = vpop.permute.xlu0 %3149
    %3151 = vrot.lane.b32.xlu0 %v3148, 115
    %v3152 = vpop.permute.xlu0 %3151
    %v3153 = vsel %vm101, %v3150, %v3152
    %3154 = vrot.lane.b32.xlu0 %v3148, 2
    %v3155 = vpop.permute.xlu0 %3154
    %3156 = vrot.lane.b32.xlu0 %v3148, 114
    %v3157 = vpop.permute.xlu0 %3156
    %v3158 = vsel %vm107, %v3155, %v3157
    %3159 = vrot.lane.b32.xlu0 %v3148, 1
    %v3160 = vpop.permute.xlu0 %3159
    %3161 = vrot.lane.b32.xlu0 %v3148, 113
    %v3162 = vpop.permute.xlu0 %3161
    %v3163 = vsel %vm113, %v3160, %v3162
    %3164 = vrot.lane.b32.xlu0 %v3148, 127
    %v3165 = vpop.permute.xlu0 %3164
    %3166 = vrot.lane.b32.xlu0 %v3148, 15
    %v3167 = vpop.permute.xlu0 %3166
    %v3168 = vsel %vm119, %v3165, %v3167
    %3169 = vrot.lane.b32.xlu0 %v3148, 126
    %v3170 = vpop.permute.xlu0 %3169
    %3171 = vrot.lane.b32.xlu0 %v3148, 14
    %v3172 = vpop.permute.xlu0 %3171
    %v3173 = vsel %vm125, %v3170, %v3172
    %3174 = vrot.lane.b32.xlu0 %v3148, 125
    %v3175 = vpop.permute.xlu0 %3174
    %3176 = vrot.lane.b32.xlu0 %v3148, 13
    %v3177 = vpop.permute.xlu0 %3176
    %v3178 = vsel %vm131, %v3175, %v3177
    %v3180 = vrot.slane %v3158, 7
    %v3183 = vrot.slane %v3163, 6
    %v3186 = vlaneseq
    %v3187 = vshrl.u32 %v3186, 7
    %v3188 = vsub.s32 0, %v3187
    %v3189 = vrot.slane %v3148, %v3188
    %v3192 = vrot.slane %v3168, 4
    %v3195 = vrot.slane %v3173, 3
    %v3198 = vrot.slane %v3178, 2
    %v3200 = vsel %vm154, %v3153, %v3180
    %v3201 = vsel %vm156, %v3200, %v3183
    %v3202 = vsel %vm158, %v3201, %v3189
    %v3203 = vsel %vm160, %v3202, %v3192
    %v3204 = vsel %vm162, %v3203, %v3195
    %v3205 = vsel %vm164, %v3204, %v3198
    %v3206 = vsel %vm166, %v3205, 1.0
    %3207 = vmatprep.subr.mxu0 0.0
    %3208 = vmatpush1.msra.mxu0 %v3206
    %3209 = vmatprep.subr.mxu0 0.0
    %3210 = vmatpush1.msra.mxu0 0.0
    %3211 = vmatprep.subr.mxu0 0.0
    %3212 = vmatpush1.msra.mxu0 0.0
    %3213 = vmatprep.subr.mxu0 0.0
    %3214 = vmatpush1.msra.mxu0 0.0
    %3215 = vmatprep.subr.mxu0 0.0
    %3216 = vmatpush1.msra.mxu0 0.0
    %3217 = vmatprep.subr.mxu0 0.0
    %3218 = vmatpush1.msra.mxu0 0.0
    %3219 = vmatprep.subr.mxu0 0.0
    %3220 = vmatpush1.msra.mxu0 0.0
    %3221 = vmatprep.subr.mxu0 0.0
    %3222 = vmatpush1.msra.mxu0 0.0
    %3223 = vmatprep.subr.mxu0 0.0
    %3224 = vmatpush1.msra.mxu0 0.0
    %3225 = vmatprep.subr.mxu0 0.0
    %3226 = vmatpush1.msra.mxu0 0.0
    %3227 = vmatprep.subr.mxu0 0.0
    %3228 = vmatpush1.msra.mxu0 0.0
    %3229 = vmatprep.subr.mxu0 0.0
    %3230 = vmatpush1.msra.mxu0 0.0
    %3231 = vmatprep.subr.mxu0 0.0
    %3232 = vmatpush1.msra.mxu0 0.0
    %3233 = vmatprep.subr.mxu0 0.0
    %3234 = vmatpush1.msra.mxu0 0.0
    %3235 = vmatprep.subr.mxu0 0.0
    %3236 = vmatpush1.msra.mxu0 0.0
    %3237 = vmatprep.subr.mxu0 0.0
    %3238 = vmatpush1.msra.mxu0 0.0
    %3239 = vmatprep.subr.mxu0 0.0
    %3240 = vmatpush1.msra.mxu0 0.0
    %3241 = vmatprep.subr.mxu0 0.0
    %3242 = vmatpush1.msra.mxu0 0.0
    %3243 = vmatprep.subr.mxu0 0.0
    %3244 = vmatpush1.msra.mxu0 0.0
    %3245 = vmatprep.subr.mxu0 0.0
    %3246 = vmatpush1.msra.mxu0 0.0
    %3247 = vmatprep.subr.mxu0 0.0
    %3248 = vmatpush1.msra.mxu0 0.0
    %3249 = vmatprep.subr.mxu0 0.0
    %3250 = vmatpush1.msra.mxu0 0.0
    %3251 = vmatprep.subr.mxu0 0.0
    %3252 = vmatpush1.msra.mxu0 0.0
    %3253 = vmatprep.subr.mxu0 0.0
    %3254 = vmatpush1.msra.mxu0 0.0
    %3255 = vmatprep.subr.mxu0 0.0
    %3256 = vmatpush1.msra.mxu0 0.0
    %3257 = vmatprep.subr.mxu0 0.0
    %3258 = vmatpush1.msra.mxu0 0.0
    %3259 = vmatprep.subr.mxu0 0.0
    %3260 = vmatpush1.msra.mxu0 0.0
    %3261 = vmatprep.subr.mxu0 0.0
    %3262 = vmatpush1.msra.mxu0 0.0
    %3263 = vmatprep.subr.mxu0 0.0
    %3264 = vmatpush1.msra.mxu0 0.0
    %3265 = vmatprep.subr.mxu0 0.0
    %3266 = vmatpush1.msra.mxu0 0.0
    %3267 = vmatprep.subr.mxu0 0.0
    %3268 = vmatpush1.msra.mxu0 0.0
    %3269 = vmatprep.subr.mxu0 0.0
    %3270 = vmatpush1.msra.mxu0 0.0
    %3271 = vmatprep.mubr.f32.mxu0 0.0
    %3272 = vmatmul.mubr.f32.gmra.mrb[0].mxu0 %v170
    %v3273 = vpop.f32.mrb[0].mxu0
    %v3274 = vadd.f32 0.0, %v3273
    %v3275 = vpop.f32.mrb[0].mxu0
    %3276 = vmatprep.mubr.f32.mxu0 0.0
    %3277 = vmatmul.mubr.f32.gmra.mrb[0].mxu0 %v173
    %v3278 = vpop.f32.mrb[0].mxu0
    %v3279 = vadd.f32 0.0, %v3278
    %v3280 = vpop.f32.mrb[0].mxu0
    %3281 = vmatprep.mubr.f32.mxu0 0.0
    %3282 = vmatmul.mubr.f32.gmra.mrb[0].mxu0 %v176
    %v3283 = vpop.f32.mrb[0].mxu0
    %v3284 = vadd.f32 0.0, %v3283
    %v3285 = vpop.f32.mrb[0].mxu0
    %3286 = vmatprep.mubr.f32.mxu0 0.0
    %3287 = vmatmul.mubr.f32.gmra.mrb[0].mxu0 %v179
    %v3288 = vpop.f32.mrb[0].mxu0
    %v3289 = vadd.f32 0.0, %v3288
    %v3290 = vpop.f32.mrb[0].mxu0
    %3291 = vmatprep.mubr.f32.mxu0 0.0
    %3292 = vmatmul.mubr.f32.gmra.mrb[0].mxu0 %v182
    %v3293 = vpop.f32.mrb[0].mxu0
    %v3294 = vadd.f32 0.0, %v3293
    %v3295 = vpop.f32.mrb[0].mxu0
    %3296 = vmatprep.mubr.f32.mxu0 0.0
    %3297 = vmatmul.mubr.f32.gmra.mrb[0].mxu0 %v185
    %v3298 = vpop.f32.mrb[0].mxu0
    %v3299 = vadd.f32 0.0, %v3298
    %v3300 = vpop.f32.mrb[0].mxu0
    %3301 = vmatprep.mubr.f32.mxu0 0.0
    %3302 = vmatmul.mubr.f32.gmra.mrb[0].mxu0 %v188
    %v3303 = vpop.f32.mrb[0].mxu0
    %v3304 = vadd.f32 0.0, %v3303
    %v3305 = vpop.f32.mrb[0].mxu0
    %3306 = vmatprep.mubr.f32.mxu0 0.0
    %3307 = vmatmul.mubr.f32.gmra.mrb[0].mxu0 %v191
    %v3308 = vpop.f32.mrb[0].mxu0
    %v3309 = vadd.f32 0.0, %v3308
    %v3310 = vpop.f32.mrb[0].mxu0
    %3311 = vmatprep.mubr.f32.mxu0 0.0
    %3312 = vmatmul.mubr.f32.gmra.mrb[0].mxu0 %v194
    %v3313 = vpop.f32.mrb[0].mxu0
    %v3314 = vadd.f32 0.0, %v3313
    %v3315 = vpop.f32.mrb[0].mxu0
    %3316 = vmatprep.mubr.f32.mxu0 0.0
    %3317 = vmatmul.mubr.f32.gmra.mrb[0].mxu0 %v197
    %v3318 = vpop.f32.mrb[0].mxu0
    %v3319 = vadd.f32 0.0, %v3318
    %v3320 = vpop.f32.mrb[0].mxu0
    %3321 = vmatprep.mubr.f32.mxu0 0.0
    %3322 = vmatmul.mubr.f32.gmra.mrb[0].mxu0 %v200
    %v3323 = vpop.f32.mrb[0].mxu0
    %v3324 = vadd.f32 0.0, %v3323
    %v3325 = vpop.f32.mrb[0].mxu0
    %3326 = vmatprep.mubr.f32.mxu0 0.0
    %3327 = vmatmul.mubr.f32.gmra.mrb[0].mxu0 %v203
    %v3328 = vpop.f32.mrb[0].mxu0
    %v3329 = vadd.f32 0.0, %v3328
    %v3330 = vpop.f32.mrb[0].mxu0
    %3331 = vmatprep.mubr.f32.mxu0 0.0
    %3332 = vmatmul.mubr.f32.gmra.mrb[0].mxu0 %v206
    %v3333 = vpop.f32.mrb[0].mxu0
    %v3334 = vadd.f32 0.0, %v3333
    %v3335 = vpop.f32.mrb[0].mxu0
    %3336 = vmatprep.mubr.f32.mxu0 0.0
    %3337 = vmatmul.mubr.f32.gmra.mrb[0].mxu0 %v209
    %v3338 = vpop.f32.mrb[0].mxu0
    %v3339 = vadd.f32 0.0, %v3338
    %v3340 = vpop.f32.mrb[0].mxu0
    %3341 = vmatprep.mubr.f32.mxu0 0.0
    %3342 = vmatmul.mubr.f32.gmra.mrb[0].mxu0 %v212
    %v3343 = vpop.f32.mrb[0].mxu0
    %v3344 = vadd.f32 0.0, %v3343
    %v3345 = vpop.f32.mrb[0].mxu0
    %3346 = vmatprep.mubr.f32.mxu0 0.0
    %3347 = vmatmul.mubr.f32.gmra.mrb[0].mxu0 %v215
    %v3348 = vpop.f32.mrb[0].mxu0
    %v3349 = vadd.f32 0.0, %v3348
    %v3350 = vpop.f32.mrb[0].mxu0
    %3351 = vdwg.mxu0
    %3352 = vxpose.xlu0.b32.start [1/16] %v3274, 128
    %3353 = vxpose.xlu0.b32.cont [2/16] %v3279, 128
    %3354 = vxpose.xlu0.b32.cont [3/16] %v3284, 128
    %3355 = vxpose.xlu0.b32.cont [4/16] %v3289, 128
    %3356 = vxpose.xlu0.b32.cont [5/16] %v3294, 128
    %3357 = vxpose.xlu0.b32.cont [6/16] %v3299, 128
    %3358 = vxpose.xlu0.b32.cont [7/16] %v3304, 128
    %3359 = vxpose.xlu0.b32.cont [8/16] %v3309, 128
    %3360 = vxpose.xlu0.b32.cont [9/16] %v3314, 128
    %3361 = vxpose.xlu0.b32.cont [10/16] %v3319, 128
    %3362 = vxpose.xlu0.b32.cont [11/16] %v3324, 128
    %3363 = vxpose.xlu0.b32.cont [12/16] %v3329, 128
    %3364 = vxpose.xlu0.b32.cont [13/16] %v3334, 128
    %3365 = vxpose.xlu0.b32.cont [14/16] %v3339, 128
    %3366 = vxpose.xlu0.b32.cont [15/16] %v3344, 128
    %3367 = vxpose.xlu0.b32.end [16/16] %v3349, 128
    %v3368 = vpop.trf.xlu0
    %v3369 = vpop.trf.xlu0
    %v3370 = vpop.trf.xlu0
    %v3371 = vpop.trf.xlu0
    %v3372 = vpop.trf.xlu0
    %v3373 = vpop.trf.xlu0
    %v3374 = vpop.trf.xlu0
    %v3375 = vpop.trf.xlu0
    %v3376 = vpop.trf.xlu0
    %v3377 = vpop.trf.xlu0
    %v3378 = vpop.trf.xlu0
    %v3379 = vpop.trf.xlu0
    %v3380 = vpop.trf.xlu0
    %v3381 = vpop.trf.xlu0
    %v3382 = vpop.trf.xlu0
    %v3383 = vpop.trf.xlu0
    %v3384 = vsel %vm394, %v2958, 0
    %v3386 = vsel %vm394, %v2960, 0
    %3388 = vmatprep.subr.mxu0 0.0
    %3389 = vmatpush1.msra.mxu0 %v66
    %3390 = vmatprep.subr.mxu0 0.0
    %3391 = vmatpush1.msra.mxu0 %v67
    %3392 = vmatprep.subr.mxu0 0.0
    %3393 = vmatpush1.msra.mxu0 %v68
    %3394 = vmatprep.subr.mxu0 0.0
    %3395 = vmatpush1.msra.mxu0 %v69
    %3396 = vmatprep.subr.mxu0 0.0
    %3397 = vmatpush1.msra.mxu0 0.0
    %3398 = vmatprep.subr.mxu0 0.0
    %3399 = vmatpush1.msra.mxu0 0.0
    %3400 = vmatprep.subr.mxu0 0.0
    %3401 = vmatpush1.msra.mxu0 0.0
    %3402 = vmatprep.subr.mxu0 0.0
    %3403 = vmatpush1.msra.mxu0 0.0
    %3404 = vmatprep.subr.mxu0 0.0
    %3405 = vmatpush1.msra.mxu0 0.0
    %3406 = vmatprep.subr.mxu0 0.0
    %3407 = vmatpush1.msra.mxu0 0.0
    %3408 = vmatprep.subr.mxu0 0.0
    %3409 = vmatpush1.msra.mxu0 0.0
    %3410 = vmatprep.subr.mxu0 0.0
    %3411 = vmatpush1.msra.mxu0 0.0
    %3412 = vmatprep.subr.mxu0 0.0
    %3413 = vmatpush1.msra.mxu0 0.0
    %3414 = vmatprep.subr.mxu0 0.0
    %3415 = vmatpush1.msra.mxu0 0.0
    %3416 = vmatprep.subr.mxu0 0.0
    %3417 = vmatpush1.msra.mxu0 0.0
    %3418 = vmatprep.subr.mxu0 0.0
    %3419 = vmatpush1.msra.mxu0 0.0
    %3420 = vmatprep.subr.mxu0 0.0
    %3421 = vmatpush1.msra.mxu0 0.0
    %3422 = vmatprep.subr.mxu0 0.0
    %3423 = vmatpush1.msra.mxu0 0.0
    %3424 = vmatprep.subr.mxu0 0.0
    %3425 = vmatpush1.msra.mxu0 0.0
    %3426 = vmatprep.subr.mxu0 0.0
    %3427 = vmatpush1.msra.mxu0 0.0
    %3428 = vmatprep.subr.mxu0 0.0
    %3429 = vmatpush1.msra.mxu0 0.0
    %3430 = vmatprep.subr.mxu0 0.0
    %3431 = vmatpush1.msra.mxu0 0.0
    %3432 = vmatprep.subr.mxu0 0.0
    %3433 = vmatpush1.msra.mxu0 0.0
    %3434 = vmatprep.subr.mxu0 0.0
    %3435 = vmatpush1.msra.mxu0 0.0
    %3436 = vmatprep.subr.mxu0 0.0
    %3437 = vmatpush1.msra.mxu0 0.0
    %3438 = vmatprep.subr.mxu0 0.0
    %3439 = vmatpush1.msra.mxu0 0.0
    %3440 = vmatprep.subr.mxu0 0.0
    %3441 = vmatpush1.msra.mxu0 0.0
    %3442 = vmatprep.subr.mxu0 0.0
    %3443 = vmatpush1.msra.mxu0 0.0
    %3444 = vmatprep.subr.mxu0 0.0
    %3445 = vmatpush1.msra.mxu0 0.0
    %3446 = vmatprep.subr.mxu0 0.0
    %3447 = vmatpush1.msra.mxu0 0.0
    %3448 = vmatprep.subr.mxu0 0.0
    %3449 = vmatpush1.msra.mxu0 0.0
    %3450 = vmatprep.subr.mxu0 0.0
    %3451 = vmatpush1.msra.mxu0 0.0
    %3452 = vmatprep.mubr.f32.mxu0 0.0
    %3453 = vmatmul.mubr.f32.gmra.mrb[0].mxu0 %v3384
    %v3454 = vpop.f32.mrb[0].mxu0
    %v3455 = vadd.f32 0.0, %v3454
    %v3456 = vpop.f32.mrb[0].mxu0
    %3457 = vmatprep.mubr.f32.mxu0 0.0
    %3458 = vmatmul.mubr.f32.gmra.mrb[0].mxu0 %v3386
    %v3459 = vpop.f32.mrb[0].mxu0
    %v3460 = vadd.f32 0.0, %v3459
    %v3461 = vpop.f32.mrb[0].mxu0
    %3462 = vdwg.mxu0
    %v3463 = vadd.f32 %v3368, %v3455
    %v3464 = vadd.f32 %v3369, %v3460
    %v3465 = vmul.f32 %v48, %v3463
    %v3466 = vmul.f32 %v48, %v3464
    %v3467 = vtanh.pop %v3465
    %v3468 = vtanh.pop %v3466
    %v3469 = vmul.f32 %v48, %v3467
    %v3470 = vmul.f32 %v48, %v3468
    %v3471 = vadd.f32 %v3469, %v49
    %v3472 = vadd.f32 %v3470, %v49
    %v3473 = vmul.f32 %v3471, %v2941
    %v3474 = vmul.f32 %v3472, %v2942
    %3477 = vrot.lane.b32.xlu0 %v3471, 64
    %v3478 = vpop.permute.xlu0 %3477
    %3479 = vrot.lane.b32.xlu0 %v3472, 64
    %v3480 = vpop.permute.xlu0 %3479
    %v3483 = vmul.f32 %v3471, %v3478
    %v3484 = vmul.f32 %v3472, %v3480
    %3487 = vrot.lane.b32.xlu0 %v3483, 32
    %v3488 = vpop.permute.xlu0 %3487
    %3489 = vrot.lane.b32.xlu0 %v3484, 32
    %v3490 = vpop.permute.xlu0 %3489
    %v3493 = vadd.f32 %v3473, %v3488
    %v3494 = vadd.f32 %v3474, %v3490
    %v3495 = vtanh.pop %v3493
    %v3496 = vtanh.pop %v3494
    %3499 = vrot.lane.b32.xlu0 %v3495, 64
    %v3500 = vpop.permute.xlu0 %3499
    %3501 = vrot.lane.b32.xlu0 %v3496, 64
    %v3502 = vpop.permute.xlu0 %3501
    %v3505 = vmul.f32 %v3471, %v3500
    %v3506 = vmul.f32 %v3472, %v3502
    %3509 = vrot.lane.b32.xlu0 %v3505, 32
    %v3510 = vpop.permute.xlu0 %3509
    %3511 = vrot.lane.b32.xlu0 %v3506, 32
    %v3512 = vpop.permute.xlu0 %3511
    %3515 = vst.msk [vmem:[#allocation2] sm:$0xff] %vm394, %v3510
    %3516 = vst.msk [vmem:[#allocation2 + $0x8] sm:$0xff] %vm394, %v3512
    %v3517 = vsel %vm394, %v3510, 0
    %v3519 = vsel %vm394, %v3512, 0
    %3521 = vmatprep.subr.mxu0 0.0
    %3522 = vmatpush1.msra.mxu0 %v66
    %3523 = vmatprep.subr.mxu0 0.0
    %3524 = vmatpush1.msra.mxu0 %v67
    %3525 = vmatprep.subr.mxu0 0.0
    %3526 = vmatpush1.msra.mxu0 %v68
    %3527 = vmatprep.subr.mxu0 0.0
    %3528 = vmatpush1.msra.mxu0 %v69
    %3529 = vmatprep.subr.mxu0 0.0
    %3530 = vmatpush1.msra.mxu0 0.0
    %3531 = vmatprep.subr.mxu0 0.0
    %3532 = vmatpush1.msra.mxu0 0.0
    %3533 = vmatprep.subr.mxu0 0.0
    %3534 = vmatpush1.msra.mxu0 0.0
    %3535 = vmatprep.subr.mxu0 0.0
    %3536 = vmatpush1.msra.mxu0 0.0
    %3537 = vmatprep.subr.mxu0 0.0
    %3538 = vmatpush1.msra.mxu0 0.0
    %3539 = vmatprep.subr.mxu0 0.0
    %3540 = vmatpush1.msra.mxu0 0.0
    %3541 = vmatprep.subr.mxu0 0.0
    %3542 = vmatpush1.msra.mxu0 0.0
    %3543 = vmatprep.subr.mxu0 0.0
    %3544 = vmatpush1.msra.mxu0 0.0
    %3545 = vmatprep.subr.mxu0 0.0
    %3546 = vmatpush1.msra.mxu0 0.0
    %3547 = vmatprep.subr.mxu0 0.0
    %3548 = vmatpush1.msra.mxu0 0.0
    %3549 = vmatprep.subr.mxu0 0.0
    %3550 = vmatpush1.msra.mxu0 0.0
    %3551 = vmatprep.subr.mxu0 0.0
    %3552 = vmatpush1.msra.mxu0 0.0
    %3553 = vmatprep.subr.mxu0 0.0
    %3554 = vmatpush1.msra.mxu0 0.0
    %3555 = vmatprep.subr.mxu0 0.0
    %3556 = vmatpush1.msra.mxu0 0.0
    %3557 = vmatprep.subr.mxu0 0.0
    %3558 = vmatpush1.msra.mxu0 0.0
    %3559 = vmatprep.subr.mxu0 0.0
    %3560 = vmatpush1.msra.mxu0 0.0
    %3561 = vmatprep.subr.mxu0 0.0
    %3562 = vmatpush1.msra.mxu0 0.0
    %3563 = vmatprep.subr.mxu0 0.0
    %3564 = vmatpush1.msra.mxu0 0.0
    %3565 = vmatprep.subr.mxu0 0.0
    %3566 = vmatpush1.msra.mxu0 0.0
    %3567 = vmatprep.subr.mxu0 0.0
    %3568 = vmatpush1.msra.mxu0 0.0
    %3569 = vmatprep.subr.mxu0 0.0
    %3570 = vmatpush1.msra.mxu0 0.0
    %3571 = vmatprep.subr.mxu0 0.0
    %3572 = vmatpush1.msra.mxu0 0.0
    %3573 = vmatprep.subr.mxu0 0.0
    %3574 = vmatpush1.msra.mxu0 0.0
    %3575 = vmatprep.subr.mxu0 0.0
    %3576 = vmatpush1.msra.mxu0 0.0
    %3577 = vmatprep.subr.mxu0 0.0
    %3578 = vmatpush1.msra.mxu0 0.0
    %3579 = vmatprep.subr.mxu0 0.0
    %3580 = vmatpush1.msra.mxu0 0.0
    %3581 = vmatprep.subr.mxu0 0.0
    %3582 = vmatpush1.msra.mxu0 0.0
    %3583 = vmatprep.subr.mxu0 0.0
    %3584 = vmatpush1.msra.mxu0 0.0
    %3585 = vmatprep.mubr.f32.mxu0 0.0
    %3586 = vmatmul.mubr.f32.gmra.mrb[0].mxu0 %v3517
    %v3587 = vpop.f32.mrb[0].mxu0
    %v3588 = vadd.f32 0.0, %v3587
    %v3589 = vpop.f32.mrb[0].mxu0
    %3590 = vmatprep.mubr.f32.mxu0 0.0
    %3591 = vmatmul.mubr.f32.gmra.mrb[0].mxu0 %v3519
    %v3592 = vpop.f32.mrb[0].mxu0
    %v3593 = vadd.f32 0.0, %v3592
    %v3594 = vpop.f32.mrb[0].mxu0
    %3595 = vdwg.mxu0
    %v3596 = vadd.f32 %v3370, %v3588
    %v3597 = vadd.f32 %v3371, %v3593
    %v3598 = vmul.f32 %v48, %v3596
    %v3599 = vmul.f32 %v48, %v3597
    %v3600 = vtanh.pop %v3598
    %v3601 = vtanh.pop %v3599
    %v3602 = vmul.f32 %v48, %v3600
    %v3603 = vmul.f32 %v48, %v3601
    %v3604 = vadd.f32 %v3602, %v49
    %v3605 = vadd.f32 %v3603, %v49
    %v3606 = vmul.f32 %v3604, %v3493
    %v3607 = vmul.f32 %v3605, %v3494
    %3610 = vrot.lane.b32.xlu0 %v3604, 64
    %v3611 = vpop.permute.xlu0 %3610
    %3612 = vrot.lane.b32.xlu0 %v3605, 64
    %v3613 = vpop.permute.xlu0 %3612
    %v3616 = vmul.f32 %v3604, %v3611
    %v3617 = vmul.f32 %v3605, %v3613
    %3620 = vrot.lane.b32.xlu0 %v3616, 32
    %v3621 = vpop.permute.xlu0 %3620
    %3622 = vrot.lane.b32.xlu0 %v3617, 32
    %v3623 = vpop.permute.xlu0 %3622
    %v3626 = vadd.f32 %v3606, %v3621
    %v3627 = vadd.f32 %v3607, %v3623
    %v3628 = vtanh.pop %v3626
    %v3629 = vtanh.pop %v3627
    %3632 = vrot.lane.b32.xlu0 %v3628, 64
    %v3633 = vpop.permute.xlu0 %3632
    %3634 = vrot.lane.b32.xlu0 %v3629, 64
    %v3635 = vpop.permute.xlu0 %3634
    %v3638 = vmul.f32 %v3604, %v3633
    %v3639 = vmul.f32 %v3605, %v3635
    %3642 = vrot.lane.b32.xlu0 %v3638, 32
    %v3643 = vpop.permute.xlu0 %3642
    %3644 = vrot.lane.b32.xlu0 %v3639, 32
    %v3645 = vpop.permute.xlu0 %3644
    %3648 = vst.msk [vmem:[#allocation2 + $0x10] sm:$0xff] %vm394, %v3643
    %3649 = vst.msk [vmem:[#allocation2 + $0x18] sm:$0xff] %vm394, %v3645
    %v3650 = vsel %vm394, %v3643, 0
    %v3652 = vsel %vm394, %v3645, 0
    %3654 = vmatprep.subr.mxu0 0.0
    %3655 = vmatpush1.msra.mxu0 %v66
    %3656 = vmatprep.subr.mxu0 0.0
    %3657 = vmatpush1.msra.mxu0 %v67
    %3658 = vmatprep.subr.mxu0 0.0
    %3659 = vmatpush1.msra.mxu0 %v68
    %3660 = vmatprep.subr.mxu0 0.0
    %3661 = vmatpush1.msra.mxu0 %v69
    %3662 = vmatprep.subr.mxu0 0.0
    %3663 = vmatpush1.msra.mxu0 0.0
    %3664 = vmatprep.subr.mxu0 0.0
    %3665 = vmatpush1.msra.mxu0 0.0
    %3666 = vmatprep.subr.mxu0 0.0
    %3667 = vmatpush1.msra.mxu0 0.0
    %3668 = vmatprep.subr.mxu0 0.0
    %3669 = vmatpush1.msra.mxu0 0.0
    %3670 = vmatprep.subr.mxu0 0.0
    %3671 = vmatpush1.msra.mxu0 0.0
    %3672 = vmatprep.subr.mxu0 0.0
    %3673 = vmatpush1.msra.mxu0 0.0
    %3674 = vmatprep.subr.mxu0 0.0
    %3675 = vmatpush1.msra.mxu0 0.0
    %3676 = vmatprep.subr.mxu0 0.0
    %3677 = vmatpush1.msra.mxu0 0.0
    %3678 = vmatprep.subr.mxu0 0.0
    %3679 = vmatpush1.msra.mxu0 0.0
    %3680 = vmatprep.subr.mxu0 0.0
    %3681 = vmatpush1.msra.mxu0 0.0
    %3682 = vmatprep.subr.mxu0 0.0
    %3683 = vmatpush1.msra.mxu0 0.0
    %3684 = vmatprep.subr.mxu0 0.0
    %3685 = vmatpush1.msra.mxu0 0.0
    %3686 = vmatprep.subr.mxu0 0.0
    %3687 = vmatpush1.msra.mxu0 0.0
    %3688 = vmatprep.subr.mxu0 0.0
    %3689 = vmatpush1.msra.mxu0 0.0
    %3690 = vmatprep.subr.mxu0 0.0
    %3691 = vmatpush1.msra.mxu0 0.0
    %3692 = vmatprep.subr.mxu0 0.0
    %3693 = vmatpush1.msra.mxu0 0.0
    %3694 = vmatprep.subr.mxu0 0.0
    %3695 = vmatpush1.msra.mxu0 0.0
    %3696 = vmatprep.subr.mxu0 0.0
    %3697 = vmatpush1.msra.mxu0 0.0
    %3698 = vmatprep.subr.mxu0 0.0
    %3699 = vmatpush1.msra.mxu0 0.0
    %3700 = vmatprep.subr.mxu0 0.0
    %3701 = vmatpush1.msra.mxu0 0.0
    %3702 = vmatprep.subr.mxu0 0.0
    %3703 = vmatpush1.msra.mxu0 0.0
    %3704 = vmatprep.subr.mxu0 0.0
    %3705 = vmatpush1.msra.mxu0 0.0
    %3706 = vmatprep.subr.mxu0 0.0
    %3707 = vmatpush1.msra.mxu0 0.0
    %3708 = vmatprep.subr.mxu0 0.0
    %3709 = vmatpush1.msra.mxu0 0.0
    %3710 = vmatprep.subr.mxu0 0.0
    %3711 = vmatpush1.msra.mxu0 0.0
    %3712 = vmatprep.subr.mxu0 0.0
    %3713 = vmatpush1.msra.mxu0 0.0
    %3714 = vmatprep.subr.mxu0 0.0
    %3715 = vmatpush1.msra.mxu0 0.0
    %3716 = vmatprep.subr.mxu0 0.0
    %3717 = vmatpush1.msra.mxu0 0.0
    %3718 = vmatprep.mubr.f32.mxu0 0.0
    %3719 = vmatmul.mubr.f32.gmra.mrb[0].mxu0 %v3650
    %v3720 = vpop.f32.mrb[0].mxu0
    %v3721 = vadd.f32 0.0, %v3720
    %v3722 = vpop.f32.mrb[0].mxu0
    %3723 = vmatprep.mubr.f32.mxu0 0.0
    %3724 = vmatmul.mubr.f32.gmra.mrb[0].mxu0 %v3652
    %v3725 = vpop.f32.mrb[0].mxu0
    %v3726 = vadd.f32 0.0, %v3725
    %v3727 = vpop.f32.mrb[0].mxu0
    %3728 = vdwg.mxu0
    %v3729 = vadd.f32 %v3372, %v3721
    %v3730 = vadd.f32 %v3373, %v3726
    %v3731 = vmul.f32 %v48, %v3729
    %v3732 = vmul.f32 %v48, %v3730
    %v3733 = vtanh.pop %v3731
    %v3734 = vtanh.pop %v3732
    %v3735 = vmul.f32 %v48, %v3733
    %v3736 = vmul.f32 %v48, %v3734
    %v3737 = vadd.f32 %v3735, %v49
    %v3738 = vadd.f32 %v3736, %v49
    %v3739 = vmul.f32 %v3737, %v3626
    %v3740 = vmul.f32 %v3738, %v3627
    %3743 = vrot.lane.b32.xlu0 %v3737, 64
    %v3744 = vpop.permute.xlu0 %3743
    %3745 = vrot.lane.b32.xlu0 %v3738, 64
    %v3746 = vpop.permute.xlu0 %3745
    %v3749 = vmul.f32 %v3737, %v3744
    %v3750 = vmul.f32 %v3738, %v3746
    %3753 = vrot.lane.b32.xlu0 %v3749, 32
    %v3754 = vpop.permute.xlu0 %3753
    %3755 = vrot.lane.b32.xlu0 %v3750, 32
    %v3756 = vpop.permute.xlu0 %3755
    %v3759 = vadd.f32 %v3739, %v3754
    %v3760 = vadd.f32 %v3740, %v3756
    %v3761 = vtanh.pop %v3759
    %v3762 = vtanh.pop %v3760
    %3765 = vrot.lane.b32.xlu0 %v3761, 64
    %v3766 = vpop.permute.xlu0 %3765
    %3767 = vrot.lane.b32.xlu0 %v3762, 64
    %v3768 = vpop.permute.xlu0 %3767
    %v3771 = vmul.f32 %v3737, %v3766
    %v3772 = vmul.f32 %v3738, %v3768
    %3775 = vrot.lane.b32.xlu0 %v3771, 32
    %v3776 = vpop.permute.xlu0 %3775
    %3777 = vrot.lane.b32.xlu0 %v3772, 32
    %v3778 = vpop.permute.xlu0 %3777
    %3781 = vst.msk [vmem:[#allocation2 + $0x20] sm:$0xff] %vm394, %v3776
    %3782 = vst.msk [vmem:[#allocation2 + $0x28] sm:$0xff] %vm394, %v3778
    %v3783 = vsel %vm394, %v3776, 0
    %v3785 = vsel %vm394, %v3778, 0
    %3787 = vmatprep.subr.mxu0 0.0
    %3788 = vmatpush1.msra.mxu0 %v66
    %3789 = vmatprep.subr.mxu0 0.0
    %3790 = vmatpush1.msra.mxu0 %v67
    %3791 = vmatprep.subr.mxu0 0.0
    %3792 = vmatpush1.msra.mxu0 %v68
    %3793 = vmatprep.subr.mxu0 0.0
    %3794 = vmatpush1.msra.mxu0 %v69
    %3795 = vmatprep.subr.mxu0 0.0
    %3796 = vmatpush1.msra.mxu0 0.0
    %3797 = vmatprep.subr.mxu0 0.0
    %3798 = vmatpush1.msra.mxu0 0.0
    %3799 = vmatprep.subr.mxu0 0.0
    %3800 = vmatpush1.msra.mxu0 0.0
    %3801 = vmatprep.subr.mxu0 0.0
    %3802 = vmatpush1.msra.mxu0 0.0
    %3803 = vmatprep.subr.mxu0 0.0
    %3804 = vmatpush1.msra.mxu0 0.0
    %3805 = vmatprep.subr.mxu0 0.0
    %3806 = vmatpush1.msra.mxu0 0.0
    %3807 = vmatprep.subr.mxu0 0.0
    %3808 = vmatpush1.msra.mxu0 0.0
    %3809 = vmatprep.subr.mxu0 0.0
    %3810 = vmatpush1.msra.mxu0 0.0
    %3811 = vmatprep.subr.mxu0 0.0
    %3812 = vmatpush1.msra.mxu0 0.0
    %3813 = vmatprep.subr.mxu0 0.0
    %3814 = vmatpush1.msra.mxu0 0.0
    %3815 = vmatprep.subr.mxu0 0.0
    %3816 = vmatpush1.msra.mxu0 0.0
    %3817 = vmatprep.subr.mxu0 0.0
    %3818 = vmatpush1.msra.mxu0 0.0
    %3819 = vmatprep.subr.mxu0 0.0
    %3820 = vmatpush1.msra.mxu0 0.0
    %3821 = vmatprep.subr.mxu0 0.0
    %3822 = vmatpush1.msra.mxu0 0.0
    %3823 = vmatprep.subr.mxu0 0.0
    %3824 = vmatpush1.msra.mxu0 0.0
    %3825 = vmatprep.subr.mxu0 0.0
    %3826 = vmatpush1.msra.mxu0 0.0
    %3827 = vmatprep.subr.mxu0 0.0
    %3828 = vmatpush1.msra.mxu0 0.0
    %3829 = vmatprep.subr.mxu0 0.0
    %3830 = vmatpush1.msra.mxu0 0.0
    %3831 = vmatprep.subr.mxu0 0.0
    %3832 = vmatpush1.msra.mxu0 0.0
    %3833 = vmatprep.subr.mxu0 0.0
    %3834 = vmatpush1.msra.mxu0 0.0
    %3835 = vmatprep.subr.mxu0 0.0
    %3836 = vmatpush1.msra.mxu0 0.0
    %3837 = vmatprep.subr.mxu0 0.0
    %3838 = vmatpush1.msra.mxu0 0.0
    %3839 = vmatprep.subr.mxu0 0.0
    %3840 = vmatpush1.msra.mxu0 0.0
    %3841 = vmatprep.subr.mxu0 0.0
    %3842 = vmatpush1.msra.mxu0 0.0
    %3843 = vmatprep.subr.mxu0 0.0
    %3844 = vmatpush1.msra.mxu0 0.0
    %3845 = vmatprep.subr.mxu0 0.0
    %3846 = vmatpush1.msra.mxu0 0.0
    %3847 = vmatprep.subr.mxu0 0.0
    %3848 = vmatpush1.msra.mxu0 0.0
    %3849 = vmatprep.subr.mxu0 0.0
    %3850 = vmatpush1.msra.mxu0 0.0
    %3851 = vmatprep.mubr.f32.mxu0 0.0
    %3852 = vmatmul.mubr.f32.gmra.mrb[0].mxu0 %v3783
    %v3853 = vpop.f32.mrb[0].mxu0
    %v3854 = vadd.f32 0.0, %v3853
    %v3855 = vpop.f32.mrb[0].mxu0
    %3856 = vmatprep.mubr.f32.mxu0 0.0
    %3857 = vmatmul.mubr.f32.gmra.mrb[0].mxu0 %v3785
    %v3858 = vpop.f32.mrb[0].mxu0
    %v3859 = vadd.f32 0.0, %v3858
    %v3860 = vpop.f32.mrb[0].mxu0
    %3861 = vdwg.mxu0
    %v3862 = vadd.f32 %v3374, %v3854
    %v3863 = vadd.f32 %v3375, %v3859
    %v3864 = vmul.f32 %v48, %v3862
    %v3865 = vmul.f32 %v48, %v3863
    %v3866 = vtanh.pop %v3864
    %v3867 = vtanh.pop %v3865
    %v3868 = vmul.f32 %v48, %v3866
    %v3869 = vmul.f32 %v48, %v3867
    %v3870 = vadd.f32 %v3868, %v49
    %v3871 = vadd.f32 %v3869, %v49
    %v3872 = vmul.f32 %v3870, %v3759
    %v3873 = vmul.f32 %v3871, %v3760
    %3876 = vrot.lane.b32.xlu0 %v3870, 64
    %v3877 = vpop.permute.xlu0 %3876
    %3878 = vrot.lane.b32.xlu0 %v3871, 64
    %v3879 = vpop.permute.xlu0 %3878
    %v3882 = vmul.f32 %v3870, %v3877
    %v3883 = vmul.f32 %v3871, %v3879
    %3886 = vrot.lane.b32.xlu0 %v3882, 32
    %v3887 = vpop.permute.xlu0 %3886
    %3888 = vrot.lane.b32.xlu0 %v3883, 32
    %v3889 = vpop.permute.xlu0 %3888
    %v3892 = vadd.f32 %v3872, %v3887
    %v3893 = vadd.f32 %v3873, %v3889
    %v3894 = vtanh.pop %v3892
    %v3895 = vtanh.pop %v3893
    %3898 = vrot.lane.b32.xlu0 %v3894, 64
    %v3899 = vpop.permute.xlu0 %3898
    %3900 = vrot.lane.b32.xlu0 %v3895, 64
    %v3901 = vpop.permute.xlu0 %3900
    %v3904 = vmul.f32 %v3870, %v3899
    %v3905 = vmul.f32 %v3871, %v3901
    %3908 = vrot.lane.b32.xlu0 %v3904, 32
    %v3909 = vpop.permute.xlu0 %3908
    %3910 = vrot.lane.b32.xlu0 %v3905, 32
    %v3911 = vpop.permute.xlu0 %3910
    %3914 = vst.msk [vmem:[#allocation2 + $0x30] sm:$0xff] %vm394, %v3909
    %3915 = vst.msk [vmem:[#allocation2 + $0x38] sm:$0xff] %vm394, %v3911
    %v3916 = vsel %vm394, %v3909, 0
    %v3918 = vsel %vm394, %v3911, 0
    %3920 = vmatprep.subr.mxu0 0.0
    %3921 = vmatpush1.msra.mxu0 %v66
    %3922 = vmatprep.subr.mxu0 0.0
    %3923 = vmatpush1.msra.mxu0 %v67
    %3924 = vmatprep.subr.mxu0 0.0
    %3925 = vmatpush1.msra.mxu0 %v68
    %3926 = vmatprep.subr.mxu0 0.0
    %3927 = vmatpush1.msra.mxu0 %v69
    %3928 = vmatprep.subr.mxu0 0.0
    %3929 = vmatpush1.msra.mxu0 0.0
    %3930 = vmatprep.subr.mxu0 0.0
    %3931 = vmatpush1.msra.mxu0 0.0
    %3932 = vmatprep.subr.mxu0 0.0
    %3933 = vmatpush1.msra.mxu0 0.0
    %3934 = vmatprep.subr.mxu0 0.0
    %3935 = vmatpush1.msra.mxu0 0.0
    %3936 = vmatprep.subr.mxu0 0.0
    %3937 = vmatpush1.msra.mxu0 0.0
    %3938 = vmatprep.subr.mxu0 0.0
    %3939 = vmatpush1.msra.mxu0 0.0
    %3940 = vmatprep.subr.mxu0 0.0
    %3941 = vmatpush1.msra.mxu0 0.0
    %3942 = vmatprep.subr.mxu0 0.0
    %3943 = vmatpush1.msra.mxu0 0.0
    %3944 = vmatprep.subr.mxu0 0.0
    %3945 = vmatpush1.msra.mxu0 0.0
    %3946 = vmatprep.subr.mxu0 0.0
    %3947 = vmatpush1.msra.mxu0 0.0
    %3948 = vmatprep.subr.mxu0 0.0
    %3949 = vmatpush1.msra.mxu0 0.0
    %3950 = vmatprep.subr.mxu0 0.0
    %3951 = vmatpush1.msra.mxu0 0.0
    %3952 = vmatprep.subr.mxu0 0.0
    %3953 = vmatpush1.msra.mxu0 0.0
    %3954 = vmatprep.subr.mxu0 0.0
    %3955 = vmatpush1.msra.mxu0 0.0
    %3956 = vmatprep.subr.mxu0 0.0
    %3957 = vmatpush1.msra.mxu0 0.0
    %3958 = vmatprep.subr.mxu0 0.0
    %3959 = vmatpush1.msra.mxu0 0.0
    %3960 = vmatprep.subr.mxu0 0.0
    %3961 = vmatpush1.msra.mxu0 0.0
    %3962 = vmatprep.subr.mxu0 0.0
    %3963 = vmatpush1.msra.mxu0 0.0
    %3964 = vmatprep.subr.mxu0 0.0
    %3965 = vmatpush1.msra.mxu0 0.0
    %3966 = vmatprep.subr.mxu0 0.0
    %3967 = vmatpush1.msra.mxu0 0.0
    %3968 = vmatprep.subr.mxu0 0.0
    %3969 = vmatpush1.msra.mxu0 0.0
    %3970 = vmatprep.subr.mxu0 0.0
    %3971 = vmatpush1.msra.mxu0 0.0
    %3972 = vmatprep.subr.mxu0 0.0
    %3973 = vmatpush1.msra.mxu0 0.0
    %3974 = vmatprep.subr.mxu0 0.0
    %3975 = vmatpush1.msra.mxu0 0.0
    %3976 = vmatprep.subr.mxu0 0.0
    %3977 = vmatpush1.msra.mxu0 0.0
    %3978 = vmatprep.subr.mxu0 0.0
    %3979 = vmatpush1.msra.mxu0 0.0
    %3980 = vmatprep.subr.mxu0 0.0
    %3981 = vmatpush1.msra.mxu0 0.0
    %3982 = vmatprep.subr.mxu0 0.0
    %3983 = vmatpush1.msra.mxu0 0.0
    %3984 = vmatprep.mubr.f32.mxu0 0.0
    %3985 = vmatmul.mubr.f32.gmra.mrb[0].mxu0 %v3916
    %v3986 = vpop.f32.mrb[0].mxu0
    %v3987 = vadd.f32 0.0, %v3986
    %v3988 = vpop.f32.mrb[0].mxu0
    %3989 = vmatprep.mubr.f32.mxu0 0.0
    %3990 = vmatmul.mubr.f32.gmra.mrb[0].mxu0 %v3918
    %v3991 = vpop.f32.mrb[0].mxu0
    %v3992 = vadd.f32 0.0, %v3991
    %v3993 = vpop.f32.mrb[0].mxu0
    %3994 = vdwg.mxu0
    %v3995 = vadd.f32 %v3376, %v3987
    %v3996 = vadd.f32 %v3377, %v3992
    %v3997 = vmul.f32 %v48, %v3995
    %v3998 = vmul.f32 %v48, %v3996
    %v3999 = vtanh.pop %v3997
    %v4000 = vtanh.pop %v3998
    %v4001 = vmul.f32 %v48, %v3999
    %v4002 = vmul.f32 %v48, %v4000
    %v4003 = vadd.f32 %v4001, %v49
    %v4004 = vadd.f32 %v4002, %v49
    %v4005 = vmul.f32 %v4003, %v3892
    %v4006 = vmul.f32 %v4004, %v3893
    %4009 = vrot.lane.b32.xlu0 %v4003, 64
    %v4010 = vpop.permute.xlu0 %4009
    %4011 = vrot.lane.b32.xlu0 %v4004, 64
    %v4012 = vpop.permute.xlu0 %4011
    %v4015 = vmul.f32 %v4003, %v4010
    %v4016 = vmul.f32 %v4004, %v4012
    %4019 = vrot.lane.b32.xlu0 %v4015, 32
    %v4020 = vpop.permute.xlu0 %4019
    %4021 = vrot.lane.b32.xlu0 %v4016, 32
    %v4022 = vpop.permute.xlu0 %4021
    %v4025 = vadd.f32 %v4005, %v4020
    %v4026 = vadd.f32 %v4006, %v4022
    %v4027 = vtanh.pop %v4025
    %v4028 = vtanh.pop %v4026
    %4031 = vrot.lane.b32.xlu0 %v4027, 64
    %v4032 = vpop.permute.xlu0 %4031
    %4033 = vrot.lane.b32.xlu0 %v4028, 64
    %v4034 = vpop.permute.xlu0 %4033
    %v4037 = vmul.f32 %v4003, %v4032
    %v4038 = vmul.f32 %v4004, %v4034
    %4041 = vrot.lane.b32.xlu0 %v4037, 32
    %v4042 = vpop.permute.xlu0 %4041
    %4043 = vrot.lane.b32.xlu0 %v4038, 32
    %v4044 = vpop.permute.xlu0 %4043
    %4047 = vst.msk [vmem:[#allocation2 + $0x40] sm:$0xff] %vm394, %v4042
    %4048 = vst.msk [vmem:[#allocation2 + $0x48] sm:$0xff] %vm394, %v4044
    %v4049 = vsel %vm394, %v4042, 0
    %v4051 = vsel %vm394, %v4044, 0
    %4053 = vmatprep.subr.mxu0 0.0
    %4054 = vmatpush1.msra.mxu0 %v66
    %4055 = vmatprep.subr.mxu0 0.0
    %4056 = vmatpush1.msra.mxu0 %v67
    %4057 = vmatprep.subr.mxu0 0.0
    %4058 = vmatpush1.msra.mxu0 %v68
    %4059 = vmatprep.subr.mxu0 0.0
    %4060 = vmatpush1.msra.mxu0 %v69
    %4061 = vmatprep.subr.mxu0 0.0
    %4062 = vmatpush1.msra.mxu0 0.0
    %4063 = vmatprep.subr.mxu0 0.0
    %4064 = vmatpush1.msra.mxu0 0.0
    %4065 = vmatprep.subr.mxu0 0.0
    %4066 = vmatpush1.msra.mxu0 0.0
    %4067 = vmatprep.subr.mxu0 0.0
    %4068 = vmatpush1.msra.mxu0 0.0
    %4069 = vmatprep.subr.mxu0 0.0
    %4070 = vmatpush1.msra.mxu0 0.0
    %4071 = vmatprep.subr.mxu0 0.0
    %4072 = vmatpush1.msra.mxu0 0.0
    %4073 = vmatprep.subr.mxu0 0.0
    %4074 = vmatpush1.msra.mxu0 0.0
    %4075 = vmatprep.subr.mxu0 0.0
    %4076 = vmatpush1.msra.mxu0 0.0
    %4077 = vmatprep.subr.mxu0 0.0
    %4078 = vmatpush1.msra.mxu0 0.0
    %4079 = vmatprep.subr.mxu0 0.0
    %4080 = vmatpush1.msra.mxu0 0.0
    %4081 = vmatprep.subr.mxu0 0.0
    %4082 = vmatpush1.msra.mxu0 0.0
    %4083 = vmatprep.subr.mxu0 0.0
    %4084 = vmatpush1.msra.mxu0 0.0
    %4085 = vmatprep.subr.mxu0 0.0
    %4086 = vmatpush1.msra.mxu0 0.0
    %4087 = vmatprep.subr.mxu0 0.0
    %4088 = vmatpush1.msra.mxu0 0.0
    %4089 = vmatprep.subr.mxu0 0.0
    %4090 = vmatpush1.msra.mxu0 0.0
    %4091 = vmatprep.subr.mxu0 0.0
    %4092 = vmatpush1.msra.mxu0 0.0
    %4093 = vmatprep.subr.mxu0 0.0
    %4094 = vmatpush1.msra.mxu0 0.0
    %4095 = vmatprep.subr.mxu0 0.0
    %4096 = vmatpush1.msra.mxu0 0.0
    %4097 = vmatprep.subr.mxu0 0.0
    %4098 = vmatpush1.msra.mxu0 0.0
    %4099 = vmatprep.subr.mxu0 0.0
    %4100 = vmatpush1.msra.mxu0 0.0
    %4101 = vmatprep.subr.mxu0 0.0
    %4102 = vmatpush1.msra.mxu0 0.0
    %4103 = vmatprep.subr.mxu0 0.0
    %4104 = vmatpush1.msra.mxu0 0.0
    %4105 = vmatprep.subr.mxu0 0.0
    %4106 = vmatpush1.msra.mxu0 0.0
    %4107 = vmatprep.subr.mxu0 0.0
    %4108 = vmatpush1.msra.mxu0 0.0
    %4109 = vmatprep.subr.mxu0 0.0
    %4110 = vmatpush1.msra.mxu0 0.0
    %4111 = vmatprep.subr.mxu0 0.0
    %4112 = vmatpush1.msra.mxu0 0.0
    %4113 = vmatprep.subr.mxu0 0.0
    %4114 = vmatpush1.msra.mxu0 0.0
    %4115 = vmatprep.subr.mxu0 0.0
    %4116 = vmatpush1.msra.mxu0 0.0
    %4117 = vmatprep.mubr.f32.mxu0 0.0
    %4118 = vmatmul.mubr.f32.gmra.mrb[0].mxu0 %v4049
    %v4119 = vpop.f32.mrb[0].mxu0
    %v4120 = vadd.f32 0.0, %v4119
    %v4121 = vpop.f32.mrb[0].mxu0
    %4122 = vmatprep.mubr.f32.mxu0 0.0
    %4123 = vmatmul.mubr.f32.gmra.mrb[0].mxu0 %v4051
    %v4124 = vpop.f32.mrb[0].mxu0
    %v4125 = vadd.f32 0.0, %v4124
    %v4126 = vpop.f32.mrb[0].mxu0
    %4127 = vdwg.mxu0
    %v4128 = vadd.f32 %v3378, %v4120
    %v4129 = vadd.f32 %v3379, %v4125
    %v4130 = vmul.f32 %v48, %v4128
    %v4131 = vmul.f32 %v48, %v4129
    %v4132 = vtanh.pop %v4130
    %v4133 = vtanh.pop %v4131
    %v4134 = vmul.f32 %v48, %v4132
    %v4135 = vmul.f32 %v48, %v4133
    %v4136 = vadd.f32 %v4134, %v49
    %v4137 = vadd.f32 %v4135, %v49
    %v4138 = vmul.f32 %v4136, %v4025
    %v4139 = vmul.f32 %v4137, %v4026
    %4142 = vrot.lane.b32.xlu0 %v4136, 64
    %v4143 = vpop.permute.xlu0 %4142
    %4144 = vrot.lane.b32.xlu0 %v4137, 64
    %v4145 = vpop.permute.xlu0 %4144
    %v4148 = vmul.f32 %v4136, %v4143
    %v4149 = vmul.f32 %v4137, %v4145
    %4152 = vrot.lane.b32.xlu0 %v4148, 32
    %v4153 = vpop.permute.xlu0 %4152
    %4154 = vrot.lane.b32.xlu0 %v4149, 32
    %v4155 = vpop.permute.xlu0 %4154
    %v4158 = vadd.f32 %v4138, %v4153
    %v4159 = vadd.f32 %v4139, %v4155
    %v4160 = vtanh.pop %v4158
    %v4161 = vtanh.pop %v4159
    %4164 = vrot.lane.b32.xlu0 %v4160, 64
    %v4165 = vpop.permute.xlu0 %4164
    %4166 = vrot.lane.b32.xlu0 %v4161, 64
    %v4167 = vpop.permute.xlu0 %4166
    %v4170 = vmul.f32 %v4136, %v4165
    %v4171 = vmul.f32 %v4137, %v4167
    %4174 = vrot.lane.b32.xlu0 %v4170, 32
    %v4175 = vpop.permute.xlu0 %4174
    %4176 = vrot.lane.b32.xlu0 %v4171, 32
    %v4177 = vpop.permute.xlu0 %4176
    %4180 = vst.msk [vmem:[#allocation2 + $0x50] sm:$0xff] %vm394, %v4175
    %4181 = vst.msk [vmem:[#allocation2 + $0x58] sm:$0xff] %vm394, %v4177
    %v4182 = vsel %vm394, %v4175, 0
    %v4184 = vsel %vm394, %v4177, 0
    %4186 = vmatprep.subr.mxu0 0.0
    %4187 = vmatpush1.msra.mxu0 %v66
    %4188 = vmatprep.subr.mxu0 0.0
    %4189 = vmatpush1.msra.mxu0 %v67
    %4190 = vmatprep.subr.mxu0 0.0
    %4191 = vmatpush1.msra.mxu0 %v68
    %4192 = vmatprep.subr.mxu0 0.0
    %4193 = vmatpush1.msra.mxu0 %v69
    %4194 = vmatprep.subr.mxu0 0.0
    %4195 = vmatpush1.msra.mxu0 0.0
    %4196 = vmatprep.subr.mxu0 0.0
    %4197 = vmatpush1.msra.mxu0 0.0
    %4198 = vmatprep.subr.mxu0 0.0
    %4199 = vmatpush1.msra.mxu0 0.0
    %4200 = vmatprep.subr.mxu0 0.0
    %4201 = vmatpush1.msra.mxu0 0.0
    %4202 = vmatprep.subr.mxu0 0.0
    %4203 = vmatpush1.msra.mxu0 0.0
    %4204 = vmatprep.subr.mxu0 0.0
    %4205 = vmatpush1.msra.mxu0 0.0
    %4206 = vmatprep.subr.mxu0 0.0
    %4207 = vmatpush1.msra.mxu0 0.0
    %4208 = vmatprep.subr.mxu0 0.0
    %4209 = vmatpush1.msra.mxu0 0.0
    %4210 = vmatprep.subr.mxu0 0.0
    %4211 = vmatpush1.msra.mxu0 0.0
    %4212 = vmatprep.subr.mxu0 0.0
    %4213 = vmatpush1.msra.mxu0 0.0
    %4214 = vmatprep.subr.mxu0 0.0
    %4215 = vmatpush1.msra.mxu0 0.0
    %4216 = vmatprep.subr.mxu0 0.0
    %4217 = vmatpush1.msra.mxu0 0.0
    %4218 = vmatprep.subr.mxu0 0.0
    %4219 = vmatpush1.msra.mxu0 0.0
    %4220 = vmatprep.subr.mxu0 0.0
    %4221 = vmatpush1.msra.mxu0 0.0
    %4222 = vmatprep.subr.mxu0 0.0
    %4223 = vmatpush1.msra.mxu0 0.0
    %4224 = vmatprep.subr.mxu0 0.0
    %4225 = vmatpush1.msra.mxu0 0.0
    %4226 = vmatprep.subr.mxu0 0.0
    %4227 = vmatpush1.msra.mxu0 0.0
    %4228 = vmatprep.subr.mxu0 0.0
    %4229 = vmatpush1.msra.mxu0 0.0
    %4230 = vmatprep.subr.mxu0 0.0
    %4231 = vmatpush1.msra.mxu0 0.0
    %4232 = vmatprep.subr.mxu0 0.0
    %4233 = vmatpush1.msra.mxu0 0.0
    %4234 = vmatprep.subr.mxu0 0.0
    %4235 = vmatpush1.msra.mxu0 0.0
    %4236 = vmatprep.subr.mxu0 0.0
    %4237 = vmatpush1.msra.mxu0 0.0
    %4238 = vmatprep.subr.mxu0 0.0
    %4239 = vmatpush1.msra.mxu0 0.0
    %4240 = vmatprep.subr.mxu0 0.0
    %4241 = vmatpush1.msra.mxu0 0.0
    %4242 = vmatprep.subr.mxu0 0.0
    %4243 = vmatpush1.msra.mxu0 0.0
    %4244 = vmatprep.subr.mxu0 0.0
    %4245 = vmatpush1.msra.mxu0 0.0
    %4246 = vmatprep.subr.mxu0 0.0
    %4247 = vmatpush1.msra.mxu0 0.0
    %4248 = vmatprep.subr.mxu0 0.0
    %4249 = vmatpush1.msra.mxu0 0.0
    %4250 = vmatprep.mubr.f32.mxu0 0.0
    %4251 = vmatmul.mubr.f32.gmra.mrb[0].mxu0 %v4182
    %v4252 = vpop.f32.mrb[0].mxu0
    %v4253 = vadd.f32 0.0, %v4252
    %v4254 = vpop.f32.mrb[0].mxu0
    %4255 = vmatprep.mubr.f32.mxu0 0.0
    %4256 = vmatmul.mubr.f32.gmra.mrb[0].mxu0 %v4184
    %v4257 = vpop.f32.mrb[0].mxu0
    %v4258 = vadd.f32 0.0, %v4257
    %v4259 = vpop.f32.mrb[0].mxu0
    %4260 = vdwg.mxu0
    %v4261 = vadd.f32 %v3380, %v4253
    %v4262 = vadd.f32 %v3381, %v4258
    %v4263 = vmul.f32 %v48, %v4261
    %v4264 = vmul.f32 %v48, %v4262
    %v4265 = vtanh.pop %v4263
    %v4266 = vtanh.pop %v4264
    %v4267 = vmul.f32 %v48, %v4265
    %v4268 = vmul.f32 %v48, %v4266
    %v4269 = vadd.f32 %v4267, %v49
    %v4270 = vadd.f32 %v4268, %v49
    %v4271 = vmul.f32 %v4269, %v4158
    %v4272 = vmul.f32 %v4270, %v4159
    %4275 = vrot.lane.b32.xlu0 %v4269, 64
    %v4276 = vpop.permute.xlu0 %4275
    %4277 = vrot.lane.b32.xlu0 %v4270, 64
    %v4278 = vpop.permute.xlu0 %4277
    %v4281 = vmul.f32 %v4269, %v4276
    %v4282 = vmul.f32 %v4270, %v4278
    %4285 = vrot.lane.b32.xlu0 %v4281, 32
    %v4286 = vpop.permute.xlu0 %4285
    %4287 = vrot.lane.b32.xlu0 %v4282, 32
    %v4288 = vpop.permute.xlu0 %4287
    %v4291 = vadd.f32 %v4271, %v4286
    %v4292 = vadd.f32 %v4272, %v4288
    %v4293 = vtanh.pop %v4291
    %v4294 = vtanh.pop %v4292
    %4297 = vrot.lane.b32.xlu0 %v4293, 64
    %v4298 = vpop.permute.xlu0 %4297
    %4299 = vrot.lane.b32.xlu0 %v4294, 64
    %v4300 = vpop.permute.xlu0 %4299
    %v4303 = vmul.f32 %v4269, %v4298
    %v4304 = vmul.f32 %v4270, %v4300
    %4307 = vrot.lane.b32.xlu0 %v4303, 32
    %v4308 = vpop.permute.xlu0 %4307
    %4309 = vrot.lane.b32.xlu0 %v4304, 32
    %v4310 = vpop.permute.xlu0 %4309
    %4313 = vst.msk [vmem:[#allocation2 + $0x60] sm:$0xff] %vm394, %v4308
    %4314 = vst.msk [vmem:[#allocation2 + $0x68] sm:$0xff] %vm394, %v4310
    %v4315 = vsel %vm394, %v4308, 0
    %v4317 = vsel %vm394, %v4310, 0
    %4319 = vmatprep.subr.mxu0 0.0
    %4320 = vmatpush1.msra.mxu0 %v66
    %4321 = vmatprep.subr.mxu0 0.0
    %4322 = vmatpush1.msra.mxu0 %v67
    %4323 = vmatprep.subr.mxu0 0.0
    %4324 = vmatpush1.msra.mxu0 %v68
    %4325 = vmatprep.subr.mxu0 0.0
    %4326 = vmatpush1.msra.mxu0 %v69
    %4327 = vmatprep.subr.mxu0 0.0
    %4328 = vmatpush1.msra.mxu0 0.0
    %4329 = vmatprep.subr.mxu0 0.0
    %4330 = vmatpush1.msra.mxu0 0.0
    %4331 = vmatprep.subr.mxu0 0.0
    %4332 = vmatpush1.msra.mxu0 0.0
    %4333 = vmatprep.subr.mxu0 0.0
    %4334 = vmatpush1.msra.mxu0 0.0
    %4335 = vmatprep.subr.mxu0 0.0
    %4336 = vmatpush1.msra.mxu0 0.0
    %4337 = vmatprep.subr.mxu0 0.0
    %4338 = vmatpush1.msra.mxu0 0.0
    %4339 = vmatprep.subr.mxu0 0.0
    %4340 = vmatpush1.msra.mxu0 0.0
    %4341 = vmatprep.subr.mxu0 0.0
    %4342 = vmatpush1.msra.mxu0 0.0
    %4343 = vmatprep.subr.mxu0 0.0
    %4344 = vmatpush1.msra.mxu0 0.0
    %4345 = vmatprep.subr.mxu0 0.0
    %4346 = vmatpush1.msra.mxu0 0.0
    %4347 = vmatprep.subr.mxu0 0.0
    %4348 = vmatpush1.msra.mxu0 0.0
    %4349 = vmatprep.subr.mxu0 0.0
    %4350 = vmatpush1.msra.mxu0 0.0
    %4351 = vmatprep.subr.mxu0 0.0
    %4352 = vmatpush1.msra.mxu0 0.0
    %4353 = vmatprep.subr.mxu0 0.0
    %4354 = vmatpush1.msra.mxu0 0.0
    %4355 = vmatprep.subr.mxu0 0.0
    %4356 = vmatpush1.msra.mxu0 0.0
    %4357 = vmatprep.subr.mxu0 0.0
    %4358 = vmatpush1.msra.mxu0 0.0
    %4359 = vmatprep.subr.mxu0 0.0
    %4360 = vmatpush1.msra.mxu0 0.0
    %4361 = vmatprep.subr.mxu0 0.0
    %4362 = vmatpush1.msra.mxu0 0.0
    %4363 = vmatprep.subr.mxu0 0.0
    %4364 = vmatpush1.msra.mxu0 0.0
    %4365 = vmatprep.subr.mxu0 0.0
    %4366 = vmatpush1.msra.mxu0 0.0
    %4367 = vmatprep.subr.mxu0 0.0
    %4368 = vmatpush1.msra.mxu0 0.0
    %4369 = vmatprep.subr.mxu0 0.0
    %4370 = vmatpush1.msra.mxu0 0.0
    %4371 = vmatprep.subr.mxu0 0.0
    %4372 = vmatpush1.msra.mxu0 0.0
    %4373 = vmatprep.subr.mxu0 0.0
    %4374 = vmatpush1.msra.mxu0 0.0
    %4375 = vmatprep.subr.mxu0 0.0
    %4376 = vmatpush1.msra.mxu0 0.0
    %4377 = vmatprep.subr.mxu0 0.0
    %4378 = vmatpush1.msra.mxu0 0.0
    %4379 = vmatprep.subr.mxu0 0.0
    %4380 = vmatpush1.msra.mxu0 0.0
    %4381 = vmatprep.subr.mxu0 0.0
    %4382 = vmatpush1.msra.mxu0 0.0
    %4383 = vmatprep.mubr.f32.mxu0 0.0
    %4384 = vmatmul.mubr.f32.gmra.mrb[0].mxu0 %v4315
    %v4385 = vpop.f32.mrb[0].mxu0
    %v4386 = vadd.f32 0.0, %v4385
    %v4387 = vpop.f32.mrb[0].mxu0
    %4388 = vmatprep.mubr.f32.mxu0 0.0
    %4389 = vmatmul.mubr.f32.gmra.mrb[0].mxu0 %v4317
    %v4390 = vpop.f32.mrb[0].mxu0
    %v4391 = vadd.f32 0.0, %v4390
    %v4392 = vpop.f32.mrb[0].mxu0
    %4393 = vdwg.mxu0
    %v4394 = vadd.f32 %v3382, %v4386
    %v4395 = vadd.f32 %v3383, %v4391
    %v4396 = vmul.f32 %v48, %v4394
    %v4397 = vmul.f32 %v48, %v4395
    %v4398 = vtanh.pop %v4396
    %v4399 = vtanh.pop %v4397
    %v4400 = vmul.f32 %v48, %v4398
    %v4401 = vmul.f32 %v48, %v4399
    %v4402 = vadd.f32 %v4400, %v49
    %v4403 = vadd.f32 %v4401, %v49
    %v4404 = vmul.f32 %v4402, %v4291
    %v4405 = vmul.f32 %v4403, %v4292
    %4408 = vrot.lane.b32.xlu0 %v4402, 64
    %v4409 = vpop.permute.xlu0 %4408
    %4410 = vrot.lane.b32.xlu0 %v4403, 64
    %v4411 = vpop.permute.xlu0 %4410
    %v4414 = vmul.f32 %v4402, %v4409
    %v4415 = vmul.f32 %v4403, %v4411
    %4418 = vrot.lane.b32.xlu0 %v4414, 32
    %v4419 = vpop.permute.xlu0 %4418
    %4420 = vrot.lane.b32.xlu0 %v4415, 32
    %v4421 = vpop.permute.xlu0 %4420
    %v4424 = vadd.f32 %v4404, %v4419
    %v4425 = vadd.f32 %v4405, %v4421
    %v4426 = vtanh.pop %v4424
    %v4427 = vtanh.pop %v4425
    %4430 = vrot.lane.b32.xlu0 %v4426, 64
    %v4431 = vpop.permute.xlu0 %4430
    %4432 = vrot.lane.b32.xlu0 %v4427, 64
    %v4433 = vpop.permute.xlu0 %4432
    %v4436 = vmul.f32 %v4402, %v4431
    %v4437 = vmul.f32 %v4403, %v4433
    %4440 = vrot.lane.b32.xlu0 %v4436, 32
    %v4441 = vpop.permute.xlu0 %4440
    %4442 = vrot.lane.b32.xlu0 %v4437, 32
    %v4443 = vpop.permute.xlu0 %4442
    %4446 = vst.msk [vmem:[#allocation2 + $0x70] sm:$0xff] %vm394, %v4441
    %4447 = vst.msk [vmem:[#allocation2 + $0x78] sm:$0xff] %vm394, %v4443
    %v4448 = vld [vmem:[#allocation2] sm:$0xff]
    %v4449 = vld [vmem:[#allocation2 + $0x8] sm:$0xff]
    %v4450 = vld [vmem:[#allocation2 + $0x10] sm:$0xff]
    %v4451 = vld [vmem:[#allocation2 + $0x18] sm:$0xff]
    %v4452 = vld [vmem:[#allocation2 + $0x20] sm:$0xff]
    %v4453 = vld [vmem:[#allocation2 + $0x28] sm:$0xff]
    %v4454 = vld [vmem:[#allocation2 + $0x30] sm:$0xff]
    %v4455 = vld [vmem:[#allocation2 + $0x38] sm:$0xff]
    %v4456 = vld [vmem:[#allocation2 + $0x40] sm:$0xff]
    %v4457 = vld [vmem:[#allocation2 + $0x48] sm:$0xff]
    %v4458 = vld [vmem:[#allocation2 + $0x50] sm:$0xff]
    %v4459 = vld [vmem:[#allocation2 + $0x58] sm:$0xff]
    %v4460 = vld [vmem:[#allocation2 + $0x60] sm:$0xff]
    %v4461 = vld [vmem:[#allocation2 + $0x68] sm:$0xff]
    %v4462 = vld [vmem:[#allocation2 + $0x70] sm:$0xff]
    %v4463 = vld [vmem:[#allocation2 + $0x78] sm:$0xff]
    %v4465 = vsel %vm1485, %v4448, 0
    %v4468 = vsel %vm1485, %v4449, 0
    %v4471 = vsel %vm1485, %v4450, 0
    %v4474 = vsel %vm1485, %v4451, 0
    %v4477 = vsel %vm1485, %v4452, 0
    %v4480 = vsel %vm1485, %v4453, 0
    %v4483 = vsel %vm1485, %v4454, 0
    %v4486 = vsel %vm1485, %v4455, 0
    %v4489 = vsel %vm1485, %v4456, 0
    %v4492 = vsel %vm1485, %v4457, 0
    %v4495 = vsel %vm1485, %v4458, 0
    %v4498 = vsel %vm1485, %v4459, 0
    %v4501 = vsel %vm1485, %v4460, 0
    %v4504 = vsel %vm1485, %v4461, 0
    %v4507 = vsel %vm1485, %v4462, 0
    %v4510 = vsel %vm1485, %v4463, 0
    %4512 = vmatprep.subr.mxu0 0.0
    %4513 = vmatpush1.xpose.msra.mxu0 %v4465
    %4514 = vmatprep.subr.mxu0 0.0
    %4515 = vmatpush1.xpose.msra.mxu0 %v4468
    %4516 = vmatprep.subr.mxu0 0.0
    %4517 = vmatpush1.xpose.msra.mxu0 %v4471
    %4518 = vmatprep.subr.mxu0 0.0
    %4519 = vmatpush1.xpose.msra.mxu0 %v4474
    %4520 = vmatprep.subr.mxu0 0.0
    %4521 = vmatpush1.xpose.msra.mxu0 %v4477
    %4522 = vmatprep.subr.mxu0 0.0
    %4523 = vmatpush1.xpose.msra.mxu0 %v4480
    %4524 = vmatprep.subr.mxu0 0.0
    %4525 = vmatpush1.xpose.msra.mxu0 %v4483
    %4526 = vmatprep.subr.mxu0 0.0
    %4527 = vmatpush1.xpose.msra.mxu0 %v4486
    %4528 = vmatprep.subr.mxu0 0.0
    %4529 = vmatpush1.xpose.msra.mxu0 %v4489
    %4530 = vmatprep.subr.mxu0 0.0
    %4531 = vmatpush1.xpose.msra.mxu0 %v4492
    %4532 = vmatprep.subr.mxu0 0.0
    %4533 = vmatpush1.xpose.msra.mxu0 %v4495
    %4534 = vmatprep.subr.mxu0 0.0
    %4535 = vmatpush1.xpose.msra.mxu0 %v4498
    %4536 = vmatprep.subr.mxu0 0.0
    %4537 = vmatpush1.xpose.msra.mxu0 %v4501
    %4538 = vmatprep.subr.mxu0 0.0
    %4539 = vmatpush1.xpose.msra.mxu0 %v4504
    %4540 = vmatprep.subr.mxu0 0.0
    %4541 = vmatpush1.xpose.msra.mxu0 %v4507
    %4542 = vmatprep.subr.mxu0 0.0
    %4543 = vmatpush1.xpose.msra.mxu0 %v4510
    %4544 = vmatprep.subr.mxu0 0.0
    %4545 = vmatpush1.xpose.msra.mxu0 0.0
    %4546 = vmatprep.subr.mxu0 0.0
    %4547 = vmatpush1.xpose.msra.mxu0 0.0
    %4548 = vmatprep.subr.mxu0 0.0
    %4549 = vmatpush1.xpose.msra.mxu0 0.0
    %4550 = vmatprep.subr.mxu0 0.0
    %4551 = vmatpush1.xpose.msra.mxu0 0.0
    %4552 = vmatprep.subr.mxu0 0.0
    %4553 = vmatpush1.xpose.msra.mxu0 0.0
    %4554 = vmatprep.subr.mxu0 0.0
    %4555 = vmatpush1.xpose.msra.mxu0 0.0
    %4556 = vmatprep.subr.mxu0 0.0
    %4557 = vmatpush1.xpose.msra.mxu0 0.0
    %4558 = vmatprep.subr.mxu0 0.0
    %4559 = vmatpush1.xpose.msra.mxu0 0.0
    %4560 = vmatprep.subr.mxu0 0.0
    %4561 = vmatpush1.xpose.msra.mxu0 0.0
    %4562 = vmatprep.subr.mxu0 0.0
    %4563 = vmatpush1.xpose.msra.mxu0 0.0
    %4564 = vmatprep.subr.mxu0 0.0
    %4565 = vmatpush1.xpose.msra.mxu0 0.0
    %4566 = vmatprep.subr.mxu0 0.0
    %4567 = vmatpush1.xpose.msra.mxu0 0.0
    %4568 = vmatprep.subr.mxu0 0.0
    %4569 = vmatpush1.xpose.msra.mxu0 0.0
    %4570 = vmatprep.subr.mxu0 0.0
    %4571 = vmatpush1.xpose.msra.mxu0 0.0
    %4572 = vmatprep.subr.mxu0 0.0
    %4573 = vmatpush1.xpose.msra.mxu0 0.0
    %4574 = vmatprep.subr.mxu0 0.0
    %4575 = vmatpush1.xpose.msra.mxu0 0.0
    %4576 = vmatprep.mubr.f32.mxu0 0.0
    %4577 = vmatmul.mubr.f32.gmra.mrb[0].mxu0 %v1487
    %v4578 = vpop.f32.mrb[0].mxu0
    %v4579 = vadd.f32 0.0, %v4578
    %v4580 = vpop.f32.mrb[0].mxu0
    %4581 = vmatprep.mubr.f32.mxu0 0.0
    %4582 = vmatmul.mubr.f32.gmra.mrb[0].mxu0 %v1490
    %v4583 = vpop.f32.mrb[0].mxu0
    %v4584 = vadd.f32 0.0, %v4583
    %v4585 = vpop.f32.mrb[0].mxu0
    %4586 = vmatprep.mubr.f32.mxu0 0.0
    %4587 = vmatmul.mubr.f32.gmra.mrb[0].mxu0 %v1493
    %v4588 = vpop.f32.mrb[0].mxu0
    %v4589 = vadd.f32 0.0, %v4588
    %v4590 = vpop.f32.mrb[0].mxu0
    %4591 = vmatprep.mubr.f32.mxu0 0.0
    %4592 = vmatmul.mubr.f32.gmra.mrb[0].mxu0 %v1496
    %v4593 = vpop.f32.mrb[0].mxu0
    %v4594 = vadd.f32 0.0, %v4593
    %v4595 = vpop.f32.mrb[0].mxu0
    %4596 = vmatprep.mubr.f32.mxu0 0.0
    %4597 = vmatmul.mubr.f32.gmra.mrb[0].mxu0 %v1499
    %v4598 = vpop.f32.mrb[0].mxu0
    %v4599 = vadd.f32 0.0, %v4598
    %v4600 = vpop.f32.mrb[0].mxu0
    %4601 = vdwg.mxu0
    %v4602 = vmul.f32 %v3205, 2.0
    %v4603 = vmul.f32 %v4602, %v3205
    %v4604 = vmul.f32 %v3205, 16.0
    %v4605 = vmul.f32 %v3205, 25.6
    %v4607 = vrot.slane %v4603, 1
    %v4610 = vrot.slane %v4604, 4
    %v4613 = vrot.slane %v4605, 6
    %v4615 = vsel %vm162, %v4607, %v4610
    %v4616 = vsel %vm156, %v4610, %v4613
    %v4617 = vmul.f32 %v4579, %v4615
    %v4618 = vmul.f32 %v4584, %v4616
    %v4619 = vmul.f32 %v4589, %v4613
    %v4620 = vadd.f32 %v4617, %v4618
    %v4621 = vsel %vm154, %v4619, 0.0
    %v4622 = vadd.f32 %v4620, %v4621
    %v4623 = vrot.slane %v4622, 4
    %v4624 = vadd.f32 %v4622, %v4623
    %v4625 = vrot.slane %v4624, 2
    %v4626 = vadd.f32 %v4624, %v4625
    %v4627 = vrot.slane %v4626, 1
    %v4628 = vadd.f32 %v4626, %v4627
    %v4629 = vmul.f32 %v92, 0.33333334
    %v4630 = vmul.f32 %v3148, 0.6666667
    %v4631 = vadd.f32 %v4629, %v4630
    %v4632 = vmul.f32 %v4628, 0.0016666667
    %v4633 = vsub.f32 %v4631, %v4632
    %4634 = vst [vmem:[#allocation3] sm:$0x1] %v4633
    %4635 = vst.msk [vmem:[#allocation5] sm:$0xff] %vm394, %v4441
    %4636 = vst.msk [vmem:[#allocation5 + $0x8] sm:$0xff] %vm394, %v4443
    %4639 = vrot.lane.b32.xlu0 %v4424, 96
    %v4640 = vpop.permute.xlu0 %4639
    %4641 = vrot.lane.b32.xlu0 %v4425, 96
    %v4642 = vpop.permute.xlu0 %4641
    %4645 = vst.msk [vmem:[#allocation7] sm:$0xff] %vm394, %v4640
    %4646 = vst.msk [vmem:[#allocation7 + $0x8] sm:$0xff] %vm394, %v4642
    %v4647 = vmul.f32 %v4589, %v4589
    %v4648 = vmul.f32 %v4594, %v4594
    %v4651 = vrot.slane %v4647, 5
    %v4652 = vrot.slane %v4648, 5
    %v4653 = vsel %vm158, %v4651, %v4652
    %v4655 = vadd.f32 %v4647, %v4653
    %4656 = vst [vmem:[#allocation8 - $0x1] sm:$0x3e] %v4655
    %v4657 = vmul.f32 %v4599, %v4599
    %4658 = vst [vmem:[#allocation10 - $0x3] sm:$0xf8] %v4648
    %4659 = vst [vmem:[#allocation10 + $0x5] sm:$0x3] %v4657
    // Predicated region
    $region26: #{tpu_custom_call.1} parent=1 // pred_check
      _
    $region27: #{tpu_custom_call.1} parent=1 // pred_check_branch
      %4661 = sbr.rel (0) target = $region29
    $region28: #{tpu_custom_call.1} parent=1 // pred_region
      %s4663 = ssub.s32 16, 16
      %4664 = vsyncadd [#allocation4], %s4663
      %s4666 = sshll.u32 [#allocation3], 4
      %s4667 = int_to_ptr.vmem [resolvable:$true] %s4666
      %4669 = dma.vmem_to_hbm [thread:$0]  %s4667, 16, %s6, [#allocation4]
    $region29: #{tpu_custom_call.1} parent=1 // pred_fallthru
      _
    // Predicated region
    $region30: #{tpu_custom_call.1} parent=1 // pred_check
      _
    $region31: #{tpu_custom_call.1} parent=1 // pred_check_branch
      %4671 = sbr.rel (0) target = $region33
    $region32: #{tpu_custom_call.1} parent=1 // pred_region
      %s4673 = ssub.s32 256, 256
      %4674 = vsyncadd [#allocation6], %s4673
      %s4675 = sshll.u32 [#allocation5], 4
      %s4676 = int_to_ptr.vmem [resolvable:$true] %s4675
      %4681 = dma.vmem_to_hbm [thread:$0]  %s4676, 256, %s7, [#allocation6], 128, 128, 8
    $region33: #{tpu_custom_call.1} parent=1 // pred_fallthru
      _
    // Predicated region
    $region34: #{tpu_custom_call.1} parent=1 // pred_check
      _
    $region35: #{tpu_custom_call.1} parent=1 // pred_check_branch
      %4683 = sbr.rel (0) target = $region37
    $region36: #{tpu_custom_call.1} parent=1 // pred_region
      %s4685 = ssub.s32 256, 256
      %4686 = vsyncadd [#allocation6], %s4685
      %s4687 = sshll.u32 [#allocation7], 4
      %s4688 = int_to_ptr.vmem [resolvable:$true] %s4687
      %4693 = dma.vmem_to_hbm [thread:$0]  %s4688, 256, %s8, [#allocation6], 128, 128, 8
    $region37: #{tpu_custom_call.1} parent=1 // pred_fallthru
      _
    // Predicated region
    $region38: #{tpu_custom_call.1} parent=1 // pred_check
      _
    $region39: #{tpu_custom_call.1} parent=1 // pred_check_branch
      %4695 = sbr.rel (0) target = $region41
    $region40: #{tpu_custom_call.1} parent=1 // pred_region
      %s4697 = ssub.s32 128, 128
      %4698 = vsyncadd [#allocation9], %s4697
      %s4700 = sshll.u32 [#allocation8], 4
      %s4701 = int_to_ptr.vmem [resolvable:$true] %s4700
      %4703 = dma.vmem_to_hbm [thread:$0]  %s4701, 128, %s9, [#allocation9]
    $region41: #{tpu_custom_call.1} parent=1 // pred_fallthru
      _
    // Predicated region
    $region42: #{tpu_custom_call.1} parent=1 // pred_check
      _
    $region43: #{tpu_custom_call.1} parent=1 // pred_check_branch
      %4705 = sbr.rel (0) target = $region45
    $region44: #{tpu_custom_call.1} parent=1 // pred_region
      %s4707 = ssub.s32 128, 128
      %4708 = vsyncadd [#allocation9], %s4707
      %s4710 = sshll.u32 [#allocation10], 4
      %s4711 = int_to_ptr.vmem [resolvable:$true] %s4710
      %4713 = dma.vmem_to_hbm [thread:$0]  %s4711, 128, %s10, [#allocation9]
    $region45: #{tpu_custom_call.1} parent=1 // pred_fallthru
      _
    // Predicated region
    $region46: #{tpu_custom_call.1} parent=1 // pred_check
      _
    $region47: #{tpu_custom_call.1} parent=1 // pred_check_branch
      %4715 = sbr.rel (0) target = $region49
    $region48: #{tpu_custom_call.1} parent=1 // pred_region
      %4716 = dma.done [#allocation4], 16
    $region49: #{tpu_custom_call.1} parent=1 // pred_fallthru
      _
    // Predicated region
    $region50: #{tpu_custom_call.1} parent=1 // pred_check
      _
    $region51: #{tpu_custom_call.1} parent=1 // pred_check_branch
      %4718 = sbr.rel (0) target = $region53
    $region52: #{tpu_custom_call.1} parent=1 // pred_region
      %4719 = dma.done [#allocation6], 256
    $region53: #{tpu_custom_call.1} parent=1 // pred_fallthru
      _
    // Predicated region
    $region54: #{tpu_custom_call.1} parent=1 // pred_check
      _
    $region55: #{tpu_custom_call.1} parent=1 // pred_check_branch
      %4721 = sbr.rel (0) target = $region57
    $region56: #{tpu_custom_call.1} parent=1 // pred_region
      %4722 = dma.done [#allocation6], 256
    $region57: #{tpu_custom_call.1} parent=1 // pred_fallthru
      _
    // Predicated region
    $region58: #{tpu_custom_call.1} parent=1 // pred_check
      _
    $region59: #{tpu_custom_call.1} parent=1 // pred_check_branch
      %4724 = sbr.rel (0) target = $region61
    $region60: #{tpu_custom_call.1} parent=1 // pred_region
      %4725 = dma.done [#allocation9], 128
    $region61: #{tpu_custom_call.1} parent=1 // pred_fallthru
      _
    // Predicated region
    $region62: #{tpu_custom_call.1} parent=1 // pred_check
      _
    $region63: #{tpu_custom_call.1} parent=1 // pred_check_branch
      %4727 = sbr.rel (0) target = $region65
    $region64: #{tpu_custom_call.1} parent=1 // pred_region
      %4728 = dma.done [#allocation9], 128
    $region65: #{tpu_custom_call.1} parent=1 // pred_fallthru
      _
    %4729 = vsyncpa [#allocation4], 1
    %4730 = vsyncpa [#allocation6], 1
    %4731 = vsyncpa [#allocation9], 1

</llo_original>
